<compile_context>
chip_gen: v6e
topology: v6e:2x2x1
jax: 0.10.0
libtpu: 0.0.40
codegen_flags: <defaults>
</compile_context>

<pallas_src>
import functools

import jax
import jax.numpy as jnp
from jax.experimental import pallas as pl
from jax.experimental.pallas import tpu as pltpu

LANE = 128                          # lane width / feature padding
SUBLANE = 8
TILE_MAX = 512                      # node tile (TM = TK)
X_RESIDENT_BYTES = 8 * 1024 * 1024  # keep X fully VMEM-resident below this size
VMEM_LIMIT = 40 * 1024 * 1024       # safe under v7x's 64 MiB per-TC VMEM


def _round_up(x, m):
    return ((x + m - 1) // m) * m


# ----------------------------------------------------------------------------
# Kernel 1: one GCN layer, node-tiled.
#   out[i] = ReLU( (sum_k A_hat[i,k] @ X[k]) @ W + b )
# A_hat / X / W are bf16 in HBM; aggregation accumulates in f32 VMEM scratch.
# ----------------------------------------------------------------------------
def gcn_layer_kernel(a_ref, x_ref, w_ref, b_ref, out_ref, acc_ref, *,
                     tk, x_resident):
    k = pl.program_id(1)

    @pl.when(k == 0)
    def _():
        acc_ref[...] = jnp.zeros_like(acc_ref)

    if x_resident:
        # X is the full (n_pad, Fin_pad) array, resident in VMEM; slice rows.
        start = pl.multiple_of(k * tk, tk)
        x = x_ref[pl.ds(start, tk), :]
    else:
        x = x_ref[...]                              # streamed (tk, Fin_pad) tile

    # bf16 operands straight from HBM, f32 MXU accumulation.
    acc_ref[...] += jnp.dot(a_ref[...], x, preferred_element_type=jnp.float32)

    @pl.when(k == pl.num_programs(1) - 1)
    def _():
        agg = acc_ref[...].astype(jnp.bfloat16)     # (TM, Fin_pad)
        y = jnp.dot(agg, w_ref[...], preferred_element_type=jnp.float32)
        y = y + b_ref[...]                          # (1, Fout_pad) broadcasts
        out_ref[...] = jnp.maximum(y, 0.0).astype(out_ref.dtype)   # fused ReLU


def gcn_layer(a_pad, x_pad, w_pad, b_pad, *, tm, tk, x_resident):
    n_pad = a_pad.shape[0]
    fin_pad = x_pad.shape[1]
    fout_pad = w_pad.shape[1]

    if x_resident:
        # Constant block index -> DMA'd once per layer, stays resident.
        x_spec = pl.BlockSpec((n_pad, fin_pad), lambda i, k: (0, 0))
    else:
        x_spec = pl.BlockSpec((tk, fin_pad), lambda i, k: (k, 0))

    kernel = functools.partial(gcn_layer_kernel, tk=tk, x_resident=x_resident)
    return pl.pallas_call(
        kernel,
        out_shape=jax.ShapeDtypeStruct((n_pad, fout_pad), jnp.bfloat16),
        grid_spec=pltpu.PrefetchScalarGridSpec(
            num_scalar_prefetch=0,
            grid=(n_pad // tm, n_pad // tk),
            in_specs=[
                pl.BlockSpec((tm, tk), lambda i, k: (i, k)),             # A_hat bf16
                x_spec,                                                  # X bf16
                pl.BlockSpec((fin_pad, fout_pad), lambda i, k: (0, 0)),  # W bf16
                pl.BlockSpec((1, fout_pad), lambda i, k: (0, 0)),        # bias f32
            ],
            out_specs=pl.BlockSpec((tm, fout_pad), lambda i, k: (i, 0)),
            scratch_shapes=[pltpu.VMEM((tm, fin_pad), jnp.float32)],
        ),
        compiler_params=pltpu.CompilerParams(
            dimension_semantics=("parallel", "arbitrary"),
            vmem_limit_bytes=VMEM_LIMIT,
        ),
    )(a_pad, x_pad, w_pad, b_pad)


# ----------------------------------------------------------------------------
# Kernel 2: fused global_mean_pool + output Linear + log_softmax.
# Reduction over node tiles; pooled (G_pad, H_pad) accumulator in f32 VMEM.
# ----------------------------------------------------------------------------
def head_kernel(pool_ref, x_ref, w_ref, b_ref, out_ref, acc_ref, *, num_classes):
    k = pl.program_id(0)

    @pl.when(k == 0)
    def _():
        acc_ref[...] = jnp.zeros_like(acc_ref)

    # bf16 pool tile x bf16 activation tile, f32 accumulation.
    acc_ref[...] += jnp.dot(pool_ref[...], x_ref[...],
                            preferred_element_type=jnp.float32)

    @pl.when(k == pl.num_programs(0) - 1)
    def _():
        pooled = acc_ref[...].astype(jnp.bfloat16)                  # (G_pad, H_pad)
        logits = jnp.dot(pooled, w_ref[...],
                         preferred_element_type=jnp.float32) + b_ref[...]
        col = jax.lax.broadcasted_iota(jnp.int32, logits.shape, 1)
        valid = col < num_classes
        neg = jnp.finfo(jnp.float32).min
        masked = jnp.where(valid, logits, neg)
        m = jnp.max(masked, axis=1, keepdims=True)
        shifted = masked - m
        lse = jnp.log(jnp.sum(jnp.where(valid, jnp.exp(shifted), 0.0),
                              axis=1, keepdims=True))
        # Padded class columns written as 0.0 (finite) instead of -inf.
        out_ref[...] = jnp.where(valid, shifted - lse, 0.0)


def gcn_head(pool_pad, x_pad, w_pad, b_pad, *, num_classes, tk):
    g_pad, n_pad = pool_pad.shape
    h_pad = x_pad.shape[1]
    c_pad = w_pad.shape[1]
    kernel = functools.partial(head_kernel, num_classes=num_classes)
    return pl.pallas_call(
        kernel,
        out_shape=jax.ShapeDtypeStruct((g_pad, c_pad), jnp.float32),
        grid_spec=pltpu.PrefetchScalarGridSpec(
            num_scalar_prefetch=0,
            grid=(n_pad // tk,),
            in_specs=[
                pl.BlockSpec((g_pad, tk), lambda k: (0, k)),        # pool bf16
                pl.BlockSpec((tk, h_pad), lambda k: (k, 0)),        # act bf16
                pl.BlockSpec((h_pad, c_pad), lambda k: (0, 0)),     # W_out bf16
                pl.BlockSpec((1, c_pad), lambda k: (0, 0)),         # b_out f32
            ],
            out_specs=pl.BlockSpec((g_pad, c_pad), lambda k: (0, 0)),
            scratch_shapes=[pltpu.VMEM((g_pad, h_pad), jnp.float32)],
        ),
        compiler_params=pltpu.CompilerParams(
            dimension_semantics=("arbitrary",),
            vmem_limit_bytes=VMEM_LIMIT,
        ),
    )(pool_pad, x_pad, w_pad, b_pad)


# ----------------------------------------------------------------------------
# Plain-JAX glue: padded normalized adjacency, pooling matrix, params, forward.
# ----------------------------------------------------------------------------
def build_gcn_adj_padded(edge_index, num_nodes, n_pad, edge_weights=None):
    """PyG GCNConv sym norm with self-loops, built directly at padded shape.

    Invariant: padded rows/cols of A_hat stay exactly zero (no self loops on
    padded nodes), so padded node activations never leak into real nodes.
    """
    if edge_weights is None:
        edge_weights = jnp.ones((edge_index.shape[1],), jnp.float32)
    A = jnp.zeros((n_pad, n_pad), jnp.float32)
    # message from src -> aggregated at dst  =>  A[dst, src]
    A = A.at[edge_index[1], edge_index[0]].add(edge_weights)
    diag = (jnp.arange(n_pad) < num_nodes).astype(jnp.float32)  # self loops: real nodes only
    A = A + jnp.diag(diag)
    deg = A.sum(axis=1)
    d_inv_sqrt = jnp.where(deg > 0, 1.0 / jnp.sqrt(deg), 0.0)
    a_hat = d_inv_sqrt[:, None] * A * d_inv_sqrt[None, :]
    return a_hat.astype(jnp.bfloat16)


def build_mean_pool_matrix_padded(batch, num_graphs, n_pad):
    """(G_pad, N_pad) mean-pool matrix; padded node columns are zero."""
    g_pad = _round_up(max(num_graphs, 1), SUBLANE)
    batch_pad = jnp.full((n_pad,), -1, jnp.int32).at[: batch.shape[0]].set(batch)
    onehot = (batch_pad[None, :] == jnp.arange(g_pad)[:, None]).astype(jnp.float32)
    counts = jnp.maximum(onehot.sum(axis=1, keepdims=True), 1.0)
    return (onehot / counts).astype(jnp.bfloat16)


def init_params(key, num_features, hidden_layers, num_classes):
    params = []
    dims = [num_features] + list(hidden_layers)
    for i in range(len(hidden_layers)):
        key, kw = jax.random.split(key)
        fin, fout = dims[i], dims[i + 1]
        w = jax.random.normal(kw, (fin, fout), jnp.float32) * jnp.sqrt(2.0 / (fin + fout))
        b = jnp.zeros((fout,), jnp.float32)
        params.append((w, b))
    key, kw = jax.random.split(key)
    h = hidden_layers[-1]
    w_out = jax.random.normal(kw, (h, num_classes), jnp.float32) / jnp.sqrt(jnp.float32(h))
    b_out = jnp.zeros((num_classes,), jnp.float32)
    return params, (w_out, b_out)


def gcn_g_forward(x, edge_index, batch, params, out_params,
                  num_graphs, edge_weights=None, tile=TILE_MAX):
    N, F = x.shape
    # Node tile: up to TILE_MAX, not larger than the (128-rounded) graph size.
    node_tile = max(LANE, min(tile, _round_up(N, LANE)))
    n_pad = _round_up(N, node_tile)

    a_pad = build_gcn_adj_padded(edge_index, N, n_pad, edge_weights)   # bf16

    fin_pad0 = _round_up(F, LANE)
    h = jnp.zeros((n_pad, fin_pad0), jnp.bfloat16).at[:N, :F].set(
        x.astype(jnp.bfloat16))

    for (w, b) in params:
        fin, fout = w.shape
        fin_p = _round_up(fin, LANE)
        fout_p = _round_up(fout, LANE)
        w_pad = jnp.zeros((fin_p, fout_p), jnp.bfloat16).at[:fin, :fout].set(
            w.astype(jnp.bfloat16))
        b_pad = jnp.zeros((1, fout_p), jnp.float32).at[0, :fout].set(b)
        x_resident = (n_pad * fin_p * 2) <= X_RESIDENT_BYTES
        h = gcn_layer(a_pad, h, w_pad, b_pad,
                      tm=node_tile, tk=node_tile, x_resident=x_resident)

    w_out, b_out = out_params
    hdim, num_classes = w_out.shape
    h_p = _round_up(hdim, LANE)
    c_p = _round_up(num_classes, LANE)

    pool_pad = build_mean_pool_matrix_padded(batch, num_graphs, n_pad)   # bf16
    w_out_pad = jnp.zeros((h_p, c_p), jnp.bfloat16).at[:hdim, :num_classes].set(
        w_out.astype(jnp.bfloat16))
    b_out_pad = jnp.zeros((1, c_p), jnp.float32).at[0, :num_classes].set(b_out)

    out = gcn_head(pool_pad, h, w_out_pad, b_out_pad,
                   num_classes=num_classes, tk=node_tile)
    return out[:num_graphs, :num_classes]


# ----------------------------------------------------------------------------
# Pure-JAX f32 reference (for tolerance checking the bf16 kernel path).
# ----------------------------------------------------------------------------
def gcn_g_reference(x, edge_index, batch, params, out_params, num_graphs):
    N = x.shape[0]
    ew = jnp.ones((edge_index.shape[1],), jnp.float32)
    A = jnp.zeros((N, N), jnp.float32).at[edge_index[1], edge_index[0]].add(ew)
    A = A + jnp.eye(N, dtype=jnp.float32)
    deg = A.sum(axis=1)
    dis = jnp.where(deg > 0, 1.0 / jnp.sqrt(deg), 0.0)
    a_hat = dis[:, None] * A * dis[None, :]
    h = x
    for (w, b) in params:
        h = jnp.maximum(a_hat @ h @ w + b, 0.0)
    onehot = (batch[None, :] == jnp.arange(num_graphs)[:, None]).astype(jnp.float32)
    pool = onehot / jnp.maximum(onehot.sum(axis=1, keepdims=True), 1.0)
    w_out, b_out = out_params
    logits = pool @ h @ w_out + b_out
    return jax.nn.log_softmax(logits, axis=1)


if __name__ == "__main__":
    # Small config consistent with the module: 2 ring graphs of 320 nodes each
    # (N=640 -> n_pad=1024 with 512-tiles, i.e. a 2x2 grid exercising both the
    # parallel row axis and the k reduction).
    num_features = 8
    hidden_layers = [32, 32]
    num_classes = 4
    nodes_per_graph = 320
    num_graphs = 2
    N = nodes_per_graph * num_graphs

    key = jax.random.PRNGKey(0)
    key, kx = jax.random.split(key)
    x = jax.random.normal(kx, (N, num_features), jnp.float32)

    # Ring graph within each component, both directions (GCNConv adds self loops).
    src, dst = [], []
    for g in range(num_graphs):
        off = g * nodes_per_graph
        for i in range(nodes_per_graph):
            u, v = off + i, off + (i + 1) % nodes_per_graph
            src += [u, v]
            dst += [v, u]
    edge_index = jnp.array([src, dst], dtype=jnp.int32)
    batch = jnp.repeat(jnp.arange(num_graphs, dtype=jnp.int32), nodes_per_graph)

    params, out_params = init_params(key, num_features, hidden_layers, num_classes)

    fwd = jax.jit(functools.partial(gcn_g_forward, num_graphs=num_graphs))
    out = jax.block_until_ready(fwd(x, edge_index, batch, params, out_params))

    assert out.shape == (num_graphs, num_classes)
    assert bool(jnp.all(jnp.isfinite(out)))
    # log_softmax rows sum to 1 in prob space
    assert bool(jnp.all(jnp.abs(jnp.exp(out).sum(axis=1) - 1.0) < 1e-3))
    # tolerance check vs pure-JAX f32 reference (bf16 storage => loose tol)
    ref = gcn_g_reference(x, edge_index, batch, params, out_params, num_graphs)
    assert bool(jnp.all(jnp.abs(out - ref) < 0.15))
    print("KERNEL_OK")
</pallas_src>

<mosaic_0001>
module attributes {stable_mosaic.version = 11 : i64} {
  func.func private @main(%arg0: i32) attributes {dimension_semantics = [#tpu.dimension_semantics<core_parallel>], iteration_bounds = array<i64: 2>, tpu.core_type = #tpu.core_type<sc_scalar_subcore>, window_params = []} {
    return
  }
}

module attributes {stable_mosaic.version = 11 : i64} {
  func.func private @main(%arg0: i32) attributes {dimension_semantics = [#tpu.dimension_semantics<core_parallel>], iteration_bounds = array<i64: 2>, tpu.core_type = #tpu.core_type<sc_scalar_subcore>, window_params = []} {
    return
  }
}

module attributes {stable_mosaic.version = 11 : i64} {
  func.func @gcn_layer_kernel(%arg0: i32, %arg1: i32, %arg2: memref<512x512xbf16, #tpu.memory_space<vmem>>, %arg3: memref<1024x128xbf16, #tpu.memory_space<vmem>>, %arg4: memref<128x128xbf16, #tpu.memory_space<vmem>>, %arg5: memref<1x128xf32, #tpu.memory_space<vmem>>, %arg6: memref<512x128xbf16, #tpu.memory_space<vmem>>, %arg7: memref<512x128xf32, #tpu.memory_space<vmem>>) attributes {dimension_semantics = [#tpu.dimension_semantics<parallel>, #tpu.dimension_semantics<arbitrary>], iteration_bounds = array<i64: 2, 2>, scalar_prefetch = 0 : i64, scratch_operands = 1 : i64, tpu.core_type = #tpu.core_type<tc>, window_params = [{transform_indices = @transform_0, window_bounds = array<i64: 512, 512>}, {pipeline_mode = #tpu.pipeline_mode<synchronous>, transform_indices = @transform_1, window_bounds = array<i64: 1024, 128>}, {pipeline_mode = #tpu.pipeline_mode<synchronous>, transform_indices = @transform_2, window_bounds = array<i64: 128, 128>}, {pipeline_mode = #tpu.pipeline_mode<synchronous>, transform_indices = @transform_3, window_bounds = array<i64: 1, 128>}, {transform_indices = @transform_4, window_bounds = array<i64: 512, 128>}]} {
    %c0_i32 = arith.constant 0 : i32
    %0 = arith.cmpi eq, %arg1, %c0_i32 : i32
    %1 = arith.extui %0 : i1 to i32
    %c0_i32_0 = arith.constant 0 : i32
    %2 = arith.cmpi ne, %1, %c0_i32_0 : i32
    scf.if %2 {
      %cst_8 = arith.constant 0.000000e+00 : f32
      %15 = vector.broadcast %cst_8 : f32 to vector<512x128xf32>
      %c0_9 = arith.constant 0 : index
      %c0_10 = arith.constant 0 : index
      %16 = vector.load %arg7[%c0_9, %c0_10] : memref<512x128xf32, #tpu.memory_space<vmem>>, vector<512x128xf32>
      tpu.vector_store %arg7[%c0_9, %c0_10], %15 {strides = array<i32>} : memref<512x128xf32, #tpu.memory_space<vmem>>, vector<512x128xf32>,
    } else {
    }
    %c512_i32 = arith.constant 512 : i32
    %3 = arith.muli %arg1, %c512_i32 : i32
    %4 = tpu.assume_multiple %3, 512 : i32
    %5 = arith.index_cast %4 : i32 to index
    %c0 = arith.constant 0 : index
    %6 = vector.load %arg3[%5, %c0] : memref<1024x128xbf16, #tpu.memory_space<vmem>>, vector<512x128xbf16>
    %c0_1 = arith.constant 0 : index
    %c0_2 = arith.constant 0 : index
    %7 = vector.load %arg7[%c0_1, %c0_2] : memref<512x128xf32, #tpu.memory_space<vmem>>, vector<512x128xf32>
    %c0_3 = arith.constant 0 : index
    %c0_4 = arith.constant 0 : index
    %8 = vector.load %arg2[%c0_3, %c0_4] : memref<512x512xbf16, #tpu.memory_space<vmem>>, vector<512x512xbf16>
    %cst = arith.constant dense<0.000000e+00> : vector<512x128xf32>
    %9 = tpu.matmul %8, %6, %cst {dimension_numbers = #tpu.dot_dimension_numbers<[1], [0], [0], [1], [0, 0, 1, 1], [], []>} : vector<512x512xbf16>, vector<512x128xbf16>, vector<512x128xf32> -> vector<512x128xf32>
    %10 = arith.addf %7, %9 : vector<512x128xf32>
    %c0_5 = arith.constant 0 : index
    %c0_6 = arith.constant 0 : index
    %11 = vector.load %arg7[%c0_5, %c0_6] : memref<512x128xf32, #tpu.memory_space<vmem>>, vector<512x128xf32>
    tpu.vector_store %arg7[%c0_5, %c0_6], %10 {strides = array<i32>} : memref<512x128xf32, #tpu.memory_space<vmem>>, vector<512x128xf32>,
    %c1_i32 = arith.constant 1 : i32
    %12 = arith.cmpi eq, %arg1, %c1_i32 : i32
    %13 = arith.extui %12 : i1 to i32
    %c0_i32_7 = arith.constant 0 : i32
    %14 = arith.cmpi ne, %13, %c0_i32_7 : i32
    scf.if %14 {
      %c0_8 = arith.constant 0 : index
      %c0_9 = arith.constant 0 : index
      %15 = vector.load %arg7[%c0_8, %c0_9] : memref<512x128xf32, #tpu.memory_space<vmem>>, vector<512x128xf32>
      %16 = arith.truncf %15 : vector<512x128xf32> to vector<512x128xbf16>
      %c0_10 = arith.constant 0 : index
      %c0_11 = arith.constant 0 : index
      %17 = vector.load %arg4[%c0_10, %c0_11] : memref<128x128xbf16, #tpu.memory_space<vmem>>, vector<128x128xbf16>
      %cst_12 = arith.constant dense<0.000000e+00> : vector<512x128xf32>
      %18 = tpu.matmul %16, %17, %cst_12 {dimension_numbers = #tpu.dot_dimension_numbers<[1], [0], [0], [1], [0, 0, 1, 1], [], []>} : vector<512x128xbf16>, vector<128x128xbf16>, vector<512x128xf32> -> vector<512x128xf32>
      %c0_13 = arith.constant 0 : index
      %c0_14 = arith.constant 0 : index
      %19 = vector.load %arg5[%c0_13, %c0_14] : memref<1x128xf32, #tpu.memory_space<vmem>>, vector<1x128xf32>
      %20 = vector.broadcast %19 : vector<1x128xf32> to vector<512x128xf32>
      %21 = arith.addf %18, %20 : vector<512x128xf32>
      %cst_15 = arith.constant 0.000000e+00 : f32
      %22 = vector.broadcast %cst_15 : f32 to vector<512x128xf32>
      %23 = arith.maximumf %21, %22 : vector<512x128xf32>
      %24 = arith.truncf %23 : vector<512x128xf32> to vector<512x128xbf16>
      %c0_16 = arith.constant 0 : index
      %c0_17 = arith.constant 0 : index
      %25 = vector.load %arg6[%c0_16, %c0_17] : memref<512x128xbf16, #tpu.memory_space<vmem>>, vector<512x128xbf16>
      tpu.vector_store %arg6[%c0_16, %c0_17], %24 {strides = array<i32>} : memref<512x128xbf16, #tpu.memory_space<vmem>>, vector<512x128xbf16>,
    } else {
    }
    return
  }
  func.func @transform_0(%arg0: i32, %arg1: i32) -> (i32, i32) {
    %c0_i32 = arith.constant 0 : i32
    return %arg0, %arg1 : i32, i32
  }
  func.func @transform_1(%arg0: i32, %arg1: i32) -> (i32, i32) {
    %c0_i32 = arith.constant 0 : i32
    %c0_i32_0 = arith.constant 0 : i32
    %c0_i32_1 = arith.constant 0 : i32
    return %c0_i32, %c0_i32_0 : i32, i32
  }
  func.func @transform_2(%arg0: i32, %arg1: i32) -> (i32, i32) {
    %c0_i32 = arith.constant 0 : i32
    %c0_i32_0 = arith.constant 0 : i32
    %c0_i32_1 = arith.constant 0 : i32
    return %c0_i32, %c0_i32_0 : i32, i32
  }
  func.func @transform_3(%arg0: i32, %arg1: i32) -> (i32, i32) {
    %c0_i32 = arith.constant 0 : i32
    %c0_i32_0 = arith.constant 0 : i32
    %c0_i32_1 = arith.constant 0 : i32
    return %c0_i32, %c0_i32_0 : i32, i32
  }
  func.func @transform_4(%arg0: i32, %arg1: i32) -> (i32, i32) {
    %c0_i32 = arith.constant 0 : i32
    %c0_i32_0 = arith.constant 0 : i32
    return %arg0, %c0_i32 : i32, i32
  }
}

module attributes {stable_mosaic.version = 11 : i64} {
  func.func @head_kernel(%arg0: i32, %arg1: memref<8x512xbf16, #tpu.memory_space<vmem>>, %arg2: memref<512x128xbf16, #tpu.memory_space<vmem>>, %arg3: memref<128x128xbf16, #tpu.memory_space<vmem>>, %arg4: memref<1x128xf32, #tpu.memory_space<vmem>>, %arg5: memref<8x128xf32, #tpu.memory_space<vmem>>, %arg6: memref<8x128xf32, #tpu.memory_space<vmem>>) attributes {dimension_semantics = [#tpu.dimension_semantics<arbitrary>], iteration_bounds = array<i64: 2>, scalar_prefetch = 0 : i64, scratch_operands = 1 : i64, tpu.core_type = #tpu.core_type<tc>, window_params = [{transform_indices = @transform_0, window_bounds = array<i64: 8, 512>}, {transform_indices = @transform_1, window_bounds = array<i64: 512, 128>}, {pipeline_mode = #tpu.pipeline_mode<synchronous>, transform_indices = @transform_2, window_bounds = array<i64: 128, 128>}, {pipeline_mode = #tpu.pipeline_mode<synchronous>, transform_indices = @transform_3, window_bounds = array<i64: 1, 128>}, {pipeline_mode = #tpu.pipeline_mode<synchronous>, transform_indices = @transform_4, window_bounds = array<i64: 8, 128>}]} {
    %c0_i32 = arith.constant 0 : i32
    %0 = arith.cmpi eq, %arg0, %c0_i32 : i32
    %1 = arith.extui %0 : i1 to i32
    %c0_i32_0 = arith.constant 0 : i32
    %2 = arith.cmpi ne, %1, %c0_i32_0 : i32
    scf.if %2 {
      %cst_9 = arith.constant 0.000000e+00 : f32
      %12 = vector.broadcast %cst_9 : f32 to vector<8x128xf32>
      %c0_10 = arith.constant 0 : index
      %c0_11 = arith.constant 0 : index
      %13 = vector.load %arg6[%c0_10, %c0_11] : memref<8x128xf32, #tpu.memory_space<vmem>>, vector<8x128xf32>
      tpu.vector_store %arg6[%c0_10, %c0_11], %12 {strides = array<i32>} : memref<8x128xf32, #tpu.memory_space<vmem>>, vector<8x128xf32>,
    } else {
    }
    %c0 = arith.constant 0 : index
    %c0_1 = arith.constant 0 : index
    %3 = vector.load %arg6[%c0, %c0_1] : memref<8x128xf32, #tpu.memory_space<vmem>>, vector<8x128xf32>
    %c0_2 = arith.constant 0 : index
    %c0_3 = arith.constant 0 : index
    %4 = vector.load %arg1[%c0_2, %c0_3] : memref<8x512xbf16, #tpu.memory_space<vmem>>, vector<8x512xbf16>
    %c0_4 = arith.constant 0 : index
    %c0_5 = arith.constant 0 : index
    %5 = vector.load %arg2[%c0_4, %c0_5] : memref<512x128xbf16, #tpu.memory_space<vmem>>, vector<512x128xbf16>
    %cst = arith.constant dense<0.000000e+00> : vector<8x128xf32>
    %6 = tpu.matmul %4, %5, %cst {dimension_numbers = #tpu.dot_dimension_numbers<[1], [0], [0], [1], [0, 0, 1, 1], [], []>} : vector<8x512xbf16>, vector<512x128xbf16>, vector<8x128xf32> -> vector<8x128xf32>
    %7 = arith.addf %3, %6 : vector<8x128xf32>
    %c0_6 = arith.constant 0 : index
    %c0_7 = arith.constant 0 : index
    %8 = vector.load %arg6[%c0_6, %c0_7] : memref<8x128xf32, #tpu.memory_space<vmem>>, vector<8x128xf32>
    tpu.vector_store %arg6[%c0_6, %c0_7], %7 {strides = array<i32>} : memref<8x128xf32, #tpu.memory_space<vmem>>, vector<8x128xf32>,
    %c1_i32 = arith.constant 1 : i32
    %9 = arith.cmpi eq, %arg0, %c1_i32 : i32
    %10 = arith.extui %9 : i1 to i32
    %c0_i32_8 = arith.constant 0 : i32
    %11 = arith.cmpi ne, %10, %c0_i32_8 : i32
    scf.if %11 {
      %c0_9 = arith.constant 0 : index
      %c0_10 = arith.constant 0 : index
      %12 = vector.load %arg6[%c0_9, %c0_10] : memref<8x128xf32, #tpu.memory_space<vmem>>, vector<8x128xf32>
      %13 = arith.truncf %12 : vector<8x128xf32> to vector<8x128xbf16>
      %c0_11 = arith.constant 0 : index
      %c0_12 = arith.constant 0 : index
      %14 = vector.load %arg3[%c0_11, %c0_12] : memref<128x128xbf16, #tpu.memory_space<vmem>>, vector<128x128xbf16>
      %cst_13 = arith.constant dense<0.000000e+00> : vector<8x128xf32>
      %15 = tpu.matmul %13, %14, %cst_13 {dimension_numbers = #tpu.dot_dimension_numbers<[1], [0], [0], [1], [0, 0, 1, 1], [], []>} : vector<8x128xbf16>, vector<128x128xbf16>, vector<8x128xf32> -> vector<8x128xf32>
      %c0_14 = arith.constant 0 : index
      %c0_15 = arith.constant 0 : index
      %16 = vector.load %arg4[%c0_14, %c0_15] : memref<1x128xf32, #tpu.memory_space<vmem>>, vector<1x128xf32>
      %17 = vector.broadcast %16 : vector<1x128xf32> to vector<8x128xf32>
      %18 = arith.addf %15, %17 : vector<8x128xf32>
      %19 = tpu.iota {dimensions = array<i32: 1>} : vector<8x128xi32>
      %c4_i32 = arith.constant 4 : i32
      %20 = vector.broadcast %c4_i32 : i32 to vector<8x128xi32>
      %21 = arith.cmpi slt, %19, %20 : vector<8x128xi32>
      %cst_16 = arith.constant -3.40282347E+38 : f32
      %22 = vector.broadcast %cst_16 : f32 to vector<8x128xf32>
      %23 = arith.select %21, %18, %22 : vector<8x128xi1>, vector<8x128xf32>
      %cst_17 = arith.constant dense<0xFF800000> : vector<8xf32>
      %24 = vector.multi_reduction <maximumf>, %23, %cst_17 [1] : vector<8x128xf32> to vector<8xf32>
      %25 = vector.shape_cast %24 : vector<8xf32> to vector<8x1xf32>
      %26 = vector.broadcast %25 : vector<8x1xf32> to vector<8x128xf32>
      %27 = arith.subf %23, %26 : vector<8x128xf32>
      %28 = math.exp %27 : vector<8x128xf32>
      %cst_18 = arith.constant 0.000000e+00 : f32
      %29 = vector.broadcast %cst_18 : f32 to vector<8x128xf32>
      %30 = arith.select %21, %28, %29 : vector<8x128xi1>, vector<8x128xf32>
      %cst_19 = arith.constant dense<0.000000e+00> : vector<8xf32>
      %31 = vector.multi_reduction <add>, %30, %cst_19 [1] : vector<8x128xf32> to vector<8xf32>
      %32 = vector.shape_cast %31 : vector<8xf32> to vector<8x1xf32>
      %33 = math.log %32 : vector<8x1xf32>
      %34 = vector.broadcast %33 : vector<8x1xf32> to vector<8x128xf32>
      %35 = arith.subf %27, %34 : vector<8x128xf32>
      %cst_20 = arith.constant 0.000000e+00 : f32
      %36 = vector.broadcast %cst_20 : f32 to vector<8x128xf32>
      %37 = arith.select %21, %35, %36 : vector<8x128xi1>, vector<8x128xf32>
      %c0_21 = arith.constant 0 : index
      %c0_22 = arith.constant 0 : index
      %38 = vector.load %arg5[%c0_21, %c0_22] : memref<8x128xf32, #tpu.memory_space<vmem>>, vector<8x128xf32>
      tpu.vector_store %arg5[%c0_21, %c0_22], %37 {strides = array<i32>} : memref<8x128xf32, #tpu.memory_space<vmem>>, vector<8x128xf32>,
    } else {
    }
    return
  }
  func.func @transform_0(%arg0: i32) -> (i32, i32) {
    %c0_i32 = arith.constant 0 : i32
    %c0_i32_0 = arith.constant 0 : i32
    return %c0_i32, %arg0 : i32, i32
  }
  func.func @transform_1(%arg0: i32) -> (i32, i32) {
    %c0_i32 = arith.constant 0 : i32
    %c0_i32_0 = arith.constant 0 : i32
    return %arg0, %c0_i32 : i32, i32
  }
  func.func @transform_2(%arg0: i32) -> (i32, i32) {
    %c0_i32 = arith.constant 0 : i32
    %c0_i32_0 = arith.constant 0 : i32
    %c0_i32_1 = arith.constant 0 : i32
    return %c0_i32, %c0_i32_0 : i32, i32
  }
  func.func @transform_3(%arg0: i32) -> (i32, i32) {
    %c0_i32 = arith.constant 0 : i32
    %c0_i32_0 = arith.constant 0 : i32
    %c0_i32_1 = arith.constant 0 : i32
    return %c0_i32, %c0_i32_0 : i32, i32
  }
  func.func @transform_4(%arg0: i32) -> (i32, i32) {
    %c0_i32 = arith.constant 0 : i32
    %c0_i32_0 = arith.constant 0 : i32
    %c0_i32_1 = arith.constant 0 : i32
    return %c0_i32, %c0_i32_0 : i32, i32
  }
}

</mosaic_0001>

<llo_original>
// kernel: gcn_g_forward.5
$region0: #{gcn_g_forward.5}
  #allocation0 [shape = 'u32[]', space=smem, size = 0x4, offset = 0x4, fixed_abs, tag = 'smem constant byte address 0x4 - core index']
  #allocation1 [shape = 'u32[144,128]{1,0:T(1,128)}', space=vmem, size = 0x12000, scoped, tag = 'internal scratch']
  #allocation2 [shape = 'f32[8,128]{1,0:T(8,128)}', space=vmem, size = 0x1000, scoped, tag = 'scratch operand']
  %s0 = inlined_call_operand.vmem [shape: bf16[8,1024], index: 0, kind: input, shape index: {}]
  %s1 = inlined_call_operand.vmem [shape: bf16[1024,128], index: 1, kind: input, shape index: {}]
  %s2 = inlined_call_operand.vmem [shape: bf16[128,128], index: 2, kind: input, shape index: {}]
  %s3 = inlined_call_operand.vmem [shape: f32[1,128], index: 3, kind: input, shape index: {}]
  %s4 = inlined_call_operand.vmem [shape: f32[8,128], index: 4, kind: output, shape index: {}]
  %s5 = sld [smem:[#allocation0]]
  $region57: #{gcn_g_forward.5} parent=0
    _
  %s7 = ssub.s32 1, %s5
  %s8 = scalar_select 0, %s7, %s5
  loop: start=0, step=1, limit=4
  $region2: #{gcn_g_forward.5} parent=0 // loop_pre_header
    _
  $region3: #{gcn_g_forward.5} parent=0 // loop_header
    %s10 = sphi 0, %s14
    %p11 = scmp.ge.s32.totalorder %s10, 4
    %s20 = sphi 0, %s22
    %s23 = sphi 0, %s20
    %s24 = sphi 0, %s23
    %s40 = sphi 0, %s24
    %s46 = sphi 0, %s48
    %s49 = sphi 0, %s46
    %s50 = sphi 0, %s49
    %s66 = sphi 0, %s50
    %s70 = sphi 0, %s70
    %s72 = sphi 0, %s70
    %s73 = sphi 0, %s72
    %s87 = sphi 0, %s73
    %s91 = sphi 0, %s91
    %s93 = sphi 0, %s91
    %s94 = sphi 0, %s93
    %s108 = sphi 0, %s94
    %s112 = sphi 0, %s112
    %s114 = sphi 0, %s112
    %s115 = sphi 0, %s114
    %s129 = sphi 0, %s115
  $region4: #{gcn_g_forward.5} parent=0 // loop_header_branch
    %13 = sbr.rel (%p11) target = $region8
  $region5: #{gcn_g_forward.5} parent=0 // loop_body
    %s15 = ssub.s32 %s10, 1
    %s16 = ssub.s32 %s10, 2
    %s17 = sadd.s32 %s10, 1
    %s18 = ssub.s32 %s10, %s17
    %p19 = scmp.eq.s32.totalorder %s18, 0
    %s21 = sadd.s32 %s20, 1
    %s22 = scalar_select %p19, %s20, %s21
    %p25 = pneg %p19
    %p26 = scmp.eq.s32.totalorder %s10, 1
    %p27 = por %p25, %p26
    %p28 = scmp.ne.s32.totalorder %s20, %s23
    %p29 = scmp.eq.s32.totalorder %s10, 0
    %p30 = por %p28, %p29
    %p31 = scmp.ne.s32.totalorder %s20, %s23
    %p32 = scmp.eq.s32.totalorder %s15, 1
    %p33 = por %p31, %p32
    %p34 = scmp.ne.s32.totalorder %s23, %s24
    %p35 = scmp.eq.s32.totalorder %s15, 0
    %p36 = por %p34, %p35
    %p37 = scmp.ne.s32.totalorder %s23, %s24
    %p38 = scmp.eq.s32.totalorder %s16, 1
    %p39 = por %p37, %p38
    %p41 = scmp.ne.s32.totalorder %s24, %s40
    %p42 = scmp.eq.s32.totalorder %s16, 0
    %p43 = por %p41, %p42
    %s44 = ssub.s32 %s10, %s17
    %p45 = scmp.eq.s32.totalorder %s44, 0
    %s47 = sadd.s32 %s46, 1
    %s48 = scalar_select %p45, %s46, %s47
    %p51 = pneg %p45
    %p52 = scmp.eq.s32.totalorder %s10, 1
    %p53 = por %p51, %p52
    %p54 = scmp.ne.s32.totalorder %s46, %s49
    %p55 = scmp.eq.s32.totalorder %s10, 0
    %p56 = por %p54, %p55
    %p57 = scmp.ne.s32.totalorder %s46, %s49
    %p58 = scmp.eq.s32.totalorder %s15, 1
    %p59 = por %p57, %p58
    %p60 = scmp.ne.s32.totalorder %s49, %s50
    %p61 = scmp.eq.s32.totalorder %s15, 0
    %p62 = por %p60, %p61
    %p63 = scmp.ne.s32.totalorder %s49, %s50
    %p64 = scmp.eq.s32.totalorder %s16, 1
    %p65 = por %p63, %p64
    %p67 = scmp.ne.s32.totalorder %s50, %s66
    %p68 = scmp.eq.s32.totalorder %s16, 0
    %p69 = por %p67, %p68
    %s71 = sadd.s32 %s70, 1
    %p74 = scmp.eq.s32.totalorder %s10, 1
    %p75 = scmp.ne.s32.totalorder %s70, %s72
    %p76 = scmp.eq.s32.totalorder %s10, 0
    %p77 = por %p75, %p76
    %p78 = scmp.ne.s32.totalorder %s70, %s72
    %p79 = scmp.eq.s32.totalorder %s15, 1
    %p80 = por %p78, %p79
    %p81 = scmp.ne.s32.totalorder %s72, %s73
    %p82 = scmp.eq.s32.totalorder %s15, 0
    %p83 = por %p81, %p82
    %p84 = scmp.ne.s32.totalorder %s72, %s73
    %p85 = scmp.eq.s32.totalorder %s16, 1
    %p86 = por %p84, %p85
    %p88 = scmp.ne.s32.totalorder %s73, %s87
    %p89 = scmp.eq.s32.totalorder %s16, 0
    %p90 = por %p88, %p89
    %s92 = sadd.s32 %s91, 1
    %p95 = scmp.eq.s32.totalorder %s10, 1
    %p96 = scmp.ne.s32.totalorder %s91, %s93
    %p97 = scmp.eq.s32.totalorder %s10, 0
    %p98 = por %p96, %p97
    %p99 = scmp.ne.s32.totalorder %s91, %s93
    %p100 = scmp.eq.s32.totalorder %s15, 1
    %p101 = por %p99, %p100
    %p102 = scmp.ne.s32.totalorder %s93, %s94
    %p103 = scmp.eq.s32.totalorder %s15, 0
    %p104 = por %p102, %p103
    %p105 = scmp.ne.s32.totalorder %s93, %s94
    %p106 = scmp.eq.s32.totalorder %s16, 1
    %p107 = por %p105, %p106
    %p109 = scmp.ne.s32.totalorder %s94, %s108
    %p110 = scmp.eq.s32.totalorder %s16, 0
    %p111 = por %p109, %p110
    %s113 = sadd.s32 %s112, 1
    %p116 = scmp.eq.s32.totalorder %s10, 1
    %p117 = scmp.ne.s32.totalorder %s112, %s114
    %p118 = scmp.eq.s32.totalorder %s10, 0
    %p119 = por %p117, %p118
    %p120 = scmp.ne.s32.totalorder %s112, %s114
    %p121 = scmp.eq.s32.totalorder %s15, 1
    %p122 = por %p120, %p121
    %p123 = scmp.ne.s32.totalorder %s114, %s115
    %p124 = scmp.eq.s32.totalorder %s15, 0
    %p125 = por %p123, %p124
    %p126 = scmp.ne.s32.totalorder %s114, %s115
    %p127 = scmp.eq.s32.totalorder %s16, 1
    %p128 = por %p126, %p127
    %p130 = scmp.ne.s32.totalorder %s115, %s129
    %p131 = scmp.eq.s32.totalorder %s16, 0
    %p132 = por %p130, %p131
    %p133 = scmp.le.s32.totalorder 1, %s10
    %p134 = scmp.lt.s32.totalorder %s10, 3
    %p135 = pnand %p133, %p134
    %p136 = pneg %p135
    // Predicated region
    $region9: #{gcn_g_forward.5} parent=5 // pred_check
      _
    $region10: #{gcn_g_forward.5} parent=5 // pred_check_branch
      %138 = sbr.rel (%p135) target = $region12
    $region11: #{gcn_g_forward.5} parent=5 // pred_region
      %s139 = ssub.s32 %s10, 1
      // Predicated region
      $region13: #{gcn_g_forward.5} parent=11 // pred_check
        %p140 = pneg %p83
      $region14: #{gcn_g_forward.5} parent=11 // pred_check_branch
        %142 = sbr.rel (%p140) target = $region16
      $region15: #{gcn_g_forward.5} parent=11 // pred_region
        _
      $region16: #{gcn_g_forward.5} parent=11 // pred_fallthru
        _
      // Predicated region
      $region17: #{gcn_g_forward.5} parent=11 // pred_check
        %p143 = pneg %p104
      $region18: #{gcn_g_forward.5} parent=11 // pred_check_branch
        %145 = sbr.rel (%p143) target = $region20
      $region19: #{gcn_g_forward.5} parent=11 // pred_region
        _
      $region20: #{gcn_g_forward.5} parent=11 // pred_fallthru
        _
    $region12: #{gcn_g_forward.5} parent=5 // pred_fallthru
      _
    %p146 = scmp.lt.s32.totalorder %s10, 2
    // Predicated region
    $region21: #{gcn_g_forward.5} parent=5 // pred_check
      %p147 = pneg %p146
    $region22: #{gcn_g_forward.5} parent=5 // pred_check_branch
      %149 = sbr.rel (%p147) target = $region24
    $region23: #{gcn_g_forward.5} parent=5 // pred_region
      // Predicated region
      $region25: #{gcn_g_forward.5} parent=23 // pred_check
        %p150 = pneg %p30
      $region26: #{gcn_g_forward.5} parent=23 // pred_check_branch
        %152 = sbr.rel (%p150) target = $region28
      $region27: #{gcn_g_forward.5} parent=23 // pred_region
        %s153 = smul.u32 4, %s10
        %p154 = scmp.lt.s32.totalorder %s153, 7
        %s155 = scalar_select %p154, %s153, 7
        %s156 = smul.addr %s155, 4
        %s157 = scalar_lea.vmem %s0, %s156
        %s158 = smul.u32 4, %s10
      $region28: #{gcn_g_forward.5} parent=23 // pred_fallthru
        _
      // Predicated region
      $region29: #{gcn_g_forward.5} parent=23 // pred_check
        %p159 = pneg %p56
      $region30: #{gcn_g_forward.5} parent=23 // pred_check_branch
        %161 = sbr.rel (%p159) target = $region32
      $region31: #{gcn_g_forward.5} parent=23 // pred_region
        %s162 = smul.u32 64, %s10
        %p163 = scmp.lt.s32.totalorder %s162, 127
        %s164 = scalar_select %p163, %s162, 127
        %s165 = smul.addr %s164, 4
        %s166 = scalar_lea.vmem %s1, %s165
        %s167 = smul.u32 64, %s10
      $region32: #{gcn_g_forward.5} parent=23 // pred_fallthru
        _
    $region24: #{gcn_g_forward.5} parent=5 // pred_fallthru
      _
    %p168 = scmp.le.s32.totalorder 1, %s10
    %p169 = scmp.lt.s32.totalorder %s10, 3
    %p170 = pnand %p168, %p169
    %p171 = pneg %p170
    // Predicated region
    $region33: #{gcn_g_forward.5} parent=5 // pred_check
      _
    $region34: #{gcn_g_forward.5} parent=5 // pred_check_branch
      %173 = sbr.rel (%p170) target = $region36
    $region35: #{gcn_g_forward.5} parent=5 // pred_region
      %s174 = ssub.s32 %s10, 1
      %s175 = smul.u32 4, %s15
      %p176 = scmp.lt.s32.totalorder %s175, 7
      %s177 = scalar_select %p176, %s175, 7
      %s178 = smul.addr %s177, 4
      %s179 = scalar_lea.vmem %s0, %s178
      %p180 = pneg %p36
      %p181 = pneg %p33
      %s182 = smul.u32 64, %s15
      %p183 = scmp.lt.s32.totalorder %s182, 127
      %s184 = scalar_select %p183, %s182, 127
      %s185 = smul.addr %s184, 4
      %s186 = scalar_lea.vmem %s1, %s185
      %p187 = pneg %p62
      %p188 = pneg %p59
      %p189 = pneg %p83
      %p190 = pneg %p80
      %p191 = pneg %p104
      %p192 = pneg %p101
      %p193 = pneg %p125
      %p194 = pneg %p122
      %s195 = smul.u32 4, %s15
      %p196 = scmp.lt.s32.totalorder %s195, 7
      %s197 = scalar_select %p196, %s195, 7
      %s198 = smul.addr %s197, 4
      %s199 = scalar_lea.vmem %s0, %s198
      %s200 = smul.u32 4, %s15
      %s201 = smul.u32 64, %s15
      %p202 = scmp.lt.s32.totalorder %s201, 127
      %s203 = scalar_select %p202, %s201, 127
      %s204 = smul.addr %s203, 4
      %s205 = scalar_lea.vmem %s1, %s204
      %s206 = smul.u32 64, %s15
      %p208 = scmp.eq.s32.totalorder %s15, 0
      // Predicated region
      $region37: #{gcn_g_forward.5} parent=35 // pred_check
        %p209 = pneg %p208
      $region38: #{gcn_g_forward.5} parent=35 // pred_check_branch
        %211 = sbr.rel (%p209) target = $region40
      $region39: #{gcn_g_forward.5} parent=35 // pred_region
        %212 = vst [vmem:[#allocation2] sm:$0xff] 0.0
      $region40: #{gcn_g_forward.5} parent=35 // pred_fallthru
        _
      %v213 = vld [vmem:[#allocation2] sm:$0xff]
      %v214 = vld [vmem:[%s199] sm:$0xff]
      %v215 = vld [vmem:[%s199 + $0x8] sm:$0xff]
      %v216 = vld [vmem:[%s205] sm:$0xf]
      %v217 = vld [vmem:[%s205 + $0x4] sm:$0xf]
      %v218 = vld [vmem:[%s205 + $0x8] sm:$0xf]
      %v219 = vld [vmem:[%s205 + $0xc] sm:$0xf]
      %v220 = vld [vmem:[%s205 + $0x10] sm:$0xf]
      %v221 = vld [vmem:[%s205 + $0x14] sm:$0xf]
      %v222 = vld [vmem:[%s205 + $0x18] sm:$0xf]
      %v223 = vld [vmem:[%s205 + $0x1c] sm:$0xf]
      %v224 = vld [vmem:[%s205 + $0x20] sm:$0xf]
      %v225 = vld [vmem:[%s205 + $0x24] sm:$0xf]
      %v226 = vld [vmem:[%s205 + $0x28] sm:$0xf]
      %v227 = vld [vmem:[%s205 + $0x2c] sm:$0xf]
      %v228 = vld [vmem:[%s205 + $0x30] sm:$0xf]
      %v229 = vld [vmem:[%s205 + $0x34] sm:$0xf]
      %v230 = vld [vmem:[%s205 + $0x38] sm:$0xf]
      %v231 = vld [vmem:[%s205 + $0x3c] sm:$0xf]
      %v232 = vld [vmem:[%s205 + $0x40] sm:$0xf]
      %v233 = vld [vmem:[%s205 + $0x44] sm:$0xf]
      %v234 = vld [vmem:[%s205 + $0x48] sm:$0xf]
      %v235 = vld [vmem:[%s205 + $0x4c] sm:$0xf]
      %v236 = vld [vmem:[%s205 + $0x50] sm:$0xf]
      %v237 = vld [vmem:[%s205 + $0x54] sm:$0xf]
      %v238 = vld [vmem:[%s205 + $0x58] sm:$0xf]
      %v239 = vld [vmem:[%s205 + $0x5c] sm:$0xf]
      %v240 = vld [vmem:[%s205 + $0x60] sm:$0xf]
      %v241 = vld [vmem:[%s205 + $0x64] sm:$0xf]
      %v242 = vld [vmem:[%s205 + $0x68] sm:$0xf]
      %v243 = vld [vmem:[%s205 + $0x6c] sm:$0xf]
      %v244 = vld [vmem:[%s205 + $0x70] sm:$0xf]
      %v245 = vld [vmem:[%s205 + $0x74] sm:$0xf]
      %v246 = vld [vmem:[%s205 + $0x78] sm:$0xf]
      %v247 = vld [vmem:[%s205 + $0x7c] sm:$0xf]
      %v248 = vld [vmem:[%s205 + $0x80] sm:$0xf]
      %v249 = vld [vmem:[%s205 + $0x84] sm:$0xf]
      %v250 = vld [vmem:[%s205 + $0x88] sm:$0xf]
      %v251 = vld [vmem:[%s205 + $0x8c] sm:$0xf]
      %v252 = vld [vmem:[%s205 + $0x90] sm:$0xf]
      %v253 = vld [vmem:[%s205 + $0x94] sm:$0xf]
      %v254 = vld [vmem:[%s205 + $0x98] sm:$0xf]
      %v255 = vld [vmem:[%s205 + $0x9c] sm:$0xf]
      %v256 = vld [vmem:[%s205 + $0xa0] sm:$0xf]
      %v257 = vld [vmem:[%s205 + $0xa4] sm:$0xf]
      %v258 = vld [vmem:[%s205 + $0xa8] sm:$0xf]
      %v259 = vld [vmem:[%s205 + $0xac] sm:$0xf]
      %v260 = vld [vmem:[%s205 + $0xb0] sm:$0xf]
      %v261 = vld [vmem:[%s205 + $0xb4] sm:$0xf]
      %v262 = vld [vmem:[%s205 + $0xb8] sm:$0xf]
      %v263 = vld [vmem:[%s205 + $0xbc] sm:$0xf]
      %v264 = vld [vmem:[%s205 + $0xc0] sm:$0xf]
      %v265 = vld [vmem:[%s205 + $0xc4] sm:$0xf]
      %v266 = vld [vmem:[%s205 + $0xc8] sm:$0xf]
      %v267 = vld [vmem:[%s205 + $0xcc] sm:$0xf]
      %v268 = vld [vmem:[%s205 + $0xd0] sm:$0xf]
      %v269 = vld [vmem:[%s205 + $0xd4] sm:$0xf]
      %v270 = vld [vmem:[%s205 + $0xd8] sm:$0xf]
      %v271 = vld [vmem:[%s205 + $0xdc] sm:$0xf]
      %v272 = vld [vmem:[%s205 + $0xe0] sm:$0xf]
      %v273 = vld [vmem:[%s205 + $0xe4] sm:$0xf]
      %v274 = vld [vmem:[%s205 + $0xe8] sm:$0xf]
      %v275 = vld [vmem:[%s205 + $0xec] sm:$0xf]
      %v276 = vld [vmem:[%s205 + $0xf0] sm:$0xf]
      %v277 = vld [vmem:[%s205 + $0xf4] sm:$0xf]
      %v278 = vld [vmem:[%s205 + $0xf8] sm:$0xf]
      %v279 = vld [vmem:[%s205 + $0xfc] sm:$0xf]
      %v282 = vunpack.c.l.b16 %v214
      %v283 = vunpack.c.h.b16 %v214
      %v284 = vunpack.c.l.b16 %v215
      %v285 = vunpack.c.h.b16 %v215
      %v286 = vpack.c.b16 %v282, %v282
      %v287 = vpack.c.b16 %v283, %v283
      %v288 = vpack.c.b16 %v284, %v284
      %v289 = vpack.c.b16 %v285, %v285
      %v358 = vunpack.c.l.b16 %v216
      %v359 = vunpack.c.l.b16 %v217
      %v360 = vunpack.c.l.b16 %v218
      %v361 = vunpack.c.l.b16 %v219
      %v362 = vunpack.c.l.b16 %v220
      %v363 = vunpack.c.l.b16 %v221
      %v364 = vunpack.c.l.b16 %v222
      %v365 = vunpack.c.l.b16 %v223
      %v366 = vunpack.c.l.b16 %v224
      %v367 = vunpack.c.l.b16 %v225
      %v368 = vunpack.c.l.b16 %v226
      %v369 = vunpack.c.l.b16 %v227
      %v370 = vunpack.c.l.b16 %v228
      %v371 = vunpack.c.l.b16 %v229
      %v372 = vunpack.c.l.b16 %v230
      %v373 = vunpack.c.l.b16 %v231
      %v374 = vunpack.c.l.b16 %v232
      %v375 = vunpack.c.l.b16 %v233
      %v376 = vunpack.c.l.b16 %v234
      %v377 = vunpack.c.l.b16 %v235
      %v378 = vunpack.c.l.b16 %v236
      %v379 = vunpack.c.l.b16 %v237
      %v380 = vunpack.c.l.b16 %v238
      %v381 = vunpack.c.l.b16 %v239
      %v382 = vunpack.c.l.b16 %v240
      %v383 = vunpack.c.l.b16 %v241
      %v384 = vunpack.c.l.b16 %v242
      %v385 = vunpack.c.l.b16 %v243
      %v386 = vunpack.c.l.b16 %v244
      %v387 = vunpack.c.l.b16 %v245
      %v388 = vunpack.c.l.b16 %v246
      %v389 = vunpack.c.l.b16 %v247
      %v390 = vunpack.c.l.b16 %v248
      %v391 = vunpack.c.l.b16 %v249
      %v392 = vunpack.c.l.b16 %v250
      %v393 = vunpack.c.l.b16 %v251
      %v394 = vunpack.c.l.b16 %v252
      %v395 = vunpack.c.l.b16 %v253
      %v396 = vunpack.c.l.b16 %v254
      %v397 = vunpack.c.l.b16 %v255
      %v398 = vunpack.c.l.b16 %v256
      %v399 = vunpack.c.l.b16 %v257
      %v400 = vunpack.c.l.b16 %v258
      %v401 = vunpack.c.l.b16 %v259
      %v402 = vunpack.c.l.b16 %v260
      %v403 = vunpack.c.l.b16 %v261
      %v404 = vunpack.c.l.b16 %v262
      %v405 = vunpack.c.l.b16 %v263
      %v406 = vunpack.c.l.b16 %v264
      %v407 = vunpack.c.l.b16 %v265
      %v408 = vunpack.c.l.b16 %v266
      %v409 = vunpack.c.l.b16 %v267
      %v410 = vunpack.c.l.b16 %v268
      %v411 = vunpack.c.l.b16 %v269
      %v412 = vunpack.c.l.b16 %v270
      %v413 = vunpack.c.l.b16 %v271
      %v414 = vunpack.c.l.b16 %v272
      %v415 = vunpack.c.l.b16 %v273
      %v416 = vunpack.c.l.b16 %v274
      %v417 = vunpack.c.l.b16 %v275
      %v418 = vunpack.c.l.b16 %v276
      %v419 = vunpack.c.l.b16 %v277
      %v420 = vunpack.c.l.b16 %v278
      %v421 = vunpack.c.l.b16 %v279
      %v422 = vpack.c.b16 %v359, %v358
      %v423 = vpack.c.b16 %v361, %v360
      %v424 = vpack.c.b16 %v363, %v362
      %v425 = vpack.c.b16 %v365, %v364
      %v426 = vpack.c.b16 %v367, %v366
      %v427 = vpack.c.b16 %v369, %v368
      %v428 = vpack.c.b16 %v371, %v370
      %v429 = vpack.c.b16 %v373, %v372
      %v430 = vpack.c.b16 %v375, %v374
      %v431 = vpack.c.b16 %v377, %v376
      %v432 = vpack.c.b16 %v379, %v378
      %v433 = vpack.c.b16 %v381, %v380
      %v434 = vpack.c.b16 %v383, %v382
      %v435 = vpack.c.b16 %v385, %v384
      %v436 = vpack.c.b16 %v387, %v386
      %v437 = vpack.c.b16 %v389, %v388
      %v438 = vpack.c.b16 %v391, %v390
      %v439 = vpack.c.b16 %v393, %v392
      %v440 = vpack.c.b16 %v395, %v394
      %v441 = vpack.c.b16 %v397, %v396
      %v442 = vpack.c.b16 %v399, %v398
      %v443 = vpack.c.b16 %v401, %v400
      %v444 = vpack.c.b16 %v403, %v402
      %v445 = vpack.c.b16 %v405, %v404
      %v446 = vpack.c.b16 %v407, %v406
      %v447 = vpack.c.b16 %v409, %v408
      %v448 = vpack.c.b16 %v411, %v410
      %v449 = vpack.c.b16 %v413, %v412
      %v450 = vpack.c.b16 %v415, %v414
      %v451 = vpack.c.b16 %v417, %v416
      %v452 = vpack.c.b16 %v419, %v418
      %v453 = vpack.c.b16 %v421, %v420
      %486 = vmatprep.subr.bf16.mxu0 0
      %487 = vmatpush1.bf16.msra.mxu0 %v429
      %488 = vmatprep.subr.bf16.mxu0 0
      %489 = vmatpush1.bf16.msra.mxu0 %v428
      %490 = vmatprep.subr.bf16.mxu0 0
      %491 = vmatpush1.bf16.msra.mxu0 %v427
      %492 = vmatprep.subr.bf16.mxu0 0
      %493 = vmatpush1.bf16.msra.mxu0 %v426
      %494 = vmatprep.subr.bf16.mxu0 0
      %495 = vmatpush1.bf16.msra.mxu0 %v425
      %496 = vmatprep.subr.bf16.mxu0 0
      %497 = vmatpush1.bf16.msra.mxu0 %v424
      %498 = vmatprep.subr.bf16.mxu0 0
      %499 = vmatpush1.bf16.msra.mxu0 %v423
      %500 = vmatprep.subr.bf16.mxu0 0
      %501 = vmatpush1.bf16.msra.mxu0 %v422
      %502 = vmatprep.subr.bf16.mxu0 0
      %503 = vmatpush2.bf16.msra.mxu0 %v437
      %504 = vmatprep.subr.bf16.mxu0 0
      %505 = vmatpush2.bf16.msra.mxu0 %v436
      %506 = vmatprep.subr.bf16.mxu0 0
      %507 = vmatpush2.bf16.msra.mxu0 %v435
      %508 = vmatprep.subr.bf16.mxu0 0
      %509 = vmatpush2.bf16.msra.mxu0 %v434
      %510 = vmatprep.subr.bf16.mxu0 0
      %511 = vmatpush2.bf16.msra.mxu0 %v433
      %512 = vmatprep.subr.bf16.mxu0 0
      %513 = vmatpush2.bf16.msra.mxu0 %v432
      %514 = vmatprep.subr.bf16.mxu0 0
      %515 = vmatpush2.bf16.msra.mxu0 %v431
      %516 = vmatprep.subr.bf16.mxu0 0
      %517 = vmatpush2.bf16.msra.mxu0 %v430
      %518 = vmatprep.mubr.bf16.mxu0 %v287
      %519 = vmatmul.mubr.bf16.gmra.mxu0 %v286
      %v520 = vpop.f32.mrf.mxu0
      %v521 = vadd.f32 0.0, %v520
      %v522 = vpop.f32.mrf.mxu0
      %v523 = vpop.f32.mrf.mxu0
      %v524 = vpop.f32.mrf.mxu0
      %525 = vdwg.mxu0
      %526 = vmatprep.subr.bf16.mxu0 0
      %527 = vmatpush1.bf16.msra.mxu0 %v445
      %528 = vmatprep.subr.bf16.mxu0 0
      %529 = vmatpush1.bf16.msra.mxu0 %v444
      %530 = vmatprep.subr.bf16.mxu0 0
      %531 = vmatpush1.bf16.msra.mxu0 %v443
      %532 = vmatprep.subr.bf16.mxu0 0
      %533 = vmatpush1.bf16.msra.mxu0 %v442
      %534 = vmatprep.subr.bf16.mxu0 0
      %535 = vmatpush1.bf16.msra.mxu0 %v441
      %536 = vmatprep.subr.bf16.mxu0 0
      %537 = vmatpush1.bf16.msra.mxu0 %v440
      %538 = vmatprep.subr.bf16.mxu0 0
      %539 = vmatpush1.bf16.msra.mxu0 %v439
      %540 = vmatprep.subr.bf16.mxu0 0
      %541 = vmatpush1.bf16.msra.mxu0 %v438
      %542 = vmatprep.subr.bf16.mxu0 0
      %543 = vmatpush2.bf16.msra.mxu0 %v453
      %544 = vmatprep.subr.bf16.mxu0 0
      %545 = vmatpush2.bf16.msra.mxu0 %v452
      %546 = vmatprep.subr.bf16.mxu0 0
      %547 = vmatpush2.bf16.msra.mxu0 %v451
      %548 = vmatprep.subr.bf16.mxu0 0
      %549 = vmatpush2.bf16.msra.mxu0 %v450
      %550 = vmatprep.subr.bf16.mxu0 0
      %551 = vmatpush2.bf16.msra.mxu0 %v449
      %552 = vmatprep.subr.bf16.mxu0 0
      %553 = vmatpush2.bf16.msra.mxu0 %v448
      %554 = vmatprep.subr.bf16.mxu0 0
      %555 = vmatpush2.bf16.msra.mxu0 %v447
      %556 = vmatprep.subr.bf16.mxu0 0
      %557 = vmatpush2.bf16.msra.mxu0 %v446
      %558 = vmatprep.mubr.bf16.mxu0 %v289
      %559 = vmatmul.mubr.bf16.gmra.mxu0 %v288
      %v560 = vpop.f32.mrf.mxu0
      %v561 = vadd.f32 %v521, %v560
      %v562 = vpop.f32.mrf.mxu0
      %v563 = vpop.f32.mrf.mxu0
      %v564 = vpop.f32.mrf.mxu0
      %565 = vdwg.mxu0
      %v566 = vadd.f32 %v213, %v561
      %567 = vst [vmem:[#allocation2] sm:$0xff] %v566
      %p568 = scmp.eq.s32.totalorder %s15, 1
      // Predicated region
      $region41: #{gcn_g_forward.5} parent=35 // pred_check
        %p569 = pneg %p568
      $region42: #{gcn_g_forward.5} parent=35 // pred_check_branch
        %571 = sbr.rel (%p569) target = $region44
      $region43: #{gcn_g_forward.5} parent=35 // pred_region
        %v572 = vld [vmem:[#allocation2] sm:$0xff]
        %v573 = vpack.c.bf16 %v572, %v572
        %v574 = vld [vmem:[%s2] sm:$0xf]
        %v575 = vld [vmem:[%s2 + $0x4] sm:$0xf]
        %v576 = vld [vmem:[%s2 + $0x8] sm:$0xf]
        %v577 = vld [vmem:[%s2 + $0xc] sm:$0xf]
        %v578 = vld [vmem:[%s2 + $0x10] sm:$0xf]
        %v579 = vld [vmem:[%s2 + $0x14] sm:$0xf]
        %v580 = vld [vmem:[%s2 + $0x18] sm:$0xf]
        %v581 = vld [vmem:[%s2 + $0x1c] sm:$0xf]
        %v582 = vld [vmem:[%s2 + $0x20] sm:$0xf]
        %v583 = vld [vmem:[%s2 + $0x24] sm:$0xf]
        %v584 = vld [vmem:[%s2 + $0x28] sm:$0xf]
        %v585 = vld [vmem:[%s2 + $0x2c] sm:$0xf]
        %v586 = vld [vmem:[%s2 + $0x30] sm:$0xf]
        %v587 = vld [vmem:[%s2 + $0x34] sm:$0xf]
        %v588 = vld [vmem:[%s2 + $0x38] sm:$0xf]
        %v589 = vld [vmem:[%s2 + $0x3c] sm:$0xf]
        %v590 = vld [vmem:[%s3] sm:$0x1]
        %v592 = vlaneseq
        %v593 = vshrl.u32 %v592, 7
        %v594 = vsub.s32 0, %v593
        %v595 = vrot.slane %v590, %v594
        %v613 = vunpack.c.l.b16 %v574
        %v614 = vunpack.c.l.b16 %v575
        %v615 = vunpack.c.l.b16 %v576
        %v616 = vunpack.c.l.b16 %v577
        %v617 = vunpack.c.l.b16 %v578
        %v618 = vunpack.c.l.b16 %v579
        %v619 = vunpack.c.l.b16 %v580
        %v620 = vunpack.c.l.b16 %v581
        %v621 = vunpack.c.l.b16 %v582
        %v622 = vunpack.c.l.b16 %v583
        %v623 = vunpack.c.l.b16 %v584
        %v624 = vunpack.c.l.b16 %v585
        %v625 = vunpack.c.l.b16 %v586
        %v626 = vunpack.c.l.b16 %v587
        %v627 = vunpack.c.l.b16 %v588
        %v628 = vunpack.c.l.b16 %v589
        %v629 = vpack.c.b16 %v614, %v613
        %v630 = vpack.c.b16 %v616, %v615
        %v631 = vpack.c.b16 %v618, %v617
        %v632 = vpack.c.b16 %v620, %v619
        %v633 = vpack.c.b16 %v622, %v621
        %v634 = vpack.c.b16 %v624, %v623
        %v635 = vpack.c.b16 %v626, %v625
        %v636 = vpack.c.b16 %v628, %v627
        %645 = vmatprep.subr.bf16.mxu0 0
        %646 = vmatpush1.bf16.msra.mxu0 %v636
        %647 = vmatprep.subr.bf16.mxu0 0
        %648 = vmatpush1.bf16.msra.mxu0 %v635
        %649 = vmatprep.subr.bf16.mxu0 0
        %650 = vmatpush1.bf16.msra.mxu0 %v634
        %651 = vmatprep.subr.bf16.mxu0 0
        %652 = vmatpush1.bf16.msra.mxu0 %v633
        %653 = vmatprep.subr.bf16.mxu0 0
        %654 = vmatpush1.bf16.msra.mxu0 %v632
        %655 = vmatprep.subr.bf16.mxu0 0
        %656 = vmatpush1.bf16.msra.mxu0 %v631
        %657 = vmatprep.subr.bf16.mxu0 0
        %658 = vmatpush1.bf16.msra.mxu0 %v630
        %659 = vmatprep.subr.bf16.mxu0 0
        %660 = vmatpush1.bf16.msra.mxu0 %v629
        %661 = vmatprep.subr.bf16.mxu0 0
        %662 = vmatpush2.bf16.msra.mxu0 0
        %663 = vmatprep.subr.bf16.mxu0 0
        %664 = vmatpush2.bf16.msra.mxu0 0
        %665 = vmatprep.subr.bf16.mxu0 0
        %666 = vmatpush2.bf16.msra.mxu0 0
        %667 = vmatprep.subr.bf16.mxu0 0
        %668 = vmatpush2.bf16.msra.mxu0 0
        %669 = vmatprep.subr.bf16.mxu0 0
        %670 = vmatpush2.bf16.msra.mxu0 0
        %671 = vmatprep.subr.bf16.mxu0 0
        %672 = vmatpush2.bf16.msra.mxu0 0
        %673 = vmatprep.subr.bf16.mxu0 0
        %674 = vmatpush2.bf16.msra.mxu0 0
        %675 = vmatprep.subr.bf16.mxu0 0
        %676 = vmatpush2.bf16.msra.mxu0 0
        %677 = vmatprep.mubr.bf16.mxu0 0
        %678 = vmatmul.mubr.bf16.gmra.mxu0 %v573
        %v679 = vpop.f32.mrf.mxu0
        %v680 = vadd.f32 %v595, %v679
        %v681 = vpop.f32.mrf.mxu0
        %v682 = vpop.f32.mrf.mxu0
        %v683 = vpop.f32.mrf.mxu0
        %684 = vdwg.mxu0
        %v685 = vlaneseq
        %v686 = vand.u32 %v685, 127
        %vm687 = vcmp.lt.s32.totalorder %v686, 4
        %v688 = vsel %vm687, %v680, -3.4028235e+38
        %689 = vmax.xlane.f32.xlu0 %v688
        %v690 = vpop.xlane.xlu0 %689
        %v691 = vsub.f32 %v688, %v690
        %v692 = vmul.f32 %v691, 1.442695
        %v693 = vpow.pop %v692
        %v694 = vsel %vm687, %v693, 0.0
        %695 = vadd.xlane.f32.xlu0 %v694
        %v696 = vpop.xlane.xlu0 %695
        %v697 = vlog2.pop %v696
        %v698 = vmul.f32 %v697, 0.6931472
        %v699 = vsub.f32 %v691, %v698
        %v700 = vsel %vm687, %v699, 0.0
        %701 = vst [vmem:[%s4] sm:$0xff] %v700
      $region44: #{gcn_g_forward.5} parent=35 // pred_fallthru
        _
      // Predicated region
      $region45: #{gcn_g_forward.5} parent=35 // pred_check
        %p702 = pneg %p122
      $region46: #{gcn_g_forward.5} parent=35 // pred_check_branch
        %704 = sbr.rel (%p702) target = $region48
      $region47: #{gcn_g_forward.5} parent=35 // pred_region
        _
      $region48: #{gcn_g_forward.5} parent=35 // pred_fallthru
        _
      // Predicated region
      $region49: #{gcn_g_forward.5} parent=35 // pred_check
        %p705 = pneg %p122
      $region50: #{gcn_g_forward.5} parent=35 // pred_check_branch
        %707 = sbr.rel (%p705) target = $region52
      $region51: #{gcn_g_forward.5} parent=35 // pred_region
        _
      $region52: #{gcn_g_forward.5} parent=35 // pred_fallthru
        _
    $region36: #{gcn_g_forward.5} parent=5 // pred_fallthru
      _
    %p708 = scmp.le.s32.totalorder 2, %s10
    // Predicated region
    $region53: #{gcn_g_forward.5} parent=5 // pred_check
      %p709 = pneg %p708
    $region54: #{gcn_g_forward.5} parent=5 // pred_check_branch
      %711 = sbr.rel (%p709) target = $region56
    $region55: #{gcn_g_forward.5} parent=5 // pred_region
      %s712 = ssub.s32 %s10, 2
    $region56: #{gcn_g_forward.5} parent=5 // pred_fallthru
      _
  $region6: #{gcn_g_forward.5} parent=0 // loop_footer
    %s14 = sadd.s32 1, %s10
  $region7: #{gcn_g_forward.5} parent=0 // loop_footer_branch
    %9 = sbr.rel target = $region3
  $region8: #{gcn_g_forward.5} parent=0 // loop_exit
    _

// kernel: gcn_g_forward.3
$region0: #{gcn_g_forward.3}
  #allocation0 [shape = 'u32[]', space=smem, size = 0x4, offset = 0x4, fixed_abs, tag = 'smem constant byte address 0x4 - core index']
  #allocation1 [shape = 'u32[144,128]{1,0:T(1,128)}', space=vmem, size = 0x12000, scoped, tag = 'internal scratch']
  #allocation2 [shape = 'f32[512,128]{1,0:T(8,128)}', space=vmem, size = 0x40000, scoped, tag = 'scratch operand']
  %s0 = inlined_call_operand.vmem [shape: bf16[1024,1024], index: 0, kind: input, shape index: {}]
  %s1 = inlined_call_operand.vmem [shape: bf16[1024,128], index: 1, kind: input, shape index: {}]
  %s2 = inlined_call_operand.vmem [shape: bf16[128,128], index: 2, kind: input, shape index: {}]
  %s3 = inlined_call_operand.vmem [shape: f32[1,128], index: 3, kind: input, shape index: {}]
  %s4 = inlined_call_operand.vmem [shape: bf16[1024,128], index: 4, kind: output, shape index: {}]
  %s5 = sld [smem:[#allocation0]]
  $region80: #{gcn_g_forward.3} parent=0
    _
  %s7 = ssub.s32 1, %s5
  %s8 = scalar_select 0, %s7, %s5
  $region1: #{gcn_g_forward.3} parent=0
    #allocation3 [shape = 'u8[1048576]{0}', space=vmem, size = 0x100000, scoped, tag = 'input window, operand 0']
    loop: start=0, step=1, limit=6
    $region2: #{gcn_g_forward.3} parent=1 // loop_pre_header
      _
    $region3: #{gcn_g_forward.3} parent=1 // loop_header
      %s10 = sphi 0, %s14
      %p11 = scmp.ge.s32.totalorder %s10, 6
      %s17 = sphi 0, %s29
      %s18 = sphi 0, %s25
      %s19 = sphi 0, %s17
      %s20 = sphi 0, %s18
      %s21 = sphi 0, %s19
      %s22 = sphi 0, %s20
      %s34 = sphi 0, %s36
      %s37 = sphi 0, %s34
      %s38 = sphi 0, %s37
      %s54 = sphi 0, %s38
      %s58 = sphi 0, %s58
      %s60 = sphi 0, %s58
      %s61 = sphi 0, %s60
      %s75 = sphi 0, %s61
      %s79 = sphi 0, %s79
      %s81 = sphi 0, %s79
      %s82 = sphi 0, %s81
      %s96 = sphi 0, %s82
      %s100 = sphi 0, %s100
      %s102 = sphi 0, %s100
      %s103 = sphi 0, %s102
      %s117 = sphi 0, %s103
      %s123 = sphi 0, %s125
      %s126 = sphi 0, %s123
      %s127 = sphi 0, %s126
      %s143 = sphi 0, %s127
    $region4: #{gcn_g_forward.3} parent=1 // loop_header_branch
      %13 = sbr.rel (%p11) target = $region8
    $region5: #{gcn_g_forward.3} parent=1 // loop_body
      %s15 = ssub.s32 %s10, 1
      %s16 = ssub.s32 %s10, 2
      %s23 = sadd.s32 1, %s18
      %p24 = scmp.ge.s32.totalorder %s23, 2
      %s25 = scalar_select %p24, 0, %s23
      %s26 = sadd.s32 1, %s17
      %s27 = scalar_select %p24, %s26, %s17
      %p28 = scmp.ge.s32.totalorder %s27, 2
      %s29 = scalar_select %p28, 0, %s27
      %s30 = ssub.s32 %s17, %s29
      %s31 = ssub.s32 %s18, %s25
      %s32 = sor.u32 %s30, %s31
      %p33 = scmp.eq.s32.totalorder %s32, 0
      %s35 = sadd.s32 %s34, 1
      %s36 = scalar_select %p33, %s34, %s35
      %p39 = pneg %p33
      %p40 = scmp.eq.s32.totalorder %s10, 3
      %p41 = por %p39, %p40
      %p42 = scmp.ne.s32.totalorder %s34, %s37
      %p43 = scmp.eq.s32.totalorder %s10, 0
      %p44 = por %p42, %p43
      %p45 = scmp.ne.s32.totalorder %s34, %s37
      %p46 = scmp.eq.s32.totalorder %s15, 3
      %p47 = por %p45, %p46
      %p48 = scmp.ne.s32.totalorder %s37, %s38
      %p49 = scmp.eq.s32.totalorder %s15, 0
      %p50 = por %p48, %p49
      %p51 = scmp.ne.s32.totalorder %s37, %s38
      %p52 = scmp.eq.s32.totalorder %s16, 3
      %p53 = por %p51, %p52
      %p55 = scmp.ne.s32.totalorder %s38, %s54
      %p56 = scmp.eq.s32.totalorder %s16, 0
      %p57 = por %p55, %p56
      %s59 = sadd.s32 %s58, 1
      %p62 = scmp.eq.s32.totalorder %s10, 3
      %p63 = scmp.ne.s32.totalorder %s58, %s60
      %p64 = scmp.eq.s32.totalorder %s10, 0
      %p65 = por %p63, %p64
      %p66 = scmp.ne.s32.totalorder %s58, %s60
      %p67 = scmp.eq.s32.totalorder %s15, 3
      %p68 = por %p66, %p67
      %p69 = scmp.ne.s32.totalorder %s60, %s61
      %p70 = scmp.eq.s32.totalorder %s15, 0
      %p71 = por %p69, %p70
      %p72 = scmp.ne.s32.totalorder %s60, %s61
      %p73 = scmp.eq.s32.totalorder %s16, 3
      %p74 = por %p72, %p73
      %p76 = scmp.ne.s32.totalorder %s61, %s75
      %p77 = scmp.eq.s32.totalorder %s16, 0
      %p78 = por %p76, %p77
      %s80 = sadd.s32 %s79, 1
      %p83 = scmp.eq.s32.totalorder %s10, 3
      %p84 = scmp.ne.s32.totalorder %s79, %s81
      %p85 = scmp.eq.s32.totalorder %s10, 0
      %p86 = por %p84, %p85
      %p87 = scmp.ne.s32.totalorder %s79, %s81
      %p88 = scmp.eq.s32.totalorder %s15, 3
      %p89 = por %p87, %p88
      %p90 = scmp.ne.s32.totalorder %s81, %s82
      %p91 = scmp.eq.s32.totalorder %s15, 0
      %p92 = por %p90, %p91
      %p93 = scmp.ne.s32.totalorder %s81, %s82
      %p94 = scmp.eq.s32.totalorder %s16, 3
      %p95 = por %p93, %p94
      %p97 = scmp.ne.s32.totalorder %s82, %s96
      %p98 = scmp.eq.s32.totalorder %s16, 0
      %p99 = por %p97, %p98
      %s101 = sadd.s32 %s100, 1
      %p104 = scmp.eq.s32.totalorder %s10, 3
      %p105 = scmp.ne.s32.totalorder %s100, %s102
      %p106 = scmp.eq.s32.totalorder %s10, 0
      %p107 = por %p105, %p106
      %p108 = scmp.ne.s32.totalorder %s100, %s102
      %p109 = scmp.eq.s32.totalorder %s15, 3
      %p110 = por %p108, %p109
      %p111 = scmp.ne.s32.totalorder %s102, %s103
      %p112 = scmp.eq.s32.totalorder %s15, 0
      %p113 = por %p111, %p112
      %p114 = scmp.ne.s32.totalorder %s102, %s103
      %p115 = scmp.eq.s32.totalorder %s16, 3
      %p116 = por %p114, %p115
      %p118 = scmp.ne.s32.totalorder %s103, %s117
      %p119 = scmp.eq.s32.totalorder %s16, 0
      %p120 = por %p118, %p119
      %s121 = ssub.s32 %s17, %s29
      %p122 = scmp.eq.s32.totalorder %s121, 0
      %s124 = sadd.s32 %s123, 1
      %s125 = scalar_select %p122, %s123, %s124
      %p128 = pneg %p122
      %p129 = scmp.eq.s32.totalorder %s10, 3
      %p130 = por %p128, %p129
      %p131 = scmp.ne.s32.totalorder %s123, %s126
      %p132 = scmp.eq.s32.totalorder %s10, 0
      %p133 = por %p131, %p132
      %p134 = scmp.ne.s32.totalorder %s123, %s126
      %p135 = scmp.eq.s32.totalorder %s15, 3
      %p136 = por %p134, %p135
      %p137 = scmp.ne.s32.totalorder %s126, %s127
      %p138 = scmp.eq.s32.totalorder %s15, 0
      %p139 = por %p137, %p138
      %p140 = scmp.ne.s32.totalorder %s126, %s127
      %p141 = scmp.eq.s32.totalorder %s16, 3
      %p142 = por %p140, %p141
      %p144 = scmp.ne.s32.totalorder %s127, %s143
      %p145 = scmp.eq.s32.totalorder %s16, 0
      %p146 = por %p144, %p145
      %p147 = scmp.le.s32.totalorder 1, %s10
      %p148 = scmp.lt.s32.totalorder %s10, 5
      %p149 = pnand %p147, %p148
      %p150 = pneg %p149
      // Predicated region
      $region9: #{gcn_g_forward.3} parent=5 // pred_check
        _
      $region10: #{gcn_g_forward.3} parent=5 // pred_check_branch
        %152 = sbr.rel (%p149) target = $region12
      $region11: #{gcn_g_forward.3} parent=5 // pred_region
        %s153 = ssub.s32 %s10, 1
        // Predicated region
        $region13: #{gcn_g_forward.3} parent=11 // pred_check
          %p154 = pneg %p71
        $region14: #{gcn_g_forward.3} parent=11 // pred_check_branch
          %156 = sbr.rel (%p154) target = $region16
        $region15: #{gcn_g_forward.3} parent=11 // pred_region
          _
        $region16: #{gcn_g_forward.3} parent=11 // pred_fallthru
          _
        // Predicated region
        $region17: #{gcn_g_forward.3} parent=11 // pred_check
          %p157 = pneg %p92
        $region18: #{gcn_g_forward.3} parent=11 // pred_check_branch
          %159 = sbr.rel (%p157) target = $region20
        $region19: #{gcn_g_forward.3} parent=11 // pred_region
          _
        $region20: #{gcn_g_forward.3} parent=11 // pred_fallthru
          _
        // Predicated region
        $region21: #{gcn_g_forward.3} parent=11 // pred_check
          %p160 = pneg %p113
        $region22: #{gcn_g_forward.3} parent=11 // pred_check_branch
          %162 = sbr.rel (%p160) target = $region24
        $region23: #{gcn_g_forward.3} parent=11 // pred_region
          _
        $region24: #{gcn_g_forward.3} parent=11 // pred_fallthru
          _
      $region12: #{gcn_g_forward.3} parent=5 // pred_fallthru
        _
      %p163 = scmp.lt.s32.totalorder %s10, 4
      // Predicated region
      $region25: #{gcn_g_forward.3} parent=5 // pred_check
        %p164 = pneg %p163
      $region26: #{gcn_g_forward.3} parent=5 // pred_check_branch
        %166 = sbr.rel (%p164) target = $region28
      $region27: #{gcn_g_forward.3} parent=5 // pred_region
        // Predicated region
        $region29: #{gcn_g_forward.3} parent=27 // pred_check
          %p167 = pneg %p44
        $region30: #{gcn_g_forward.3} parent=27 // pred_check_branch
          %169 = sbr.rel (%p167) target = $region32
        $region31: #{gcn_g_forward.3} parent=27 // pred_region
          %s170 = sand.u32 %s34, 1
          %s171 = sand.u32 %s34, 1
          %s172 = smul.addr %s171, 1024
          %s173 = scalar_lea.vmem [#allocation3], %s172
          %s174 = smul.u32 64, %s17
          %s175 = smul.u32 4, %s18
          %s176 = smul.addr %s174, 8
          %s177 = sadd.s32 %s175, %s176
          %s178 = smul.addr %s177, 4
          %s179 = scalar_lea.vmem %s0, %s178
          // Predicated region
          $region33: #{gcn_g_forward.3} parent=31 // pred_check
            _
          $region34: #{gcn_g_forward.3} parent=31 // pred_check_branch
            %181 = sbr.rel (0) target = $region36
          $region35: #{gcn_g_forward.3} parent=31 // pred_region
            // Predicated region
            $region37: #{gcn_g_forward.3} parent=35 // pred_check
              _
            $region38: #{gcn_g_forward.3} parent=35 // pred_check_branch
              %183 = sbr.rel (0) target = $region40
            $region39: #{gcn_g_forward.3} parent=35 // pred_region
              loop: start=0, step=1, limit=1
              $region41: #{gcn_g_forward.3} parent=39 // loop_pre_header
                _
              $region42: #{gcn_g_forward.3} parent=39 // loop_header
                %s185 = sphi 0, %s189
                %p186 = scmp.ge.s32.totalorder %s185, 1
                %s190 = sphi %s179, %s179
                %s191 = sphi %s173, %s173
              $region43: #{gcn_g_forward.3} parent=39 // loop_header_branch
                %188 = sbr.rel (%p186) target = $region47
              $region44: #{gcn_g_forward.3} parent=39 // loop_body
                %v192 = vld [vmem:[%s190] sm:$0xff]
                %193 = vst [vmem:[%s191] sm:$0xff] %v192
                %v194 = vld [vmem:[%s190 + $0x8] sm:$0xff]
                %195 = vst [vmem:[%s191 + $0x8] sm:$0xff] %v194
                %v196 = vld [vmem:[%s190 + $0x20] sm:$0xff]
                %197 = vst [vmem:[%s191 + $0x10] sm:$0xff] %v196
                %v198 = vld [vmem:[%s190 + $0x28] sm:$0xff]
                %199 = vst [vmem:[%s191 + $0x18] sm:$0xff] %v198
                %v200 = vld [vmem:[%s190 + $0x40] sm:$0xff]
                %201 = vst [vmem:[%s191 + $0x20] sm:$0xff] %v200
                %v202 = vld [vmem:[%s190 + $0x48] sm:$0xff]
                %203 = vst [vmem:[%s191 + $0x28] sm:$0xff] %v202
                %v204 = vld [vmem:[%s190 + $0x60] sm:$0xff]
                %205 = vst [vmem:[%s191 + $0x30] sm:$0xff] %v204
                %v206 = vld [vmem:[%s190 + $0x68] sm:$0xff]
                %207 = vst [vmem:[%s191 + $0x38] sm:$0xff] %v206
                %v208 = vld [vmem:[%s190 + $0x80] sm:$0xff]
                %209 = vst [vmem:[%s191 + $0x40] sm:$0xff] %v208
                %v210 = vld [vmem:[%s190 + $0x88] sm:$0xff]
                %211 = vst [vmem:[%s191 + $0x48] sm:$0xff] %v210
                %v212 = vld [vmem:[%s190 + $0xa0] sm:$0xff]
                %213 = vst [vmem:[%s191 + $0x50] sm:$0xff] %v212
                %v214 = vld [vmem:[%s190 + $0xa8] sm:$0xff]
                %215 = vst [vmem:[%s191 + $0x58] sm:$0xff] %v214
                %v216 = vld [vmem:[%s190 + $0xc0] sm:$0xff]
                %217 = vst [vmem:[%s191 + $0x60] sm:$0xff] %v216
                %v218 = vld [vmem:[%s190 + $0xc8] sm:$0xff]
                %219 = vst [vmem:[%s191 + $0x68] sm:$0xff] %v218
                %v220 = vld [vmem:[%s190 + $0xe0] sm:$0xff]
                %221 = vst [vmem:[%s191 + $0x70] sm:$0xff] %v220
                %v222 = vld [vmem:[%s190 + $0xe8] sm:$0xff]
                %223 = vst [vmem:[%s191 + $0x78] sm:$0xff] %v222
                %v224 = vld [vmem:[%s190 + $0x100] sm:$0xff]
                %225 = vst [vmem:[%s191 + $0x80] sm:$0xff] %v224
                %v226 = vld [vmem:[%s190 + $0x108] sm:$0xff]
                %227 = vst [vmem:[%s191 + $0x88] sm:$0xff] %v226
                %v228 = vld [vmem:[%s190 + $0x120] sm:$0xff]
                %229 = vst [vmem:[%s191 + $0x90] sm:$0xff] %v228
                %v230 = vld [vmem:[%s190 + $0x128] sm:$0xff]
                %231 = vst [vmem:[%s191 + $0x98] sm:$0xff] %v230
                %v232 = vld [vmem:[%s190 + $0x140] sm:$0xff]
                %233 = vst [vmem:[%s191 + $0xa0] sm:$0xff] %v232
                %v234 = vld [vmem:[%s190 + $0x148] sm:$0xff]
                %235 = vst [vmem:[%s191 + $0xa8] sm:$0xff] %v234
                %v236 = vld [vmem:[%s190 + $0x160] sm:$0xff]
                %237 = vst [vmem:[%s191 + $0xb0] sm:$0xff] %v236
                %v238 = vld [vmem:[%s190 + $0x168] sm:$0xff]
                %239 = vst [vmem:[%s191 + $0xb8] sm:$0xff] %v238
                %v240 = vld [vmem:[%s190 + $0x180] sm:$0xff]
                %241 = vst [vmem:[%s191 + $0xc0] sm:$0xff] %v240
                %v242 = vld [vmem:[%s190 + $0x188] sm:$0xff]
                %243 = vst [vmem:[%s191 + $0xc8] sm:$0xff] %v242
                %v244 = vld [vmem:[%s190 + $0x1a0] sm:$0xff]
                %245 = vst [vmem:[%s191 + $0xd0] sm:$0xff] %v244
                %v246 = vld [vmem:[%s190 + $0x1a8] sm:$0xff]
                %247 = vst [vmem:[%s191 + $0xd8] sm:$0xff] %v246
                %v248 = vld [vmem:[%s190 + $0x1c0] sm:$0xff]
                %249 = vst [vmem:[%s191 + $0xe0] sm:$0xff] %v248
                %v250 = vld [vmem:[%s190 + $0x1c8] sm:$0xff]
                %251 = vst [vmem:[%s191 + $0xe8] sm:$0xff] %v250
                %v252 = vld [vmem:[%s190 + $0x1e0] sm:$0xff]
                %253 = vst [vmem:[%s191 + $0xf0] sm:$0xff] %v252
                %v254 = vld [vmem:[%s190 + $0x1e8] sm:$0xff]
                %255 = vst [vmem:[%s191 + $0xf8] sm:$0xff] %v254
                %v256 = vld [vmem:[%s190 + $0x200] sm:$0xff]
                %257 = vst [vmem:[%s191 + $0x100] sm:$0xff] %v256
                %v258 = vld [vmem:[%s190 + $0x208] sm:$0xff]
                %259 = vst [vmem:[%s191 + $0x108] sm:$0xff] %v258
                %v260 = vld [vmem:[%s190 + $0x220] sm:$0xff]
                %261 = vst [vmem:[%s191 + $0x110] sm:$0xff] %v260
                %v262 = vld [vmem:[%s190 + $0x228] sm:$0xff]
                %263 = vst [vmem:[%s191 + $0x118] sm:$0xff] %v262
                %v264 = vld [vmem:[%s190 + $0x240] sm:$0xff]
                %265 = vst [vmem:[%s191 + $0x120] sm:$0xff] %v264
                %v266 = vld [vmem:[%s190 + $0x248] sm:$0xff]
                %267 = vst [vmem:[%s191 + $0x128] sm:$0xff] %v266
                %v268 = vld [vmem:[%s190 + $0x260] sm:$0xff]
                %269 = vst [vmem:[%s191 + $0x130] sm:$0xff] %v268
                %v270 = vld [vmem:[%s190 + $0x268] sm:$0xff]
                %271 = vst [vmem:[%s191 + $0x138] sm:$0xff] %v270
                %v272 = vld [vmem:[%s190 + $0x280] sm:$0xff]
                %273 = vst [vmem:[%s191 + $0x140] sm:$0xff] %v272
                %v274 = vld [vmem:[%s190 + $0x288] sm:$0xff]
                %275 = vst [vmem:[%s191 + $0x148] sm:$0xff] %v274
                %v276 = vld [vmem:[%s190 + $0x2a0] sm:$0xff]
                %277 = vst [vmem:[%s191 + $0x150] sm:$0xff] %v276
                %v278 = vld [vmem:[%s190 + $0x2a8] sm:$0xff]
                %279 = vst [vmem:[%s191 + $0x158] sm:$0xff] %v278
                %v280 = vld [vmem:[%s190 + $0x2c0] sm:$0xff]
                %281 = vst [vmem:[%s191 + $0x160] sm:$0xff] %v280
                %v282 = vld [vmem:[%s190 + $0x2c8] sm:$0xff]
                %283 = vst [vmem:[%s191 + $0x168] sm:$0xff] %v282
                %v284 = vld [vmem:[%s190 + $0x2e0] sm:$0xff]
                %285 = vst [vmem:[%s191 + $0x170] sm:$0xff] %v284
                %v286 = vld [vmem:[%s190 + $0x2e8] sm:$0xff]
                %287 = vst [vmem:[%s191 + $0x178] sm:$0xff] %v286
                %v288 = vld [vmem:[%s190 + $0x300] sm:$0xff]
                %289 = vst [vmem:[%s191 + $0x180] sm:$0xff] %v288
                %v290 = vld [vmem:[%s190 + $0x308] sm:$0xff]
                %291 = vst [vmem:[%s191 + $0x188] sm:$0xff] %v290
                %v292 = vld [vmem:[%s190 + $0x320] sm:$0xff]
                %293 = vst [vmem:[%s191 + $0x190] sm:$0xff] %v292
                %v294 = vld [vmem:[%s190 + $0x328] sm:$0xff]
                %295 = vst [vmem:[%s191 + $0x198] sm:$0xff] %v294
                %v296 = vld [vmem:[%s190 + $0x340] sm:$0xff]
                %297 = vst [vmem:[%s191 + $0x1a0] sm:$0xff] %v296
                %v298 = vld [vmem:[%s190 + $0x348] sm:$0xff]
                %299 = vst [vmem:[%s191 + $0x1a8] sm:$0xff] %v298
                %v300 = vld [vmem:[%s190 + $0x360] sm:$0xff]
                %301 = vst [vmem:[%s191 + $0x1b0] sm:$0xff] %v300
                %v302 = vld [vmem:[%s190 + $0x368] sm:$0xff]
                %303 = vst [vmem:[%s191 + $0x1b8] sm:$0xff] %v302
                %v304 = vld [vmem:[%s190 + $0x380] sm:$0xff]
                %305 = vst [vmem:[%s191 + $0x1c0] sm:$0xff] %v304
                %v306 = vld [vmem:[%s190 + $0x388] sm:$0xff]
                %307 = vst [vmem:[%s191 + $0x1c8] sm:$0xff] %v306
                %v308 = vld [vmem:[%s190 + $0x3a0] sm:$0xff]
                %309 = vst [vmem:[%s191 + $0x1d0] sm:$0xff] %v308
                %v310 = vld [vmem:[%s190 + $0x3a8] sm:$0xff]
                %311 = vst [vmem:[%s191 + $0x1d8] sm:$0xff] %v310
                %v312 = vld [vmem:[%s190 + $0x3c0] sm:$0xff]
                %313 = vst [vmem:[%s191 + $0x1e0] sm:$0xff] %v312
                %v314 = vld [vmem:[%s190 + $0x3c8] sm:$0xff]
                %315 = vst [vmem:[%s191 + $0x1e8] sm:$0xff] %v314
                %v316 = vld [vmem:[%s190 + $0x3e0] sm:$0xff]
                %317 = vst [vmem:[%s191 + $0x1f0] sm:$0xff] %v316
                %v318 = vld [vmem:[%s190 + $0x3e8] sm:$0xff]
                %319 = vst [vmem:[%s191 + $0x1f8] sm:$0xff] %v318
                %v320 = vld [vmem:[%s190 + $0x400] sm:$0xff]
                %321 = vst [vmem:[%s191 + $0x200] sm:$0xff] %v320
                %v322 = vld [vmem:[%s190 + $0x408] sm:$0xff]
                %323 = vst [vmem:[%s191 + $0x208] sm:$0xff] %v322
                %v324 = vld [vmem:[%s190 + $0x420] sm:$0xff]
                %325 = vst [vmem:[%s191 + $0x210] sm:$0xff] %v324
                %v326 = vld [vmem:[%s190 + $0x428] sm:$0xff]
                %327 = vst [vmem:[%s191 + $0x218] sm:$0xff] %v326
                %v328 = vld [vmem:[%s190 + $0x440] sm:$0xff]
                %329 = vst [vmem:[%s191 + $0x220] sm:$0xff] %v328
                %v330 = vld [vmem:[%s190 + $0x448] sm:$0xff]
                %331 = vst [vmem:[%s191 + $0x228] sm:$0xff] %v330
                %v332 = vld [vmem:[%s190 + $0x460] sm:$0xff]
                %333 = vst [vmem:[%s191 + $0x230] sm:$0xff] %v332
                %v334 = vld [vmem:[%s190 + $0x468] sm:$0xff]
                %335 = vst [vmem:[%s191 + $0x238] sm:$0xff] %v334
                %v336 = vld [vmem:[%s190 + $0x480] sm:$0xff]
                %337 = vst [vmem:[%s191 + $0x240] sm:$0xff] %v336
                %v338 = vld [vmem:[%s190 + $0x488] sm:$0xff]
                %339 = vst [vmem:[%s191 + $0x248] sm:$0xff] %v338
                %v340 = vld [vmem:[%s190 + $0x4a0] sm:$0xff]
                %341 = vst [vmem:[%s191 + $0x250] sm:$0xff] %v340
                %v342 = vld [vmem:[%s190 + $0x4a8] sm:$0xff]
                %343 = vst [vmem:[%s191 + $0x258] sm:$0xff] %v342
                %v344 = vld [vmem:[%s190 + $0x4c0] sm:$0xff]
                %345 = vst [vmem:[%s191 + $0x260] sm:$0xff] %v344
                %v346 = vld [vmem:[%s190 + $0x4c8] sm:$0xff]
                %347 = vst [vmem:[%s191 + $0x268] sm:$0xff] %v346
                %v348 = vld [vmem:[%s190 + $0x4e0] sm:$0xff]
                %349 = vst [vmem:[%s191 + $0x270] sm:$0xff] %v348
                %v350 = vld [vmem:[%s190 + $0x4e8] sm:$0xff]
                %351 = vst [vmem:[%s191 + $0x278] sm:$0xff] %v350
                %v352 = vld [vmem:[%s190 + $0x500] sm:$0xff]
                %353 = vst [vmem:[%s191 + $0x280] sm:$0xff] %v352
                %v354 = vld [vmem:[%s190 + $0x508] sm:$0xff]
                %355 = vst [vmem:[%s191 + $0x288] sm:$0xff] %v354
                %v356 = vld [vmem:[%s190 + $0x520] sm:$0xff]
                %357 = vst [vmem:[%s191 + $0x290] sm:$0xff] %v356
                %v358 = vld [vmem:[%s190 + $0x528] sm:$0xff]
                %359 = vst [vmem:[%s191 + $0x298] sm:$0xff] %v358
                %v360 = vld [vmem:[%s190 + $0x540] sm:$0xff]
                %361 = vst [vmem:[%s191 + $0x2a0] sm:$0xff] %v360
                %v362 = vld [vmem:[%s190 + $0x548] sm:$0xff]
                %363 = vst [vmem:[%s191 + $0x2a8] sm:$0xff] %v362
                %v364 = vld [vmem:[%s190 + $0x560] sm:$0xff]
                %365 = vst [vmem:[%s191 + $0x2b0] sm:$0xff] %v364
                %v366 = vld [vmem:[%s190 + $0x568] sm:$0xff]
                %367 = vst [vmem:[%s191 + $0x2b8] sm:$0xff] %v366
                %v368 = vld [vmem:[%s190 + $0x580] sm:$0xff]
                %369 = vst [vmem:[%s191 + $0x2c0] sm:$0xff] %v368
                %v370 = vld [vmem:[%s190 + $0x588] sm:$0xff]
                %371 = vst [vmem:[%s191 + $0x2c8] sm:$0xff] %v370
                %v372 = vld [vmem:[%s190 + $0x5a0] sm:$0xff]
                %373 = vst [vmem:[%s191 + $0x2d0] sm:$0xff] %v372
                %v374 = vld [vmem:[%s190 + $0x5a8] sm:$0xff]
                %375 = vst [vmem:[%s191 + $0x2d8] sm:$0xff] %v374
                %v376 = vld [vmem:[%s190 + $0x5c0] sm:$0xff]
                %377 = vst [vmem:[%s191 + $0x2e0] sm:$0xff] %v376
                %v378 = vld [vmem:[%s190 + $0x5c8] sm:$0xff]
                %379 = vst [vmem:[%s191 + $0x2e8] sm:$0xff] %v378
                %v380 = vld [vmem:[%s190 + $0x5e0] sm:$0xff]
                %381 = vst [vmem:[%s191 + $0x2f0] sm:$0xff] %v380
                %v382 = vld [vmem:[%s190 + $0x5e8] sm:$0xff]
                %383 = vst [vmem:[%s191 + $0x2f8] sm:$0xff] %v382
                %v384 = vld [vmem:[%s190 + $0x600] sm:$0xff]
                %385 = vst [vmem:[%s191 + $0x300] sm:$0xff] %v384
                %v386 = vld [vmem:[%s190 + $0x608] sm:$0xff]
                %387 = vst [vmem:[%s191 + $0x308] sm:$0xff] %v386
                %v388 = vld [vmem:[%s190 + $0x620] sm:$0xff]
                %389 = vst [vmem:[%s191 + $0x310] sm:$0xff] %v388
                %v390 = vld [vmem:[%s190 + $0x628] sm:$0xff]
                %391 = vst [vmem:[%s191 + $0x318] sm:$0xff] %v390
                %v392 = vld [vmem:[%s190 + $0x640] sm:$0xff]
                %393 = vst [vmem:[%s191 + $0x320] sm:$0xff] %v392
                %v394 = vld [vmem:[%s190 + $0x648] sm:$0xff]
                %395 = vst [vmem:[%s191 + $0x328] sm:$0xff] %v394
                %v396 = vld [vmem:[%s190 + $0x660] sm:$0xff]
                %397 = vst [vmem:[%s191 + $0x330] sm:$0xff] %v396
                %v398 = vld [vmem:[%s190 + $0x668] sm:$0xff]
                %399 = vst [vmem:[%s191 + $0x338] sm:$0xff] %v398
                %v400 = vld [vmem:[%s190 + $0x680] sm:$0xff]
                %401 = vst [vmem:[%s191 + $0x340] sm:$0xff] %v400
                %v402 = vld [vmem:[%s190 + $0x688] sm:$0xff]
                %403 = vst [vmem:[%s191 + $0x348] sm:$0xff] %v402
                %v404 = vld [vmem:[%s190 + $0x6a0] sm:$0xff]
                %405 = vst [vmem:[%s191 + $0x350] sm:$0xff] %v404
                %v406 = vld [vmem:[%s190 + $0x6a8] sm:$0xff]
                %407 = vst [vmem:[%s191 + $0x358] sm:$0xff] %v406
                %v408 = vld [vmem:[%s190 + $0x6c0] sm:$0xff]
                %409 = vst [vmem:[%s191 + $0x360] sm:$0xff] %v408
                %v410 = vld [vmem:[%s190 + $0x6c8] sm:$0xff]
                %411 = vst [vmem:[%s191 + $0x368] sm:$0xff] %v410
                %v412 = vld [vmem:[%s190 + $0x6e0] sm:$0xff]
                %413 = vst [vmem:[%s191 + $0x370] sm:$0xff] %v412
                %v414 = vld [vmem:[%s190 + $0x6e8] sm:$0xff]
                %415 = vst [vmem:[%s191 + $0x378] sm:$0xff] %v414
                %v416 = vld [vmem:[%s190 + $0x700] sm:$0xff]
                %417 = vst [vmem:[%s191 + $0x380] sm:$0xff] %v416
                %v418 = vld [vmem:[%s190 + $0x708] sm:$0xff]
                %419 = vst [vmem:[%s191 + $0x388] sm:$0xff] %v418
                %v420 = vld [vmem:[%s190 + $0x720] sm:$0xff]
                %421 = vst [vmem:[%s191 + $0x390] sm:$0xff] %v420
                %v422 = vld [vmem:[%s190 + $0x728] sm:$0xff]
                %423 = vst [vmem:[%s191 + $0x398] sm:$0xff] %v422
                %v424 = vld [vmem:[%s190 + $0x740] sm:$0xff]
                %425 = vst [vmem:[%s191 + $0x3a0] sm:$0xff] %v424
                %v426 = vld [vmem:[%s190 + $0x748] sm:$0xff]
                %427 = vst [vmem:[%s191 + $0x3a8] sm:$0xff] %v426
                %v428 = vld [vmem:[%s190 + $0x760] sm:$0xff]
                %429 = vst [vmem:[%s191 + $0x3b0] sm:$0xff] %v428
                %v430 = vld [vmem:[%s190 + $0x768] sm:$0xff]
                %431 = vst [vmem:[%s191 + $0x3b8] sm:$0xff] %v430
                %v432 = vld [vmem:[%s190 + $0x780] sm:$0xff]
                %433 = vst [vmem:[%s191 + $0x3c0] sm:$0xff] %v432
                %v434 = vld [vmem:[%s190 + $0x788] sm:$0xff]
                %435 = vst [vmem:[%s191 + $0x3c8] sm:$0xff] %v434
                %v436 = vld [vmem:[%s190 + $0x7a0] sm:$0xff]
                %437 = vst [vmem:[%s191 + $0x3d0] sm:$0xff] %v436
                %v438 = vld [vmem:[%s190 + $0x7a8] sm:$0xff]
                %439 = vst [vmem:[%s191 + $0x3d8] sm:$0xff] %v438
                %v440 = vld [vmem:[%s190 + $0x7c0] sm:$0xff]
                %441 = vst [vmem:[%s191 + $0x3e0] sm:$0xff] %v440
                %v442 = vld [vmem:[%s190 + $0x7c8] sm:$0xff]
                %443 = vst [vmem:[%s191 + $0x3e8] sm:$0xff] %v442
                %v444 = vld [vmem:[%s190 + $0x7e0] sm:$0xff]
                %445 = vst [vmem:[%s191 + $0x3f0] sm:$0xff] %v444
                %v446 = vld [vmem:[%s190 + $0x7e8] sm:$0xff]
                %447 = vst [vmem:[%s191 + $0x3f8] sm:$0xff] %v446
              $region45: #{gcn_g_forward.3} parent=39 // loop_footer
                %s189 = sadd.s32 1, %s185
              $region46: #{gcn_g_forward.3} parent=39 // loop_footer_branch
                %184 = sbr.rel target = $region42
              $region47: #{gcn_g_forward.3} parent=39 // loop_exit
                _
            $region40: #{gcn_g_forward.3} parent=35 // pred_fallthru
              _
            // Predicated region
            $region48: #{gcn_g_forward.3} parent=35 // pred_check
              _
            $region49: #{gcn_g_forward.3} parent=35 // pred_check_branch
              %449 = sbr.rel target = $region51
            $region50: #{gcn_g_forward.3} parent=35 // pred_region
              _
            $region51: #{gcn_g_forward.3} parent=35 // pred_fallthru
              _
          $region36: #{gcn_g_forward.3} parent=31 // pred_fallthru
            _
          %450 = vnop
        $region32: #{gcn_g_forward.3} parent=27 // pred_fallthru
          _
      $region28: #{gcn_g_forward.3} parent=5 // pred_fallthru
        _
      %p451 = scmp.le.s32.totalorder 1, %s10
      %p452 = scmp.lt.s32.totalorder %s10, 5
      %p453 = pnand %p451, %p452
      %p454 = pneg %p453
      // Predicated region
      $region52: #{gcn_g_forward.3} parent=5 // pred_check
        _
      $region53: #{gcn_g_forward.3} parent=5 // pred_check_branch
        %456 = sbr.rel (%p453) target = $region55
      $region54: #{gcn_g_forward.3} parent=5 // pred_region
        %s457 = ssub.s32 %s10, 1
        %s458 = sand.u32 %s37, 1
        %s459 = sand.u32 %s37, 1
        %s460 = smul.addr %s459, 1024
        %s461 = scalar_lea.vmem [#allocation3], %s460
        // Predicated region
        $region56: #{gcn_g_forward.3} parent=54 // pred_check
          %p462 = pneg %p50
        $region57: #{gcn_g_forward.3} parent=54 // pred_check_branch
          %464 = sbr.rel (%p462) target = $region59
        $region58: #{gcn_g_forward.3} parent=54 // pred_region
          _
        $region59: #{gcn_g_forward.3} parent=54 // pred_fallthru
          _
        %s465 = sand.u32 %s37, 1
        %s466 = sand.u32 %s37, 1
        %s467 = smul.addr %s466, 1024
        %s468 = scalar_lea.vmem [#allocation3], %s467
        %p469 = pneg %p50
        %p470 = pneg %p47
        %p471 = pneg %p71
        %p472 = pneg %p68
        %p473 = pneg %p92
        %p474 = pneg %p89
        %p475 = pneg %p113
        %p476 = pneg %p110
        %p477 = pneg %p139
        %p478 = pneg %p136
        %s479 = smul.u32 64, %s19
        %p480 = scmp.lt.s32.totalorder %s479, 127
        %s481 = scalar_select %p480, %s479, 127
        %s482 = smul.addr %s481, 4
        %s483 = scalar_lea.vmem %s4, %s482
        %s484 = smul.u32 64, %s19
        %s485 = smul.u32 4, %s20
        %s486 = smul.u32 64, %s19
        %p487 = scmp.lt.s32.totalorder %s486, 127
        %s488 = scalar_select %p487, %s486, 127
        %s489 = smul.addr %s488, 4
        %s490 = scalar_lea.vmem %s4, %s489
        %s491 = smul.u32 64, %s19
        %p493 = scmp.eq.s32.totalorder %s20, 0
        // Predicated region
        $region60: #{gcn_g_forward.3} parent=54 // pred_check
          %p494 = pneg %p493
        $region61: #{gcn_g_forward.3} parent=54 // pred_check_branch
          %496 = sbr.rel (%p494) target = $region63
        $region62: #{gcn_g_forward.3} parent=54 // pred_region
          %497 = vst [vmem:[#allocation2] sm:$0xff] 0.0
          %498 = vst [vmem:[#allocation2 + $0x8] sm:$0xff] 0.0
          %499 = vst [vmem:[#allocation2 + $0x10] sm:$0xff] 0.0
          %500 = vst [vmem:[#allocation2 + $0x18] sm:$0xff] 0.0
          %501 = vst [vmem:[#allocation2 + $0x20] sm:$0xff] 0.0
          %502 = vst [vmem:[#allocation2 + $0x28] sm:$0xff] 0.0
          %503 = vst [vmem:[#allocation2 + $0x30] sm:$0xff] 0.0
          %504 = vst [vmem:[#allocation2 + $0x38] sm:$0xff] 0.0
          %505 = vst [vmem:[#allocation2 + $0x40] sm:$0xff] 0.0
          %506 = vst [vmem:[#allocation2 + $0x48] sm:$0xff] 0.0
          %507 = vst [vmem:[#allocation2 + $0x50] sm:$0xff] 0.0
          %508 = vst [vmem:[#allocation2 + $0x58] sm:$0xff] 0.0
          %509 = vst [vmem:[#allocation2 + $0x60] sm:$0xff] 0.0
          %510 = vst [vmem:[#allocation2 + $0x68] sm:$0xff] 0.0
          %511 = vst [vmem:[#allocation2 + $0x70] sm:$0xff] 0.0
          %512 = vst [vmem:[#allocation2 + $0x78] sm:$0xff] 0.0
          %513 = vst [vmem:[#allocation2 + $0x80] sm:$0xff] 0.0
          %514 = vst [vmem:[#allocation2 + $0x88] sm:$0xff] 0.0
          %515 = vst [vmem:[#allocation2 + $0x90] sm:$0xff] 0.0
          %516 = vst [vmem:[#allocation2 + $0x98] sm:$0xff] 0.0
          %517 = vst [vmem:[#allocation2 + $0xa0] sm:$0xff] 0.0
          %518 = vst [vmem:[#allocation2 + $0xa8] sm:$0xff] 0.0
          %519 = vst [vmem:[#allocation2 + $0xb0] sm:$0xff] 0.0
          %520 = vst [vmem:[#allocation2 + $0xb8] sm:$0xff] 0.0
          %521 = vst [vmem:[#allocation2 + $0xc0] sm:$0xff] 0.0
          %522 = vst [vmem:[#allocation2 + $0xc8] sm:$0xff] 0.0
          %523 = vst [vmem:[#allocation2 + $0xd0] sm:$0xff] 0.0
          %524 = vst [vmem:[#allocation2 + $0xd8] sm:$0xff] 0.0
          %525 = vst [vmem:[#allocation2 + $0xe0] sm:$0xff] 0.0
          %526 = vst [vmem:[#allocation2 + $0xe8] sm:$0xff] 0.0
          %527 = vst [vmem:[#allocation2 + $0xf0] sm:$0xff] 0.0
          %528 = vst [vmem:[#allocation2 + $0xf8] sm:$0xff] 0.0
          %529 = vst [vmem:[#allocation2 + $0x100] sm:$0xff] 0.0
          %530 = vst [vmem:[#allocation2 + $0x108] sm:$0xff] 0.0
          %531 = vst [vmem:[#allocation2 + $0x110] sm:$0xff] 0.0
          %532 = vst [vmem:[#allocation2 + $0x118] sm:$0xff] 0.0
          %533 = vst [vmem:[#allocation2 + $0x120] sm:$0xff] 0.0
          %534 = vst [vmem:[#allocation2 + $0x128] sm:$0xff] 0.0
          %535 = vst [vmem:[#allocation2 + $0x130] sm:$0xff] 0.0
          %536 = vst [vmem:[#allocation2 + $0x138] sm:$0xff] 0.0
          %537 = vst [vmem:[#allocation2 + $0x140] sm:$0xff] 0.0
          %538 = vst [vmem:[#allocation2 + $0x148] sm:$0xff] 0.0
          %539 = vst [vmem:[#allocation2 + $0x150] sm:$0xff] 0.0
          %540 = vst [vmem:[#allocation2 + $0x158] sm:$0xff] 0.0
          %541 = vst [vmem:[#allocation2 + $0x160] sm:$0xff] 0.0
          %542 = vst [vmem:[#allocation2 + $0x168] sm:$0xff] 0.0
          %543 = vst [vmem:[#allocation2 + $0x170] sm:$0xff] 0.0
          %544 = vst [vmem:[#allocation2 + $0x178] sm:$0xff] 0.0
          %545 = vst [vmem:[#allocation2 + $0x180] sm:$0xff] 0.0
          %546 = vst [vmem:[#allocation2 + $0x188] sm:$0xff] 0.0
          %547 = vst [vmem:[#allocation2 + $0x190] sm:$0xff] 0.0
          %548 = vst [vmem:[#allocation2 + $0x198] sm:$0xff] 0.0
          %549 = vst [vmem:[#allocation2 + $0x1a0] sm:$0xff] 0.0
          %550 = vst [vmem:[#allocation2 + $0x1a8] sm:$0xff] 0.0
          %551 = vst [vmem:[#allocation2 + $0x1b0] sm:$0xff] 0.0
          %552 = vst [vmem:[#allocation2 + $0x1b8] sm:$0xff] 0.0
          %553 = vst [vmem:[#allocation2 + $0x1c0] sm:$0xff] 0.0
          %554 = vst [vmem:[#allocation2 + $0x1c8] sm:$0xff] 0.0
          %555 = vst [vmem:[#allocation2 + $0x1d0] sm:$0xff] 0.0
          %556 = vst [vmem:[#allocation2 + $0x1d8] sm:$0xff] 0.0
          %557 = vst [vmem:[#allocation2 + $0x1e0] sm:$0xff] 0.0
          %558 = vst [vmem:[#allocation2 + $0x1e8] sm:$0xff] 0.0
          %559 = vst [vmem:[#allocation2 + $0x1f0] sm:$0xff] 0.0
          %560 = vst [vmem:[#allocation2 + $0x1f8] sm:$0xff] 0.0
        $region63: #{gcn_g_forward.3} parent=54 // pred_fallthru
          _
        %s561 = smul.u32 %s20, 512
        %s562 = sshra.s32 %s561, 3
        %s563 = sand.u32 %s561, 7
        %s564 = smul.addr %s562, 4
        %s565 = scalar_lea.vmem %s1, %s564
        %v566 = vld [vmem:[%s565] sm:$0xf]
        %v567 = vld [vmem:[%s565 + $0x4] sm:$0xf]
        %v568 = vld [vmem:[%s565 + $0x8] sm:$0xf]
        %v569 = vld [vmem:[%s565 + $0xc] sm:$0xf]
        %v570 = vld [vmem:[%s565 + $0x10] sm:$0xf]
        %v571 = vld [vmem:[%s565 + $0x14] sm:$0xf]
        %v572 = vld [vmem:[%s565 + $0x18] sm:$0xf]
        %v573 = vld [vmem:[%s565 + $0x1c] sm:$0xf]
        %v574 = vld [vmem:[%s565 + $0x20] sm:$0xf]
        %v575 = vld [vmem:[%s565 + $0x24] sm:$0xf]
        %v576 = vld [vmem:[%s565 + $0x28] sm:$0xf]
        %v577 = vld [vmem:[%s565 + $0x2c] sm:$0xf]
        %v578 = vld [vmem:[%s565 + $0x30] sm:$0xf]
        %v579 = vld [vmem:[%s565 + $0x34] sm:$0xf]
        %v580 = vld [vmem:[%s565 + $0x38] sm:$0xf]
        %v581 = vld [vmem:[%s565 + $0x3c] sm:$0xf]
        %v582 = vld [vmem:[%s565 + $0x40] sm:$0xf]
        %v583 = vld [vmem:[%s565 + $0x44] sm:$0xf]
        %v584 = vld [vmem:[%s565 + $0x48] sm:$0xf]
        %v585 = vld [vmem:[%s565 + $0x4c] sm:$0xf]
        %v586 = vld [vmem:[%s565 + $0x50] sm:$0xf]
        %v587 = vld [vmem:[%s565 + $0x54] sm:$0xf]
        %v588 = vld [vmem:[%s565 + $0x58] sm:$0xf]
        %v589 = vld [vmem:[%s565 + $0x5c] sm:$0xf]
        %v590 = vld [vmem:[%s565 + $0x60] sm:$0xf]
        %v591 = vld [vmem:[%s565 + $0x64] sm:$0xf]
        %v592 = vld [vmem:[%s565 + $0x68] sm:$0xf]
        %v593 = vld [vmem:[%s565 + $0x6c] sm:$0xf]
        %v594 = vld [vmem:[%s565 + $0x70] sm:$0xf]
        %v595 = vld [vmem:[%s565 + $0x74] sm:$0xf]
        %v596 = vld [vmem:[%s565 + $0x78] sm:$0xf]
        %v597 = vld [vmem:[%s565 + $0x7c] sm:$0xf]
        %v598 = vld [vmem:[%s565 + $0x80] sm:$0xf]
        %v599 = vld [vmem:[%s565 + $0x84] sm:$0xf]
        %v600 = vld [vmem:[%s565 + $0x88] sm:$0xf]
        %v601 = vld [vmem:[%s565 + $0x8c] sm:$0xf]
        %v602 = vld [vmem:[%s565 + $0x90] sm:$0xf]
        %v603 = vld [vmem:[%s565 + $0x94] sm:$0xf]
        %v604 = vld [vmem:[%s565 + $0x98] sm:$0xf]
        %v605 = vld [vmem:[%s565 + $0x9c] sm:$0xf]
        %v606 = vld [vmem:[%s565 + $0xa0] sm:$0xf]
        %v607 = vld [vmem:[%s565 + $0xa4] sm:$0xf]
        %v608 = vld [vmem:[%s565 + $0xa8] sm:$0xf]
        %v609 = vld [vmem:[%s565 + $0xac] sm:$0xf]
        %v610 = vld [vmem:[%s565 + $0xb0] sm:$0xf]
        %v611 = vld [vmem:[%s565 + $0xb4] sm:$0xf]
        %v612 = vld [vmem:[%s565 + $0xb8] sm:$0xf]
        %v613 = vld [vmem:[%s565 + $0xbc] sm:$0xf]
        %v614 = vld [vmem:[%s565 + $0xc0] sm:$0xf]
        %v615 = vld [vmem:[%s565 + $0xc4] sm:$0xf]
        %v616 = vld [vmem:[%s565 + $0xc8] sm:$0xf]
        %v617 = vld [vmem:[%s565 + $0xcc] sm:$0xf]
        %v618 = vld [vmem:[%s565 + $0xd0] sm:$0xf]
        %v619 = vld [vmem:[%s565 + $0xd4] sm:$0xf]
        %v620 = vld [vmem:[%s565 + $0xd8] sm:$0xf]
        %v621 = vld [vmem:[%s565 + $0xdc] sm:$0xf]
        %v622 = vld [vmem:[%s565 + $0xe0] sm:$0xf]
        %v623 = vld [vmem:[%s565 + $0xe4] sm:$0xf]
        %v624 = vld [vmem:[%s565 + $0xe8] sm:$0xf]
        %v625 = vld [vmem:[%s565 + $0xec] sm:$0xf]
        %v626 = vld [vmem:[%s565 + $0xf0] sm:$0xf]
        %v627 = vld [vmem:[%s565 + $0xf4] sm:$0xf]
        %v628 = vld [vmem:[%s565 + $0xf8] sm:$0xf]
        %v629 = vld [vmem:[%s565 + $0xfc] sm:$0xf]
        %v630 = vld [vmem:[#allocation2] sm:$0xff]
        %v631 = vld [vmem:[#allocation2 + $0x8] sm:$0xff]
        %v632 = vld [vmem:[#allocation2 + $0x10] sm:$0xff]
        %v633 = vld [vmem:[#allocation2 + $0x18] sm:$0xff]
        %v634 = vld [vmem:[#allocation2 + $0x20] sm:$0xff]
        %v635 = vld [vmem:[#allocation2 + $0x28] sm:$0xff]
        %v636 = vld [vmem:[#allocation2 + $0x30] sm:$0xff]
        %v637 = vld [vmem:[#allocation2 + $0x38] sm:$0xff]
        %v638 = vld [vmem:[#allocation2 + $0x40] sm:$0xff]
        %v639 = vld [vmem:[#allocation2 + $0x48] sm:$0xff]
        %v640 = vld [vmem:[#allocation2 + $0x50] sm:$0xff]
        %v641 = vld [vmem:[#allocation2 + $0x58] sm:$0xff]
        %v642 = vld [vmem:[#allocation2 + $0x60] sm:$0xff]
        %v643 = vld [vmem:[#allocation2 + $0x68] sm:$0xff]
        %v644 = vld [vmem:[#allocation2 + $0x70] sm:$0xff]
        %v645 = vld [vmem:[#allocation2 + $0x78] sm:$0xff]
        %v646 = vld [vmem:[#allocation2 + $0x80] sm:$0xff]
        %v647 = vld [vmem:[#allocation2 + $0x88] sm:$0xff]
        %v648 = vld [vmem:[#allocation2 + $0x90] sm:$0xff]
        %v649 = vld [vmem:[#allocation2 + $0x98] sm:$0xff]
        %v650 = vld [vmem:[#allocation2 + $0xa0] sm:$0xff]
        %v651 = vld [vmem:[#allocation2 + $0xa8] sm:$0xff]
        %v652 = vld [vmem:[#allocation2 + $0xb0] sm:$0xff]
        %v653 = vld [vmem:[#allocation2 + $0xb8] sm:$0xff]
        %v654 = vld [vmem:[#allocation2 + $0xc0] sm:$0xff]
        %v655 = vld [vmem:[#allocation2 + $0xc8] sm:$0xff]
        %v656 = vld [vmem:[#allocation2 + $0xd0] sm:$0xff]
        %v657 = vld [vmem:[#allocation2 + $0xd8] sm:$0xff]
        %v658 = vld [vmem:[#allocation2 + $0xe0] sm:$0xff]
        %v659 = vld [vmem:[#allocation2 + $0xe8] sm:$0xff]
        %v660 = vld [vmem:[#allocation2 + $0xf0] sm:$0xff]
        %v661 = vld [vmem:[#allocation2 + $0xf8] sm:$0xff]
        %v662 = vld [vmem:[#allocation2 + $0x100] sm:$0xff]
        %v663 = vld [vmem:[#allocation2 + $0x108] sm:$0xff]
        %v664 = vld [vmem:[#allocation2 + $0x110] sm:$0xff]
        %v665 = vld [vmem:[#allocation2 + $0x118] sm:$0xff]
        %v666 = vld [vmem:[#allocation2 + $0x120] sm:$0xff]
        %v667 = vld [vmem:[#allocation2 + $0x128] sm:$0xff]
        %v668 = vld [vmem:[#allocation2 + $0x130] sm:$0xff]
        %v669 = vld [vmem:[#allocation2 + $0x138] sm:$0xff]
        %v670 = vld [vmem:[#allocation2 + $0x140] sm:$0xff]
        %v671 = vld [vmem:[#allocation2 + $0x148] sm:$0xff]
        %v672 = vld [vmem:[#allocation2 + $0x150] sm:$0xff]
        %v673 = vld [vmem:[#allocation2 + $0x158] sm:$0xff]
        %v674 = vld [vmem:[#allocation2 + $0x160] sm:$0xff]
        %v675 = vld [vmem:[#allocation2 + $0x168] sm:$0xff]
        %v676 = vld [vmem:[#allocation2 + $0x170] sm:$0xff]
        %v677 = vld [vmem:[#allocation2 + $0x178] sm:$0xff]
        %v678 = vld [vmem:[#allocation2 + $0x180] sm:$0xff]
        %v679 = vld [vmem:[#allocation2 + $0x188] sm:$0xff]
        %v680 = vld [vmem:[#allocation2 + $0x190] sm:$0xff]
        %v681 = vld [vmem:[#allocation2 + $0x198] sm:$0xff]
        %v682 = vld [vmem:[#allocation2 + $0x1a0] sm:$0xff]
        %v683 = vld [vmem:[#allocation2 + $0x1a8] sm:$0xff]
        %v684 = vld [vmem:[#allocation2 + $0x1b0] sm:$0xff]
        %v685 = vld [vmem:[#allocation2 + $0x1b8] sm:$0xff]
        %v686 = vld [vmem:[#allocation2 + $0x1c0] sm:$0xff]
        %v687 = vld [vmem:[#allocation2 + $0x1c8] sm:$0xff]
        %v688 = vld [vmem:[#allocation2 + $0x1d0] sm:$0xff]
        %v689 = vld [vmem:[#allocation2 + $0x1d8] sm:$0xff]
        %v690 = vld [vmem:[#allocation2 + $0x1e0] sm:$0xff]
        %v691 = vld [vmem:[#allocation2 + $0x1e8] sm:$0xff]
        %v692 = vld [vmem:[#allocation2 + $0x1f0] sm:$0xff]
        %v693 = vld [vmem:[#allocation2 + $0x1f8] sm:$0xff]
        %v694 = vld [vmem:[%s461] sm:$0xff]
        %v695 = vld [vmem:[%s461 + $0x8] sm:$0xff]
        %v696 = vld [vmem:[%s461 + $0x10] sm:$0xff]
        %v697 = vld [vmem:[%s461 + $0x18] sm:$0xff]
        %v698 = vld [vmem:[%s461 + $0x20] sm:$0xff]
        %v699 = vld [vmem:[%s461 + $0x28] sm:$0xff]
        %v700 = vld [vmem:[%s461 + $0x30] sm:$0xff]
        %v701 = vld [vmem:[%s461 + $0x38] sm:$0xff]
        %v702 = vld [vmem:[%s461 + $0x40] sm:$0xff]
        %v703 = vld [vmem:[%s461 + $0x48] sm:$0xff]
        %v704 = vld [vmem:[%s461 + $0x50] sm:$0xff]
        %v705 = vld [vmem:[%s461 + $0x58] sm:$0xff]
        %v706 = vld [vmem:[%s461 + $0x60] sm:$0xff]
        %v707 = vld [vmem:[%s461 + $0x68] sm:$0xff]
        %v708 = vld [vmem:[%s461 + $0x70] sm:$0xff]
        %v709 = vld [vmem:[%s461 + $0x78] sm:$0xff]
        %v710 = vld [vmem:[%s461 + $0x80] sm:$0xff]
        %v711 = vld [vmem:[%s461 + $0x88] sm:$0xff]
        %v712 = vld [vmem:[%s461 + $0x90] sm:$0xff]
        %v713 = vld [vmem:[%s461 + $0x98] sm:$0xff]
        %v714 = vld [vmem:[%s461 + $0xa0] sm:$0xff]
        %v715 = vld [vmem:[%s461 + $0xa8] sm:$0xff]
        %v716 = vld [vmem:[%s461 + $0xb0] sm:$0xff]
        %v717 = vld [vmem:[%s461 + $0xb8] sm:$0xff]
        %v718 = vld [vmem:[%s461 + $0xc0] sm:$0xff]
        %v719 = vld [vmem:[%s461 + $0xc8] sm:$0xff]
        %v720 = vld [vmem:[%s461 + $0xd0] sm:$0xff]
        %v721 = vld [vmem:[%s461 + $0xd8] sm:$0xff]
        %v722 = vld [vmem:[%s461 + $0xe0] sm:$0xff]
        %v723 = vld [vmem:[%s461 + $0xe8] sm:$0xff]
        %v724 = vld [vmem:[%s461 + $0xf0] sm:$0xff]
        %v725 = vld [vmem:[%s461 + $0xf8] sm:$0xff]
        %v726 = vld [vmem:[%s461 + $0x100] sm:$0xff]
        %v727 = vld [vmem:[%s461 + $0x108] sm:$0xff]
        %v728 = vld [vmem:[%s461 + $0x110] sm:$0xff]
        %v729 = vld [vmem:[%s461 + $0x118] sm:$0xff]
        %v730 = vld [vmem:[%s461 + $0x120] sm:$0xff]
        %v731 = vld [vmem:[%s461 + $0x128] sm:$0xff]
        %v732 = vld [vmem:[%s461 + $0x130] sm:$0xff]
        %v733 = vld [vmem:[%s461 + $0x138] sm:$0xff]
        %v734 = vld [vmem:[%s461 + $0x140] sm:$0xff]
        %v735 = vld [vmem:[%s461 + $0x148] sm:$0xff]
        %v736 = vld [vmem:[%s461 + $0x150] sm:$0xff]
        %v737 = vld [vmem:[%s461 + $0x158] sm:$0xff]
        %v738 = vld [vmem:[%s461 + $0x160] sm:$0xff]
        %v739 = vld [vmem:[%s461 + $0x168] sm:$0xff]
        %v740 = vld [vmem:[%s461 + $0x170] sm:$0xff]
        %v741 = vld [vmem:[%s461 + $0x178] sm:$0xff]
        %v742 = vld [vmem:[%s461 + $0x180] sm:$0xff]
        %v743 = vld [vmem:[%s461 + $0x188] sm:$0xff]
        %v744 = vld [vmem:[%s461 + $0x190] sm:$0xff]
        %v745 = vld [vmem:[%s461 + $0x198] sm:$0xff]
        %v746 = vld [vmem:[%s461 + $0x1a0] sm:$0xff]
        %v747 = vld [vmem:[%s461 + $0x1a8] sm:$0xff]
        %v748 = vld [vmem:[%s461 + $0x1b0] sm:$0xff]
        %v749 = vld [vmem:[%s461 + $0x1b8] sm:$0xff]
        %v750 = vld [vmem:[%s461 + $0x1c0] sm:$0xff]
        %v751 = vld [vmem:[%s461 + $0x1c8] sm:$0xff]
        %v752 = vld [vmem:[%s461 + $0x1d0] sm:$0xff]
        %v753 = vld [vmem:[%s461 + $0x1d8] sm:$0xff]
        %v754 = vld [vmem:[%s461 + $0x1e0] sm:$0xff]
        %v755 = vld [vmem:[%s461 + $0x1e8] sm:$0xff]
        %v756 = vld [vmem:[%s461 + $0x1f0] sm:$0xff]
        %v757 = vld [vmem:[%s461 + $0x1f8] sm:$0xff]
        %v758 = vld [vmem:[%s461 + $0x200] sm:$0xff]
        %v759 = vld [vmem:[%s461 + $0x208] sm:$0xff]
        %v760 = vld [vmem:[%s461 + $0x210] sm:$0xff]
        %v761 = vld [vmem:[%s461 + $0x218] sm:$0xff]
        %v762 = vld [vmem:[%s461 + $0x220] sm:$0xff]
        %v763 = vld [vmem:[%s461 + $0x228] sm:$0xff]
        %v764 = vld [vmem:[%s461 + $0x230] sm:$0xff]
        %v765 = vld [vmem:[%s461 + $0x238] sm:$0xff]
        %v766 = vld [vmem:[%s461 + $0x240] sm:$0xff]
        %v767 = vld [vmem:[%s461 + $0x248] sm:$0xff]
        %v768 = vld [vmem:[%s461 + $0x250] sm:$0xff]
        %v769 = vld [vmem:[%s461 + $0x258] sm:$0xff]
        %v770 = vld [vmem:[%s461 + $0x260] sm:$0xff]
        %v771 = vld [vmem:[%s461 + $0x268] sm:$0xff]
        %v772 = vld [vmem:[%s461 + $0x270] sm:$0xff]
        %v773 = vld [vmem:[%s461 + $0x278] sm:$0xff]
        %v774 = vld [vmem:[%s461 + $0x280] sm:$0xff]
        %v775 = vld [vmem:[%s461 + $0x288] sm:$0xff]
        %v776 = vld [vmem:[%s461 + $0x290] sm:$0xff]
        %v777 = vld [vmem:[%s461 + $0x298] sm:$0xff]
        %v778 = vld [vmem:[%s461 + $0x2a0] sm:$0xff]
        %v779 = vld [vmem:[%s461 + $0x2a8] sm:$0xff]
        %v780 = vld [vmem:[%s461 + $0x2b0] sm:$0xff]
        %v781 = vld [vmem:[%s461 + $0x2b8] sm:$0xff]
        %v782 = vld [vmem:[%s461 + $0x2c0] sm:$0xff]
        %v783 = vld [vmem:[%s461 + $0x2c8] sm:$0xff]
        %v784 = vld [vmem:[%s461 + $0x2d0] sm:$0xff]
        %v785 = vld [vmem:[%s461 + $0x2d8] sm:$0xff]
        %v786 = vld [vmem:[%s461 + $0x2e0] sm:$0xff]
        %v787 = vld [vmem:[%s461 + $0x2e8] sm:$0xff]
        %v788 = vld [vmem:[%s461 + $0x2f0] sm:$0xff]
        %v789 = vld [vmem:[%s461 + $0x2f8] sm:$0xff]
        %v790 = vld [vmem:[%s461 + $0x300] sm:$0xff]
        %v791 = vld [vmem:[%s461 + $0x308] sm:$0xff]
        %v792 = vld [vmem:[%s461 + $0x310] sm:$0xff]
        %v793 = vld [vmem:[%s461 + $0x318] sm:$0xff]
        %v794 = vld [vmem:[%s461 + $0x320] sm:$0xff]
        %v795 = vld [vmem:[%s461 + $0x328] sm:$0xff]
        %v796 = vld [vmem:[%s461 + $0x330] sm:$0xff]
        %v797 = vld [vmem:[%s461 + $0x338] sm:$0xff]
        %v798 = vld [vmem:[%s461 + $0x340] sm:$0xff]
        %v799 = vld [vmem:[%s461 + $0x348] sm:$0xff]
        %v800 = vld [vmem:[%s461 + $0x350] sm:$0xff]
        %v801 = vld [vmem:[%s461 + $0x358] sm:$0xff]
        %v802 = vld [vmem:[%s461 + $0x360] sm:$0xff]
        %v803 = vld [vmem:[%s461 + $0x368] sm:$0xff]
        %v804 = vld [vmem:[%s461 + $0x370] sm:$0xff]
        %v805 = vld [vmem:[%s461 + $0x378] sm:$0xff]
        %v806 = vld [vmem:[%s461 + $0x380] sm:$0xff]
        %v807 = vld [vmem:[%s461 + $0x388] sm:$0xff]
        %v808 = vld [vmem:[%s461 + $0x390] sm:$0xff]
        %v809 = vld [vmem:[%s461 + $0x398] sm:$0xff]
        %v810 = vld [vmem:[%s461 + $0x3a0] sm:$0xff]
        %v811 = vld [vmem:[%s461 + $0x3a8] sm:$0xff]
        %v812 = vld [vmem:[%s461 + $0x3b0] sm:$0xff]
        %v813 = vld [vmem:[%s461 + $0x3b8] sm:$0xff]
        %v814 = vld [vmem:[%s461 + $0x3c0] sm:$0xff]
        %v815 = vld [vmem:[%s461 + $0x3c8] sm:$0xff]
        %v816 = vld [vmem:[%s461 + $0x3d0] sm:$0xff]
        %v817 = vld [vmem:[%s461 + $0x3d8] sm:$0xff]
        %v818 = vld [vmem:[%s461 + $0x3e0] sm:$0xff]
        %v819 = vld [vmem:[%s461 + $0x3e8] sm:$0xff]
        %v820 = vld [vmem:[%s461 + $0x3f0] sm:$0xff]
        %v821 = vld [vmem:[%s461 + $0x3f8] sm:$0xff]
        %v950 = vunpack.c.l.b16 %v694
        %v951 = vunpack.c.h.b16 %v694
        %v952 = vunpack.c.l.b16 %v695
        %v953 = vunpack.c.h.b16 %v695
        %v954 = vunpack.c.l.b16 %v696
        %v955 = vunpack.c.h.b16 %v696
        %v956 = vunpack.c.l.b16 %v697
        %v957 = vunpack.c.h.b16 %v697
        %v958 = vunpack.c.l.b16 %v698
        %v959 = vunpack.c.h.b16 %v698
        %v960 = vunpack.c.l.b16 %v699
        %v961 = vunpack.c.h.b16 %v699
        %v962 = vunpack.c.l.b16 %v700
        %v963 = vunpack.c.h.b16 %v700
        %v964 = vunpack.c.l.b16 %v701
        %v965 = vunpack.c.h.b16 %v701
        %v966 = vunpack.c.l.b16 %v702
        %v967 = vunpack.c.h.b16 %v702
        %v968 = vunpack.c.l.b16 %v703
        %v969 = vunpack.c.h.b16 %v703
        %v970 = vunpack.c.l.b16 %v704
        %v971 = vunpack.c.h.b16 %v704
        %v972 = vunpack.c.l.b16 %v705
        %v973 = vunpack.c.h.b16 %v705
        %v974 = vunpack.c.l.b16 %v706
        %v975 = vunpack.c.h.b16 %v706
        %v976 = vunpack.c.l.b16 %v707
        %v977 = vunpack.c.h.b16 %v707
        %v978 = vunpack.c.l.b16 %v708
        %v979 = vunpack.c.h.b16 %v708
        %v980 = vunpack.c.l.b16 %v709
        %v981 = vunpack.c.h.b16 %v709
        %v982 = vunpack.c.l.b16 %v710
        %v983 = vunpack.c.h.b16 %v710
        %v984 = vunpack.c.l.b16 %v711
        %v985 = vunpack.c.h.b16 %v711
        %v986 = vunpack.c.l.b16 %v712
        %v987 = vunpack.c.h.b16 %v712
        %v988 = vunpack.c.l.b16 %v713
        %v989 = vunpack.c.h.b16 %v713
        %v990 = vunpack.c.l.b16 %v714
        %v991 = vunpack.c.h.b16 %v714
        %v992 = vunpack.c.l.b16 %v715
        %v993 = vunpack.c.h.b16 %v715
        %v994 = vunpack.c.l.b16 %v716
        %v995 = vunpack.c.h.b16 %v716
        %v996 = vunpack.c.l.b16 %v717
        %v997 = vunpack.c.h.b16 %v717
        %v998 = vunpack.c.l.b16 %v718
        %v999 = vunpack.c.h.b16 %v718
        %v1000 = vunpack.c.l.b16 %v719
        %v1001 = vunpack.c.h.b16 %v719
        %v1002 = vunpack.c.l.b16 %v720
        %v1003 = vunpack.c.h.b16 %v720
        %v1004 = vunpack.c.l.b16 %v721
        %v1005 = vunpack.c.h.b16 %v721
        %v1006 = vunpack.c.l.b16 %v722
        %v1007 = vunpack.c.h.b16 %v722
        %v1008 = vunpack.c.l.b16 %v723
        %v1009 = vunpack.c.h.b16 %v723
        %v1010 = vunpack.c.l.b16 %v724
        %v1011 = vunpack.c.h.b16 %v724
        %v1012 = vunpack.c.l.b16 %v725
        %v1013 = vunpack.c.h.b16 %v725
        %v1014 = vunpack.c.l.b16 %v726
        %v1015 = vunpack.c.h.b16 %v726
        %v1016 = vunpack.c.l.b16 %v727
        %v1017 = vunpack.c.h.b16 %v727
        %v1018 = vunpack.c.l.b16 %v728
        %v1019 = vunpack.c.h.b16 %v728
        %v1020 = vunpack.c.l.b16 %v729
        %v1021 = vunpack.c.h.b16 %v729
        %v1022 = vunpack.c.l.b16 %v730
        %v1023 = vunpack.c.h.b16 %v730
        %v1024 = vunpack.c.l.b16 %v731
        %v1025 = vunpack.c.h.b16 %v731
        %v1026 = vunpack.c.l.b16 %v732
        %v1027 = vunpack.c.h.b16 %v732
        %v1028 = vunpack.c.l.b16 %v733
        %v1029 = vunpack.c.h.b16 %v733
        %v1030 = vunpack.c.l.b16 %v734
        %v1031 = vunpack.c.h.b16 %v734
        %v1032 = vunpack.c.l.b16 %v735
        %v1033 = vunpack.c.h.b16 %v735
        %v1034 = vunpack.c.l.b16 %v736
        %v1035 = vunpack.c.h.b16 %v736
        %v1036 = vunpack.c.l.b16 %v737
        %v1037 = vunpack.c.h.b16 %v737
        %v1038 = vunpack.c.l.b16 %v738
        %v1039 = vunpack.c.h.b16 %v738
        %v1040 = vunpack.c.l.b16 %v739
        %v1041 = vunpack.c.h.b16 %v739
        %v1042 = vunpack.c.l.b16 %v740
        %v1043 = vunpack.c.h.b16 %v740
        %v1044 = vunpack.c.l.b16 %v741
        %v1045 = vunpack.c.h.b16 %v741
        %v1046 = vunpack.c.l.b16 %v742
        %v1047 = vunpack.c.h.b16 %v742
        %v1048 = vunpack.c.l.b16 %v743
        %v1049 = vunpack.c.h.b16 %v743
        %v1050 = vunpack.c.l.b16 %v744
        %v1051 = vunpack.c.h.b16 %v744
        %v1052 = vunpack.c.l.b16 %v745
        %v1053 = vunpack.c.h.b16 %v745
        %v1054 = vunpack.c.l.b16 %v746
        %v1055 = vunpack.c.h.b16 %v746
        %v1056 = vunpack.c.l.b16 %v747
        %v1057 = vunpack.c.h.b16 %v747
        %v1058 = vunpack.c.l.b16 %v748
        %v1059 = vunpack.c.h.b16 %v748
        %v1060 = vunpack.c.l.b16 %v749
        %v1061 = vunpack.c.h.b16 %v749
        %v1062 = vunpack.c.l.b16 %v750
        %v1063 = vunpack.c.h.b16 %v750
        %v1064 = vunpack.c.l.b16 %v751
        %v1065 = vunpack.c.h.b16 %v751
        %v1066 = vunpack.c.l.b16 %v752
        %v1067 = vunpack.c.h.b16 %v752
        %v1068 = vunpack.c.l.b16 %v753
        %v1069 = vunpack.c.h.b16 %v753
        %v1070 = vunpack.c.l.b16 %v754
        %v1071 = vunpack.c.h.b16 %v754
        %v1072 = vunpack.c.l.b16 %v755
        %v1073 = vunpack.c.h.b16 %v755
        %v1074 = vunpack.c.l.b16 %v756
        %v1075 = vunpack.c.h.b16 %v756
        %v1076 = vunpack.c.l.b16 %v757
        %v1077 = vunpack.c.h.b16 %v757
        %v1078 = vunpack.c.l.b16 %v758
        %v1079 = vunpack.c.h.b16 %v758
        %v1080 = vunpack.c.l.b16 %v759
        %v1081 = vunpack.c.h.b16 %v759
        %v1082 = vunpack.c.l.b16 %v760
        %v1083 = vunpack.c.h.b16 %v760
        %v1084 = vunpack.c.l.b16 %v761
        %v1085 = vunpack.c.h.b16 %v761
        %v1086 = vunpack.c.l.b16 %v762
        %v1087 = vunpack.c.h.b16 %v762
        %v1088 = vunpack.c.l.b16 %v763
        %v1089 = vunpack.c.h.b16 %v763
        %v1090 = vunpack.c.l.b16 %v764
        %v1091 = vunpack.c.h.b16 %v764
        %v1092 = vunpack.c.l.b16 %v765
        %v1093 = vunpack.c.h.b16 %v765
        %v1094 = vunpack.c.l.b16 %v766
        %v1095 = vunpack.c.h.b16 %v766
        %v1096 = vunpack.c.l.b16 %v767
        %v1097 = vunpack.c.h.b16 %v767
        %v1098 = vunpack.c.l.b16 %v768
        %v1099 = vunpack.c.h.b16 %v768
        %v1100 = vunpack.c.l.b16 %v769
        %v1101 = vunpack.c.h.b16 %v769
        %v1102 = vunpack.c.l.b16 %v770
        %v1103 = vunpack.c.h.b16 %v770
        %v1104 = vunpack.c.l.b16 %v771
        %v1105 = vunpack.c.h.b16 %v771
        %v1106 = vunpack.c.l.b16 %v772
        %v1107 = vunpack.c.h.b16 %v772
        %v1108 = vunpack.c.l.b16 %v773
        %v1109 = vunpack.c.h.b16 %v773
        %v1110 = vunpack.c.l.b16 %v774
        %v1111 = vunpack.c.h.b16 %v774
        %v1112 = vunpack.c.l.b16 %v775
        %v1113 = vunpack.c.h.b16 %v775
        %v1114 = vunpack.c.l.b16 %v776
        %v1115 = vunpack.c.h.b16 %v776
        %v1116 = vunpack.c.l.b16 %v777
        %v1117 = vunpack.c.h.b16 %v777
        %v1118 = vunpack.c.l.b16 %v778
        %v1119 = vunpack.c.h.b16 %v778
        %v1120 = vunpack.c.l.b16 %v779
        %v1121 = vunpack.c.h.b16 %v779
        %v1122 = vunpack.c.l.b16 %v780
        %v1123 = vunpack.c.h.b16 %v780
        %v1124 = vunpack.c.l.b16 %v781
        %v1125 = vunpack.c.h.b16 %v781
        %v1126 = vunpack.c.l.b16 %v782
        %v1127 = vunpack.c.h.b16 %v782
        %v1128 = vunpack.c.l.b16 %v783
        %v1129 = vunpack.c.h.b16 %v783
        %v1130 = vunpack.c.l.b16 %v784
        %v1131 = vunpack.c.h.b16 %v784
        %v1132 = vunpack.c.l.b16 %v785
        %v1133 = vunpack.c.h.b16 %v785
        %v1134 = vunpack.c.l.b16 %v786
        %v1135 = vunpack.c.h.b16 %v786
        %v1136 = vunpack.c.l.b16 %v787
        %v1137 = vunpack.c.h.b16 %v787
        %v1138 = vunpack.c.l.b16 %v788
        %v1139 = vunpack.c.h.b16 %v788
        %v1140 = vunpack.c.l.b16 %v789
        %v1141 = vunpack.c.h.b16 %v789
        %v1142 = vunpack.c.l.b16 %v790
        %v1143 = vunpack.c.h.b16 %v790
        %v1144 = vunpack.c.l.b16 %v791
        %v1145 = vunpack.c.h.b16 %v791
        %v1146 = vunpack.c.l.b16 %v792
        %v1147 = vunpack.c.h.b16 %v792
        %v1148 = vunpack.c.l.b16 %v793
        %v1149 = vunpack.c.h.b16 %v793
        %v1150 = vunpack.c.l.b16 %v794
        %v1151 = vunpack.c.h.b16 %v794
        %v1152 = vunpack.c.l.b16 %v795
        %v1153 = vunpack.c.h.b16 %v795
        %v1154 = vunpack.c.l.b16 %v796
        %v1155 = vunpack.c.h.b16 %v796
        %v1156 = vunpack.c.l.b16 %v797
        %v1157 = vunpack.c.h.b16 %v797
        %v1158 = vunpack.c.l.b16 %v798
        %v1159 = vunpack.c.h.b16 %v798
        %v1160 = vunpack.c.l.b16 %v799
        %v1161 = vunpack.c.h.b16 %v799
        %v1162 = vunpack.c.l.b16 %v800
        %v1163 = vunpack.c.h.b16 %v800
        %v1164 = vunpack.c.l.b16 %v801
        %v1165 = vunpack.c.h.b16 %v801
        %v1166 = vunpack.c.l.b16 %v802
        %v1167 = vunpack.c.h.b16 %v802
        %v1168 = vunpack.c.l.b16 %v803
        %v1169 = vunpack.c.h.b16 %v803
        %v1170 = vunpack.c.l.b16 %v804
        %v1171 = vunpack.c.h.b16 %v804
        %v1172 = vunpack.c.l.b16 %v805
        %v1173 = vunpack.c.h.b16 %v805
        %v1174 = vunpack.c.l.b16 %v806
        %v1175 = vunpack.c.h.b16 %v806
        %v1176 = vunpack.c.l.b16 %v807
        %v1177 = vunpack.c.h.b16 %v807
        %v1178 = vunpack.c.l.b16 %v808
        %v1179 = vunpack.c.h.b16 %v808
        %v1180 = vunpack.c.l.b16 %v809
        %v1181 = vunpack.c.h.b16 %v809
        %v1182 = vunpack.c.l.b16 %v810
        %v1183 = vunpack.c.h.b16 %v810
        %v1184 = vunpack.c.l.b16 %v811
        %v1185 = vunpack.c.h.b16 %v811
        %v1186 = vunpack.c.l.b16 %v812
        %v1187 = vunpack.c.h.b16 %v812
        %v1188 = vunpack.c.l.b16 %v813
        %v1189 = vunpack.c.h.b16 %v813
        %v1190 = vunpack.c.l.b16 %v814
        %v1191 = vunpack.c.h.b16 %v814
        %v1192 = vunpack.c.l.b16 %v815
        %v1193 = vunpack.c.h.b16 %v815
        %v1194 = vunpack.c.l.b16 %v816
        %v1195 = vunpack.c.h.b16 %v816
        %v1196 = vunpack.c.l.b16 %v817
        %v1197 = vunpack.c.h.b16 %v817
        %v1198 = vunpack.c.l.b16 %v818
        %v1199 = vunpack.c.h.b16 %v818
        %v1200 = vunpack.c.l.b16 %v819
        %v1201 = vunpack.c.h.b16 %v819
        %v1202 = vunpack.c.l.b16 %v820
        %v1203 = vunpack.c.h.b16 %v820
        %v1204 = vunpack.c.l.b16 %v821
        %v1205 = vunpack.c.h.b16 %v821
        %v1206 = vpack.c.b16 %v954, %v950
        %v1207 = vpack.c.b16 %v955, %v951
        %v1208 = vpack.c.b16 %v956, %v952
        %v1209 = vpack.c.b16 %v957, %v953
        %v1210 = vpack.c.b16 %v962, %v958
        %v1211 = vpack.c.b16 %v963, %v959
        %v1212 = vpack.c.b16 %v964, %v960
        %v1213 = vpack.c.b16 %v965, %v961
        %v1214 = vpack.c.b16 %v970, %v966
        %v1215 = vpack.c.b16 %v971, %v967
        %v1216 = vpack.c.b16 %v972, %v968
        %v1217 = vpack.c.b16 %v973, %v969
        %v1218 = vpack.c.b16 %v978, %v974
        %v1219 = vpack.c.b16 %v979, %v975
        %v1220 = vpack.c.b16 %v980, %v976
        %v1221 = vpack.c.b16 %v981, %v977
        %v1222 = vpack.c.b16 %v986, %v982
        %v1223 = vpack.c.b16 %v987, %v983
        %v1224 = vpack.c.b16 %v988, %v984
        %v1225 = vpack.c.b16 %v989, %v985
        %v1226 = vpack.c.b16 %v994, %v990
        %v1227 = vpack.c.b16 %v995, %v991
        %v1228 = vpack.c.b16 %v996, %v992
        %v1229 = vpack.c.b16 %v997, %v993
        %v1230 = vpack.c.b16 %v1002, %v998
        %v1231 = vpack.c.b16 %v1003, %v999
        %v1232 = vpack.c.b16 %v1004, %v1000
        %v1233 = vpack.c.b16 %v1005, %v1001
        %v1234 = vpack.c.b16 %v1010, %v1006
        %v1235 = vpack.c.b16 %v1011, %v1007
        %v1236 = vpack.c.b16 %v1012, %v1008
        %v1237 = vpack.c.b16 %v1013, %v1009
        %v1238 = vpack.c.b16 %v1018, %v1014
        %v1239 = vpack.c.b16 %v1019, %v1015
        %v1240 = vpack.c.b16 %v1020, %v1016
        %v1241 = vpack.c.b16 %v1021, %v1017
        %v1242 = vpack.c.b16 %v1026, %v1022
        %v1243 = vpack.c.b16 %v1027, %v1023
        %v1244 = vpack.c.b16 %v1028, %v1024
        %v1245 = vpack.c.b16 %v1029, %v1025
        %v1246 = vpack.c.b16 %v1034, %v1030
        %v1247 = vpack.c.b16 %v1035, %v1031
        %v1248 = vpack.c.b16 %v1036, %v1032
        %v1249 = vpack.c.b16 %v1037, %v1033
        %v1250 = vpack.c.b16 %v1042, %v1038
        %v1251 = vpack.c.b16 %v1043, %v1039
        %v1252 = vpack.c.b16 %v1044, %v1040
        %v1253 = vpack.c.b16 %v1045, %v1041
        %v1254 = vpack.c.b16 %v1050, %v1046
        %v1255 = vpack.c.b16 %v1051, %v1047
        %v1256 = vpack.c.b16 %v1052, %v1048
        %v1257 = vpack.c.b16 %v1053, %v1049
        %v1258 = vpack.c.b16 %v1058, %v1054
        %v1259 = vpack.c.b16 %v1059, %v1055
        %v1260 = vpack.c.b16 %v1060, %v1056
        %v1261 = vpack.c.b16 %v1061, %v1057
        %v1262 = vpack.c.b16 %v1066, %v1062
        %v1263 = vpack.c.b16 %v1067, %v1063
        %v1264 = vpack.c.b16 %v1068, %v1064
        %v1265 = vpack.c.b16 %v1069, %v1065
        %v1266 = vpack.c.b16 %v1074, %v1070
        %v1267 = vpack.c.b16 %v1075, %v1071
        %v1268 = vpack.c.b16 %v1076, %v1072
        %v1269 = vpack.c.b16 %v1077, %v1073
        %v1270 = vpack.c.b16 %v1082, %v1078
        %v1271 = vpack.c.b16 %v1083, %v1079
        %v1272 = vpack.c.b16 %v1084, %v1080
        %v1273 = vpack.c.b16 %v1085, %v1081
        %v1274 = vpack.c.b16 %v1090, %v1086
        %v1275 = vpack.c.b16 %v1091, %v1087
        %v1276 = vpack.c.b16 %v1092, %v1088
        %v1277 = vpack.c.b16 %v1093, %v1089
        %v1278 = vpack.c.b16 %v1098, %v1094
        %v1279 = vpack.c.b16 %v1099, %v1095
        %v1280 = vpack.c.b16 %v1100, %v1096
        %v1281 = vpack.c.b16 %v1101, %v1097
        %v1282 = vpack.c.b16 %v1106, %v1102
        %v1283 = vpack.c.b16 %v1107, %v1103
        %v1284 = vpack.c.b16 %v1108, %v1104
        %v1285 = vpack.c.b16 %v1109, %v1105
        %v1286 = vpack.c.b16 %v1114, %v1110
        %v1287 = vpack.c.b16 %v1115, %v1111
        %v1288 = vpack.c.b16 %v1116, %v1112
        %v1289 = vpack.c.b16 %v1117, %v1113
        %v1290 = vpack.c.b16 %v1122, %v1118
        %v1291 = vpack.c.b16 %v1123, %v1119
        %v1292 = vpack.c.b16 %v1124, %v1120
        %v1293 = vpack.c.b16 %v1125, %v1121
        %v1294 = vpack.c.b16 %v1130, %v1126
        %v1295 = vpack.c.b16 %v1131, %v1127
        %v1296 = vpack.c.b16 %v1132, %v1128
        %v1297 = vpack.c.b16 %v1133, %v1129
        %v1298 = vpack.c.b16 %v1138, %v1134
        %v1299 = vpack.c.b16 %v1139, %v1135
        %v1300 = vpack.c.b16 %v1140, %v1136
        %v1301 = vpack.c.b16 %v1141, %v1137
        %v1302 = vpack.c.b16 %v1146, %v1142
        %v1303 = vpack.c.b16 %v1147, %v1143
        %v1304 = vpack.c.b16 %v1148, %v1144
        %v1305 = vpack.c.b16 %v1149, %v1145
        %v1306 = vpack.c.b16 %v1154, %v1150
        %v1307 = vpack.c.b16 %v1155, %v1151
        %v1308 = vpack.c.b16 %v1156, %v1152
        %v1309 = vpack.c.b16 %v1157, %v1153
        %v1310 = vpack.c.b16 %v1162, %v1158
        %v1311 = vpack.c.b16 %v1163, %v1159
        %v1312 = vpack.c.b16 %v1164, %v1160
        %v1313 = vpack.c.b16 %v1165, %v1161
        %v1314 = vpack.c.b16 %v1170, %v1166
        %v1315 = vpack.c.b16 %v1171, %v1167
        %v1316 = vpack.c.b16 %v1172, %v1168
        %v1317 = vpack.c.b16 %v1173, %v1169
        %v1318 = vpack.c.b16 %v1178, %v1174
        %v1319 = vpack.c.b16 %v1179, %v1175
        %v1320 = vpack.c.b16 %v1180, %v1176
        %v1321 = vpack.c.b16 %v1181, %v1177
        %v1322 = vpack.c.b16 %v1186, %v1182
        %v1323 = vpack.c.b16 %v1187, %v1183
        %v1324 = vpack.c.b16 %v1188, %v1184
        %v1325 = vpack.c.b16 %v1189, %v1185
        %v1326 = vpack.c.b16 %v1194, %v1190
        %v1327 = vpack.c.b16 %v1195, %v1191
        %v1328 = vpack.c.b16 %v1196, %v1192
        %v1329 = vpack.c.b16 %v1197, %v1193
        %v1330 = vpack.c.b16 %v1202, %v1198
        %v1331 = vpack.c.b16 %v1203, %v1199
        %v1332 = vpack.c.b16 %v1204, %v1200
        %v1333 = vpack.c.b16 %v1205, %v1201
        %v1526 = vunpack.c.l.b16 %v566
        %v1527 = vunpack.c.l.b16 %v567
        %v1528 = vunpack.c.l.b16 %v568
        %v1529 = vunpack.c.l.b16 %v569
        %v1530 = vunpack.c.l.b16 %v570
        %v1531 = vunpack.c.l.b16 %v571
        %v1532 = vunpack.c.l.b16 %v572
        %v1533 = vunpack.c.l.b16 %v573
        %v1534 = vunpack.c.l.b16 %v574
        %v1535 = vunpack.c.l.b16 %v575
        %v1536 = vunpack.c.l.b16 %v576
        %v1537 = vunpack.c.l.b16 %v577
        %v1538 = vunpack.c.l.b16 %v578
        %v1539 = vunpack.c.l.b16 %v579
        %v1540 = vunpack.c.l.b16 %v580
        %v1541 = vunpack.c.l.b16 %v581
        %v1542 = vunpack.c.l.b16 %v582
        %v1543 = vunpack.c.l.b16 %v583
        %v1544 = vunpack.c.l.b16 %v584
        %v1545 = vunpack.c.l.b16 %v585
        %v1546 = vunpack.c.l.b16 %v586
        %v1547 = vunpack.c.l.b16 %v587
        %v1548 = vunpack.c.l.b16 %v588
        %v1549 = vunpack.c.l.b16 %v589
        %v1550 = vunpack.c.l.b16 %v590
        %v1551 = vunpack.c.l.b16 %v591
        %v1552 = vunpack.c.l.b16 %v592
        %v1553 = vunpack.c.l.b16 %v593
        %v1554 = vunpack.c.l.b16 %v594
        %v1555 = vunpack.c.l.b16 %v595
        %v1556 = vunpack.c.l.b16 %v596
        %v1557 = vunpack.c.l.b16 %v597
        %v1558 = vunpack.c.l.b16 %v598
        %v1559 = vunpack.c.l.b16 %v599
        %v1560 = vunpack.c.l.b16 %v600
        %v1561 = vunpack.c.l.b16 %v601
        %v1562 = vunpack.c.l.b16 %v602
        %v1563 = vunpack.c.l.b16 %v603
        %v1564 = vunpack.c.l.b16 %v604
        %v1565 = vunpack.c.l.b16 %v605
        %v1566 = vunpack.c.l.b16 %v606
        %v1567 = vunpack.c.l.b16 %v607
        %v1568 = vunpack.c.l.b16 %v608
        %v1569 = vunpack.c.l.b16 %v609
        %v1570 = vunpack.c.l.b16 %v610
        %v1571 = vunpack.c.l.b16 %v611
        %v1572 = vunpack.c.l.b16 %v612
        %v1573 = vunpack.c.l.b16 %v613
        %v1574 = vunpack.c.l.b16 %v614
        %v1575 = vunpack.c.l.b16 %v615
        %v1576 = vunpack.c.l.b16 %v616
        %v1577 = vunpack.c.l.b16 %v617
        %v1578 = vunpack.c.l.b16 %v618
        %v1579 = vunpack.c.l.b16 %v619
        %v1580 = vunpack.c.l.b16 %v620
        %v1581 = vunpack.c.l.b16 %v621
        %v1582 = vunpack.c.l.b16 %v622
        %v1583 = vunpack.c.l.b16 %v623
        %v1584 = vunpack.c.l.b16 %v624
        %v1585 = vunpack.c.l.b16 %v625
        %v1586 = vunpack.c.l.b16 %v626
        %v1587 = vunpack.c.l.b16 %v627
        %v1588 = vunpack.c.l.b16 %v628
        %v1589 = vunpack.c.l.b16 %v629
        %v1590 = vpack.c.b16 %v1527, %v1526
        %v1591 = vpack.c.b16 %v1529, %v1528
        %v1592 = vpack.c.b16 %v1531, %v1530
        %v1593 = vpack.c.b16 %v1533, %v1532
        %v1594 = vpack.c.b16 %v1535, %v1534
        %v1595 = vpack.c.b16 %v1537, %v1536
        %v1596 = vpack.c.b16 %v1539, %v1538
        %v1597 = vpack.c.b16 %v1541, %v1540
        %v1598 = vpack.c.b16 %v1543, %v1542
        %v1599 = vpack.c.b16 %v1545, %v1544
        %v1600 = vpack.c.b16 %v1547, %v1546
        %v1601 = vpack.c.b16 %v1549, %v1548
        %v1602 = vpack.c.b16 %v1551, %v1550
        %v1603 = vpack.c.b16 %v1553, %v1552
        %v1604 = vpack.c.b16 %v1555, %v1554
        %v1605 = vpack.c.b16 %v1557, %v1556
        %v1606 = vpack.c.b16 %v1559, %v1558
        %v1607 = vpack.c.b16 %v1561, %v1560
        %v1608 = vpack.c.b16 %v1563, %v1562
        %v1609 = vpack.c.b16 %v1565, %v1564
        %v1610 = vpack.c.b16 %v1567, %v1566
        %v1611 = vpack.c.b16 %v1569, %v1568
        %v1612 = vpack.c.b16 %v1571, %v1570
        %v1613 = vpack.c.b16 %v1573, %v1572
        %v1614 = vpack.c.b16 %v1575, %v1574
        %v1615 = vpack.c.b16 %v1577, %v1576
        %v1616 = vpack.c.b16 %v1579, %v1578
        %v1617 = vpack.c.b16 %v1581, %v1580
        %v1618 = vpack.c.b16 %v1583, %v1582
        %v1619 = vpack.c.b16 %v1585, %v1584
        %v1620 = vpack.c.b16 %v1587, %v1586
        %v1621 = vpack.c.b16 %v1589, %v1588
        %1654 = vmatprep.subr.bf16.mxu0 0
        %1655 = vmatpush1.bf16.msra.mxu0 %v1597
        %1656 = vmatprep.subr.bf16.mxu0 0
        %1657 = vmatpush1.bf16.msra.mxu0 %v1596
        %1658 = vmatprep.subr.bf16.mxu0 0
        %1659 = vmatpush1.bf16.msra.mxu0 %v1595
        %1660 = vmatprep.subr.bf16.mxu0 0
        %1661 = vmatpush1.bf16.msra.mxu0 %v1594
        %1662 = vmatprep.subr.bf16.mxu0 0
        %1663 = vmatpush1.bf16.msra.mxu0 %v1593
        %1664 = vmatprep.subr.bf16.mxu0 0
        %1665 = vmatpush1.bf16.msra.mxu0 %v1592
        %1666 = vmatprep.subr.bf16.mxu0 0
        %1667 = vmatpush1.bf16.msra.mxu0 %v1591
        %1668 = vmatprep.subr.bf16.mxu0 0
        %1669 = vmatpush1.bf16.msra.mxu0 %v1590
        %1670 = vmatprep.subr.bf16.mxu0 0
        %1671 = vmatpush2.bf16.msra.mxu0 %v1605
        %1672 = vmatprep.subr.bf16.mxu0 0
        %1673 = vmatpush2.bf16.msra.mxu0 %v1604
        %1674 = vmatprep.subr.bf16.mxu0 0
        %1675 = vmatpush2.bf16.msra.mxu0 %v1603
        %1676 = vmatprep.subr.bf16.mxu0 0
        %1677 = vmatpush2.bf16.msra.mxu0 %v1602
        %1678 = vmatprep.subr.bf16.mxu0 0
        %1679 = vmatpush2.bf16.msra.mxu0 %v1601
        %1680 = vmatprep.subr.bf16.mxu0 0
        %1681 = vmatpush2.bf16.msra.mxu0 %v1600
        %1682 = vmatprep.subr.bf16.mxu0 0
        %1683 = vmatpush2.bf16.msra.mxu0 %v1599
        %1684 = vmatprep.subr.bf16.mxu0 0
        %1685 = vmatpush2.bf16.msra.mxu0 %v1598
        %1686 = vmatprep.mubr.bf16.mxu0 %v1207
        %1687 = vmatmul.mubr.bf16.gmra.mxu0 %v1206
        %v1688 = vpop.f32.mrf.mxu0
        %v1689 = vadd.f32 0.0, %v1688
        %v1690 = vpop.f32.mrf.mxu0
        %v1691 = vpop.f32.mrf.mxu0
        %v1692 = vadd.f32 0.0, %v1691
        %v1693 = vpop.f32.mrf.mxu0
        %1694 = vmatprep.mubr.bf16.mxu0 %v1211
        %1695 = vmatmul.mubr.bf16.gmra.mxu0 %v1210
        %v1696 = vpop.f32.mrf.mxu0
        %v1697 = vadd.f32 0.0, %v1696
        %v1698 = vpop.f32.mrf.mxu0
        %v1699 = vpop.f32.mrf.mxu0
        %v1700 = vadd.f32 0.0, %v1699
        %v1701 = vpop.f32.mrf.mxu0
        %1702 = vmatprep.mubr.bf16.mxu0 %v1215
        %1703 = vmatmul.mubr.bf16.gmra.mxu0 %v1214
        %v1704 = vpop.f32.mrf.mxu0
        %v1705 = vadd.f32 0.0, %v1704
        %v1706 = vpop.f32.mrf.mxu0
        %v1707 = vpop.f32.mrf.mxu0
        %v1708 = vadd.f32 0.0, %v1707
        %v1709 = vpop.f32.mrf.mxu0
        %1710 = vmatprep.mubr.bf16.mxu0 %v1219
        %1711 = vmatmul.mubr.bf16.gmra.mxu0 %v1218
        %v1712 = vpop.f32.mrf.mxu0
        %v1713 = vadd.f32 0.0, %v1712
        %v1714 = vpop.f32.mrf.mxu0
        %v1715 = vpop.f32.mrf.mxu0
        %v1716 = vadd.f32 0.0, %v1715
        %v1717 = vpop.f32.mrf.mxu0
        %1718 = vmatprep.mubr.bf16.mxu0 %v1223
        %1719 = vmatmul.mubr.bf16.gmra.mxu0 %v1222
        %v1720 = vpop.f32.mrf.mxu0
        %v1721 = vadd.f32 0.0, %v1720
        %v1722 = vpop.f32.mrf.mxu0
        %v1723 = vpop.f32.mrf.mxu0
        %v1724 = vadd.f32 0.0, %v1723
        %v1725 = vpop.f32.mrf.mxu0
        %1726 = vmatprep.mubr.bf16.mxu0 %v1227
        %1727 = vmatmul.mubr.bf16.gmra.mxu0 %v1226
        %v1728 = vpop.f32.mrf.mxu0
        %v1729 = vadd.f32 0.0, %v1728
        %v1730 = vpop.f32.mrf.mxu0
        %v1731 = vpop.f32.mrf.mxu0
        %v1732 = vadd.f32 0.0, %v1731
        %v1733 = vpop.f32.mrf.mxu0
        %1734 = vmatprep.mubr.bf16.mxu0 %v1231
        %1735 = vmatmul.mubr.bf16.gmra.mxu0 %v1230
        %v1736 = vpop.f32.mrf.mxu0
        %v1737 = vadd.f32 0.0, %v1736
        %v1738 = vpop.f32.mrf.mxu0
        %v1739 = vpop.f32.mrf.mxu0
        %v1740 = vadd.f32 0.0, %v1739
        %v1741 = vpop.f32.mrf.mxu0
        %1742 = vmatprep.mubr.bf16.mxu0 %v1235
        %1743 = vmatmul.mubr.bf16.gmra.mxu0 %v1234
        %v1744 = vpop.f32.mrf.mxu0
        %v1745 = vadd.f32 0.0, %v1744
        %v1746 = vpop.f32.mrf.mxu0
        %v1747 = vpop.f32.mrf.mxu0
        %v1748 = vadd.f32 0.0, %v1747
        %v1749 = vpop.f32.mrf.mxu0
        %1750 = vmatprep.mubr.bf16.mxu0 %v1239
        %1751 = vmatmul.mubr.bf16.gmra.mxu0 %v1238
        %v1752 = vpop.f32.mrf.mxu0
        %v1753 = vadd.f32 0.0, %v1752
        %v1754 = vpop.f32.mrf.mxu0
        %v1755 = vpop.f32.mrf.mxu0
        %v1756 = vadd.f32 0.0, %v1755
        %v1757 = vpop.f32.mrf.mxu0
        %1758 = vmatprep.mubr.bf16.mxu0 %v1243
        %1759 = vmatmul.mubr.bf16.gmra.mxu0 %v1242
        %v1760 = vpop.f32.mrf.mxu0
        %v1761 = vadd.f32 0.0, %v1760
        %v1762 = vpop.f32.mrf.mxu0
        %v1763 = vpop.f32.mrf.mxu0
        %v1764 = vadd.f32 0.0, %v1763
        %v1765 = vpop.f32.mrf.mxu0
        %1766 = vmatprep.mubr.bf16.mxu0 %v1247
        %1767 = vmatmul.mubr.bf16.gmra.mxu0 %v1246
        %v1768 = vpop.f32.mrf.mxu0
        %v1769 = vadd.f32 0.0, %v1768
        %v1770 = vpop.f32.mrf.mxu0
        %v1771 = vpop.f32.mrf.mxu0
        %v1772 = vadd.f32 0.0, %v1771
        %v1773 = vpop.f32.mrf.mxu0
        %1774 = vmatprep.mubr.bf16.mxu0 %v1251
        %1775 = vmatmul.mubr.bf16.gmra.mxu0 %v1250
        %v1776 = vpop.f32.mrf.mxu0
        %v1777 = vadd.f32 0.0, %v1776
        %v1778 = vpop.f32.mrf.mxu0
        %v1779 = vpop.f32.mrf.mxu0
        %v1780 = vadd.f32 0.0, %v1779
        %v1781 = vpop.f32.mrf.mxu0
        %1782 = vmatprep.mubr.bf16.mxu0 %v1255
        %1783 = vmatmul.mubr.bf16.gmra.mxu0 %v1254
        %v1784 = vpop.f32.mrf.mxu0
        %v1785 = vadd.f32 0.0, %v1784
        %v1786 = vpop.f32.mrf.mxu0
        %v1787 = vpop.f32.mrf.mxu0
        %v1788 = vadd.f32 0.0, %v1787
        %v1789 = vpop.f32.mrf.mxu0
        %1790 = vmatprep.mubr.bf16.mxu0 %v1259
        %1791 = vmatmul.mubr.bf16.gmra.mxu0 %v1258
        %v1792 = vpop.f32.mrf.mxu0
        %v1793 = vadd.f32 0.0, %v1792
        %v1794 = vpop.f32.mrf.mxu0
        %v1795 = vpop.f32.mrf.mxu0
        %v1796 = vadd.f32 0.0, %v1795
        %v1797 = vpop.f32.mrf.mxu0
        %1798 = vmatprep.mubr.bf16.mxu0 %v1263
        %1799 = vmatmul.mubr.bf16.gmra.mxu0 %v1262
        %v1800 = vpop.f32.mrf.mxu0
        %v1801 = vadd.f32 0.0, %v1800
        %v1802 = vpop.f32.mrf.mxu0
        %v1803 = vpop.f32.mrf.mxu0
        %v1804 = vadd.f32 0.0, %v1803
        %v1805 = vpop.f32.mrf.mxu0
        %1806 = vmatprep.mubr.bf16.mxu0 %v1267
        %1807 = vmatmul.mubr.bf16.gmra.mxu0 %v1266
        %v1808 = vpop.f32.mrf.mxu0
        %v1809 = vadd.f32 0.0, %v1808
        %v1810 = vpop.f32.mrf.mxu0
        %v1811 = vpop.f32.mrf.mxu0
        %v1812 = vadd.f32 0.0, %v1811
        %v1813 = vpop.f32.mrf.mxu0
        %1814 = vmatprep.mubr.bf16.mxu0 %v1271
        %1815 = vmatmul.mubr.bf16.gmra.mxu0 %v1270
        %v1816 = vpop.f32.mrf.mxu0
        %v1817 = vadd.f32 0.0, %v1816
        %v1818 = vpop.f32.mrf.mxu0
        %v1819 = vpop.f32.mrf.mxu0
        %v1820 = vadd.f32 0.0, %v1819
        %v1821 = vpop.f32.mrf.mxu0
        %1822 = vmatprep.mubr.bf16.mxu0 %v1275
        %1823 = vmatmul.mubr.bf16.gmra.mxu0 %v1274
        %v1824 = vpop.f32.mrf.mxu0
        %v1825 = vadd.f32 0.0, %v1824
        %v1826 = vpop.f32.mrf.mxu0
        %v1827 = vpop.f32.mrf.mxu0
        %v1828 = vadd.f32 0.0, %v1827
        %v1829 = vpop.f32.mrf.mxu0
        %1830 = vmatprep.mubr.bf16.mxu0 %v1279
        %1831 = vmatmul.mubr.bf16.gmra.mxu0 %v1278
        %v1832 = vpop.f32.mrf.mxu0
        %v1833 = vadd.f32 0.0, %v1832
        %v1834 = vpop.f32.mrf.mxu0
        %v1835 = vpop.f32.mrf.mxu0
        %v1836 = vadd.f32 0.0, %v1835
        %v1837 = vpop.f32.mrf.mxu0
        %1838 = vmatprep.mubr.bf16.mxu0 %v1283
        %1839 = vmatmul.mubr.bf16.gmra.mxu0 %v1282
        %v1840 = vpop.f32.mrf.mxu0
        %v1841 = vadd.f32 0.0, %v1840
        %v1842 = vpop.f32.mrf.mxu0
        %v1843 = vpop.f32.mrf.mxu0
        %v1844 = vadd.f32 0.0, %v1843
        %v1845 = vpop.f32.mrf.mxu0
        %1846 = vmatprep.mubr.bf16.mxu0 %v1287
        %1847 = vmatmul.mubr.bf16.gmra.mxu0 %v1286
        %v1848 = vpop.f32.mrf.mxu0
        %v1849 = vadd.f32 0.0, %v1848
        %v1850 = vpop.f32.mrf.mxu0
        %v1851 = vpop.f32.mrf.mxu0
        %v1852 = vadd.f32 0.0, %v1851
        %v1853 = vpop.f32.mrf.mxu0
        %1854 = vmatprep.mubr.bf16.mxu0 %v1291
        %1855 = vmatmul.mubr.bf16.gmra.mxu0 %v1290
        %v1856 = vpop.f32.mrf.mxu0
        %v1857 = vadd.f32 0.0, %v1856
        %v1858 = vpop.f32.mrf.mxu0
        %v1859 = vpop.f32.mrf.mxu0
        %v1860 = vadd.f32 0.0, %v1859
        %v1861 = vpop.f32.mrf.mxu0
        %1862 = vmatprep.mubr.bf16.mxu0 %v1295
        %1863 = vmatmul.mubr.bf16.gmra.mxu0 %v1294
        %v1864 = vpop.f32.mrf.mxu0
        %v1865 = vadd.f32 0.0, %v1864
        %v1866 = vpop.f32.mrf.mxu0
        %v1867 = vpop.f32.mrf.mxu0
        %v1868 = vadd.f32 0.0, %v1867
        %v1869 = vpop.f32.mrf.mxu0
        %1870 = vmatprep.mubr.bf16.mxu0 %v1299
        %1871 = vmatmul.mubr.bf16.gmra.mxu0 %v1298
        %v1872 = vpop.f32.mrf.mxu0
        %v1873 = vadd.f32 0.0, %v1872
        %v1874 = vpop.f32.mrf.mxu0
        %v1875 = vpop.f32.mrf.mxu0
        %v1876 = vadd.f32 0.0, %v1875
        %v1877 = vpop.f32.mrf.mxu0
        %1878 = vmatprep.mubr.bf16.mxu0 %v1303
        %1879 = vmatmul.mubr.bf16.gmra.mxu0 %v1302
        %v1880 = vpop.f32.mrf.mxu0
        %v1881 = vadd.f32 0.0, %v1880
        %v1882 = vpop.f32.mrf.mxu0
        %v1883 = vpop.f32.mrf.mxu0
        %v1884 = vadd.f32 0.0, %v1883
        %v1885 = vpop.f32.mrf.mxu0
        %1886 = vmatprep.mubr.bf16.mxu0 %v1307
        %1887 = vmatmul.mubr.bf16.gmra.mxu0 %v1306
        %v1888 = vpop.f32.mrf.mxu0
        %v1889 = vadd.f32 0.0, %v1888
        %v1890 = vpop.f32.mrf.mxu0
        %v1891 = vpop.f32.mrf.mxu0
        %v1892 = vadd.f32 0.0, %v1891
        %v1893 = vpop.f32.mrf.mxu0
        %1894 = vmatprep.mubr.bf16.mxu0 %v1311
        %1895 = vmatmul.mubr.bf16.gmra.mxu0 %v1310
        %v1896 = vpop.f32.mrf.mxu0
        %v1897 = vadd.f32 0.0, %v1896
        %v1898 = vpop.f32.mrf.mxu0
        %v1899 = vpop.f32.mrf.mxu0
        %v1900 = vadd.f32 0.0, %v1899
        %v1901 = vpop.f32.mrf.mxu0
        %1902 = vmatprep.mubr.bf16.mxu0 %v1315
        %1903 = vmatmul.mubr.bf16.gmra.mxu0 %v1314
        %v1904 = vpop.f32.mrf.mxu0
        %v1905 = vadd.f32 0.0, %v1904
        %v1906 = vpop.f32.mrf.mxu0
        %v1907 = vpop.f32.mrf.mxu0
        %v1908 = vadd.f32 0.0, %v1907
        %v1909 = vpop.f32.mrf.mxu0
        %1910 = vmatprep.mubr.bf16.mxu0 %v1319
        %1911 = vmatmul.mubr.bf16.gmra.mxu0 %v1318
        %v1912 = vpop.f32.mrf.mxu0
        %v1913 = vadd.f32 0.0, %v1912
        %v1914 = vpop.f32.mrf.mxu0
        %v1915 = vpop.f32.mrf.mxu0
        %v1916 = vadd.f32 0.0, %v1915
        %v1917 = vpop.f32.mrf.mxu0
        %1918 = vmatprep.mubr.bf16.mxu0 %v1323
        %1919 = vmatmul.mubr.bf16.gmra.mxu0 %v1322
        %v1920 = vpop.f32.mrf.mxu0
        %v1921 = vadd.f32 0.0, %v1920
        %v1922 = vpop.f32.mrf.mxu0
        %v1923 = vpop.f32.mrf.mxu0
        %v1924 = vadd.f32 0.0, %v1923
        %v1925 = vpop.f32.mrf.mxu0
        %1926 = vmatprep.mubr.bf16.mxu0 %v1327
        %1927 = vmatmul.mubr.bf16.gmra.mxu0 %v1326
        %v1928 = vpop.f32.mrf.mxu0
        %v1929 = vadd.f32 0.0, %v1928
        %v1930 = vpop.f32.mrf.mxu0
        %v1931 = vpop.f32.mrf.mxu0
        %v1932 = vadd.f32 0.0, %v1931
        %v1933 = vpop.f32.mrf.mxu0
        %1934 = vmatprep.mubr.bf16.mxu0 %v1331
        %1935 = vmatmul.mubr.bf16.gmra.mxu0 %v1330
        %v1936 = vpop.f32.mrf.mxu0
        %v1937 = vadd.f32 0.0, %v1936
        %v1938 = vpop.f32.mrf.mxu0
        %v1939 = vpop.f32.mrf.mxu0
        %v1940 = vadd.f32 0.0, %v1939
        %v1941 = vpop.f32.mrf.mxu0
        %1942 = vdwg.mxu0
        %1943 = vmatprep.subr.bf16.mxu0 0
        %1944 = vmatpush1.bf16.msra.mxu0 %v1613
        %1945 = vmatprep.subr.bf16.mxu0 0
        %1946 = vmatpush1.bf16.msra.mxu0 %v1612
        %1947 = vmatprep.subr.bf16.mxu0 0
        %1948 = vmatpush1.bf16.msra.mxu0 %v1611
        %1949 = vmatprep.subr.bf16.mxu0 0
        %1950 = vmatpush1.bf16.msra.mxu0 %v1610
        %1951 = vmatprep.subr.bf16.mxu0 0
        %1952 = vmatpush1.bf16.msra.mxu0 %v1609
        %1953 = vmatprep.subr.bf16.mxu0 0
        %1954 = vmatpush1.bf16.msra.mxu0 %v1608
        %1955 = vmatprep.subr.bf16.mxu0 0
        %1956 = vmatpush1.bf16.msra.mxu0 %v1607
        %1957 = vmatprep.subr.bf16.mxu0 0
        %1958 = vmatpush1.bf16.msra.mxu0 %v1606
        %1959 = vmatprep.subr.bf16.mxu0 0
        %1960 = vmatpush2.bf16.msra.mxu0 %v1621
        %1961 = vmatprep.subr.bf16.mxu0 0
        %1962 = vmatpush2.bf16.msra.mxu0 %v1620
        %1963 = vmatprep.subr.bf16.mxu0 0
        %1964 = vmatpush2.bf16.msra.mxu0 %v1619
        %1965 = vmatprep.subr.bf16.mxu0 0
        %1966 = vmatpush2.bf16.msra.mxu0 %v1618
        %1967 = vmatprep.subr.bf16.mxu0 0
        %1968 = vmatpush2.bf16.msra.mxu0 %v1617
        %1969 = vmatprep.subr.bf16.mxu0 0
        %1970 = vmatpush2.bf16.msra.mxu0 %v1616
        %1971 = vmatprep.subr.bf16.mxu0 0
        %1972 = vmatpush2.bf16.msra.mxu0 %v1615
        %1973 = vmatprep.subr.bf16.mxu0 0
        %1974 = vmatpush2.bf16.msra.mxu0 %v1614
        %1975 = vmatprep.mubr.bf16.mxu0 %v1209
        %1976 = vmatmul.mubr.bf16.gmra.mxu0 %v1208
        %v1977 = vpop.f32.mrf.mxu0
        %v1978 = vadd.f32 %v1689, %v1977
        %v1979 = vpop.f32.mrf.mxu0
        %v1980 = vpop.f32.mrf.mxu0
        %v1981 = vadd.f32 %v1692, %v1980
        %v1982 = vpop.f32.mrf.mxu0
        %1983 = vmatprep.mubr.bf16.mxu0 %v1213
        %1984 = vmatmul.mubr.bf16.gmra.mxu0 %v1212
        %v1985 = vpop.f32.mrf.mxu0
        %v1986 = vadd.f32 %v1697, %v1985
        %v1987 = vpop.f32.mrf.mxu0
        %v1988 = vpop.f32.mrf.mxu0
        %v1989 = vadd.f32 %v1700, %v1988
        %v1990 = vpop.f32.mrf.mxu0
        %1991 = vmatprep.mubr.bf16.mxu0 %v1217
        %1992 = vmatmul.mubr.bf16.gmra.mxu0 %v1216
        %v1993 = vpop.f32.mrf.mxu0
        %v1994 = vadd.f32 %v1705, %v1993
        %v1995 = vpop.f32.mrf.mxu0
        %v1996 = vpop.f32.mrf.mxu0
        %v1997 = vadd.f32 %v1708, %v1996
        %v1998 = vpop.f32.mrf.mxu0
        %1999 = vmatprep.mubr.bf16.mxu0 %v1221
        %2000 = vmatmul.mubr.bf16.gmra.mxu0 %v1220
        %v2001 = vpop.f32.mrf.mxu0
        %v2002 = vadd.f32 %v1713, %v2001
        %v2003 = vpop.f32.mrf.mxu0
        %v2004 = vpop.f32.mrf.mxu0
        %v2005 = vadd.f32 %v1716, %v2004
        %v2006 = vpop.f32.mrf.mxu0
        %2007 = vmatprep.mubr.bf16.mxu0 %v1225
        %2008 = vmatmul.mubr.bf16.gmra.mxu0 %v1224
        %v2009 = vpop.f32.mrf.mxu0
        %v2010 = vadd.f32 %v1721, %v2009
        %v2011 = vpop.f32.mrf.mxu0
        %v2012 = vpop.f32.mrf.mxu0
        %v2013 = vadd.f32 %v1724, %v2012
        %v2014 = vpop.f32.mrf.mxu0
        %2015 = vmatprep.mubr.bf16.mxu0 %v1229
        %2016 = vmatmul.mubr.bf16.gmra.mxu0 %v1228
        %v2017 = vpop.f32.mrf.mxu0
        %v2018 = vadd.f32 %v1729, %v2017
        %v2019 = vpop.f32.mrf.mxu0
        %v2020 = vpop.f32.mrf.mxu0
        %v2021 = vadd.f32 %v1732, %v2020
        %v2022 = vpop.f32.mrf.mxu0
        %2023 = vmatprep.mubr.bf16.mxu0 %v1233
        %2024 = vmatmul.mubr.bf16.gmra.mxu0 %v1232
        %v2025 = vpop.f32.mrf.mxu0
        %v2026 = vadd.f32 %v1737, %v2025
        %v2027 = vpop.f32.mrf.mxu0
        %v2028 = vpop.f32.mrf.mxu0
        %v2029 = vadd.f32 %v1740, %v2028
        %v2030 = vpop.f32.mrf.mxu0
        %2031 = vmatprep.mubr.bf16.mxu0 %v1237
        %2032 = vmatmul.mubr.bf16.gmra.mxu0 %v1236
        %v2033 = vpop.f32.mrf.mxu0
        %v2034 = vadd.f32 %v1745, %v2033
        %v2035 = vpop.f32.mrf.mxu0
        %v2036 = vpop.f32.mrf.mxu0
        %v2037 = vadd.f32 %v1748, %v2036
        %v2038 = vpop.f32.mrf.mxu0
        %2039 = vmatprep.mubr.bf16.mxu0 %v1241
        %2040 = vmatmul.mubr.bf16.gmra.mxu0 %v1240
        %v2041 = vpop.f32.mrf.mxu0
        %v2042 = vadd.f32 %v1753, %v2041
        %v2043 = vpop.f32.mrf.mxu0
        %v2044 = vpop.f32.mrf.mxu0
        %v2045 = vadd.f32 %v1756, %v2044
        %v2046 = vpop.f32.mrf.mxu0
        %2047 = vmatprep.mubr.bf16.mxu0 %v1245
        %2048 = vmatmul.mubr.bf16.gmra.mxu0 %v1244
        %v2049 = vpop.f32.mrf.mxu0
        %v2050 = vadd.f32 %v1761, %v2049
        %v2051 = vpop.f32.mrf.mxu0
        %v2052 = vpop.f32.mrf.mxu0
        %v2053 = vadd.f32 %v1764, %v2052
        %v2054 = vpop.f32.mrf.mxu0
        %2055 = vmatprep.mubr.bf16.mxu0 %v1249
        %2056 = vmatmul.mubr.bf16.gmra.mxu0 %v1248
        %v2057 = vpop.f32.mrf.mxu0
        %v2058 = vadd.f32 %v1769, %v2057
        %v2059 = vpop.f32.mrf.mxu0
        %v2060 = vpop.f32.mrf.mxu0
        %v2061 = vadd.f32 %v1772, %v2060
        %v2062 = vpop.f32.mrf.mxu0
        %2063 = vmatprep.mubr.bf16.mxu0 %v1253
        %2064 = vmatmul.mubr.bf16.gmra.mxu0 %v1252
        %v2065 = vpop.f32.mrf.mxu0
        %v2066 = vadd.f32 %v1777, %v2065
        %v2067 = vpop.f32.mrf.mxu0
        %v2068 = vpop.f32.mrf.mxu0
        %v2069 = vadd.f32 %v1780, %v2068
        %v2070 = vpop.f32.mrf.mxu0
        %2071 = vmatprep.mubr.bf16.mxu0 %v1257
        %2072 = vmatmul.mubr.bf16.gmra.mxu0 %v1256
        %v2073 = vpop.f32.mrf.mxu0
        %v2074 = vadd.f32 %v1785, %v2073
        %v2075 = vpop.f32.mrf.mxu0
        %v2076 = vpop.f32.mrf.mxu0
        %v2077 = vadd.f32 %v1788, %v2076
        %v2078 = vpop.f32.mrf.mxu0
        %2079 = vmatprep.mubr.bf16.mxu0 %v1261
        %2080 = vmatmul.mubr.bf16.gmra.mxu0 %v1260
        %v2081 = vpop.f32.mrf.mxu0
        %v2082 = vadd.f32 %v1793, %v2081
        %v2083 = vpop.f32.mrf.mxu0
        %v2084 = vpop.f32.mrf.mxu0
        %v2085 = vadd.f32 %v1796, %v2084
        %v2086 = vpop.f32.mrf.mxu0
        %2087 = vmatprep.mubr.bf16.mxu0 %v1265
        %2088 = vmatmul.mubr.bf16.gmra.mxu0 %v1264
        %v2089 = vpop.f32.mrf.mxu0
        %v2090 = vadd.f32 %v1801, %v2089
        %v2091 = vpop.f32.mrf.mxu0
        %v2092 = vpop.f32.mrf.mxu0
        %v2093 = vadd.f32 %v1804, %v2092
        %v2094 = vpop.f32.mrf.mxu0
        %2095 = vmatprep.mubr.bf16.mxu0 %v1269
        %2096 = vmatmul.mubr.bf16.gmra.mxu0 %v1268
        %v2097 = vpop.f32.mrf.mxu0
        %v2098 = vadd.f32 %v1809, %v2097
        %v2099 = vpop.f32.mrf.mxu0
        %v2100 = vpop.f32.mrf.mxu0
        %v2101 = vadd.f32 %v1812, %v2100
        %v2102 = vpop.f32.mrf.mxu0
        %2103 = vmatprep.mubr.bf16.mxu0 %v1273
        %2104 = vmatmul.mubr.bf16.gmra.mxu0 %v1272
        %v2105 = vpop.f32.mrf.mxu0
        %v2106 = vadd.f32 %v1817, %v2105
        %v2107 = vpop.f32.mrf.mxu0
        %v2108 = vpop.f32.mrf.mxu0
        %v2109 = vadd.f32 %v1820, %v2108
        %v2110 = vpop.f32.mrf.mxu0
        %2111 = vmatprep.mubr.bf16.mxu0 %v1277
        %2112 = vmatmul.mubr.bf16.gmra.mxu0 %v1276
        %v2113 = vpop.f32.mrf.mxu0
        %v2114 = vadd.f32 %v1825, %v2113
        %v2115 = vpop.f32.mrf.mxu0
        %v2116 = vpop.f32.mrf.mxu0
        %v2117 = vadd.f32 %v1828, %v2116
        %v2118 = vpop.f32.mrf.mxu0
        %2119 = vmatprep.mubr.bf16.mxu0 %v1281
        %2120 = vmatmul.mubr.bf16.gmra.mxu0 %v1280
        %v2121 = vpop.f32.mrf.mxu0
        %v2122 = vadd.f32 %v1833, %v2121
        %v2123 = vpop.f32.mrf.mxu0
        %v2124 = vpop.f32.mrf.mxu0
        %v2125 = vadd.f32 %v1836, %v2124
        %v2126 = vpop.f32.mrf.mxu0
        %2127 = vmatprep.mubr.bf16.mxu0 %v1285
        %2128 = vmatmul.mubr.bf16.gmra.mxu0 %v1284
        %v2129 = vpop.f32.mrf.mxu0
        %v2130 = vadd.f32 %v1841, %v2129
        %v2131 = vpop.f32.mrf.mxu0
        %v2132 = vpop.f32.mrf.mxu0
        %v2133 = vadd.f32 %v1844, %v2132
        %v2134 = vpop.f32.mrf.mxu0
        %2135 = vmatprep.mubr.bf16.mxu0 %v1289
        %2136 = vmatmul.mubr.bf16.gmra.mxu0 %v1288
        %v2137 = vpop.f32.mrf.mxu0
        %v2138 = vadd.f32 %v1849, %v2137
        %v2139 = vpop.f32.mrf.mxu0
        %v2140 = vpop.f32.mrf.mxu0
        %v2141 = vadd.f32 %v1852, %v2140
        %v2142 = vpop.f32.mrf.mxu0
        %2143 = vmatprep.mubr.bf16.mxu0 %v1293
        %2144 = vmatmul.mubr.bf16.gmra.mxu0 %v1292
        %v2145 = vpop.f32.mrf.mxu0
        %v2146 = vadd.f32 %v1857, %v2145
        %v2147 = vpop.f32.mrf.mxu0
        %v2148 = vpop.f32.mrf.mxu0
        %v2149 = vadd.f32 %v1860, %v2148
        %v2150 = vpop.f32.mrf.mxu0
        %2151 = vmatprep.mubr.bf16.mxu0 %v1297
        %2152 = vmatmul.mubr.bf16.gmra.mxu0 %v1296
        %v2153 = vpop.f32.mrf.mxu0
        %v2154 = vadd.f32 %v1865, %v2153
        %v2155 = vpop.f32.mrf.mxu0
        %v2156 = vpop.f32.mrf.mxu0
        %v2157 = vadd.f32 %v1868, %v2156
        %v2158 = vpop.f32.mrf.mxu0
        %2159 = vmatprep.mubr.bf16.mxu0 %v1301
        %2160 = vmatmul.mubr.bf16.gmra.mxu0 %v1300
        %v2161 = vpop.f32.mrf.mxu0
        %v2162 = vadd.f32 %v1873, %v2161
        %v2163 = vpop.f32.mrf.mxu0
        %v2164 = vpop.f32.mrf.mxu0
        %v2165 = vadd.f32 %v1876, %v2164
        %v2166 = vpop.f32.mrf.mxu0
        %2167 = vmatprep.mubr.bf16.mxu0 %v1305
        %2168 = vmatmul.mubr.bf16.gmra.mxu0 %v1304
        %v2169 = vpop.f32.mrf.mxu0
        %v2170 = vadd.f32 %v1881, %v2169
        %v2171 = vpop.f32.mrf.mxu0
        %v2172 = vpop.f32.mrf.mxu0
        %v2173 = vadd.f32 %v1884, %v2172
        %v2174 = vpop.f32.mrf.mxu0
        %2175 = vmatprep.mubr.bf16.mxu0 %v1309
        %2176 = vmatmul.mubr.bf16.gmra.mxu0 %v1308
        %v2177 = vpop.f32.mrf.mxu0
        %v2178 = vadd.f32 %v1889, %v2177
        %v2179 = vpop.f32.mrf.mxu0
        %v2180 = vpop.f32.mrf.mxu0
        %v2181 = vadd.f32 %v1892, %v2180
        %v2182 = vpop.f32.mrf.mxu0
        %2183 = vmatprep.mubr.bf16.mxu0 %v1313
        %2184 = vmatmul.mubr.bf16.gmra.mxu0 %v1312
        %v2185 = vpop.f32.mrf.mxu0
        %v2186 = vadd.f32 %v1897, %v2185
        %v2187 = vpop.f32.mrf.mxu0
        %v2188 = vpop.f32.mrf.mxu0
        %v2189 = vadd.f32 %v1900, %v2188
        %v2190 = vpop.f32.mrf.mxu0
        %2191 = vmatprep.mubr.bf16.mxu0 %v1317
        %2192 = vmatmul.mubr.bf16.gmra.mxu0 %v1316
        %v2193 = vpop.f32.mrf.mxu0
        %v2194 = vadd.f32 %v1905, %v2193
        %v2195 = vpop.f32.mrf.mxu0
        %v2196 = vpop.f32.mrf.mxu0
        %v2197 = vadd.f32 %v1908, %v2196
        %v2198 = vpop.f32.mrf.mxu0
        %2199 = vmatprep.mubr.bf16.mxu0 %v1321
        %2200 = vmatmul.mubr.bf16.gmra.mxu0 %v1320
        %v2201 = vpop.f32.mrf.mxu0
        %v2202 = vadd.f32 %v1913, %v2201
        %v2203 = vpop.f32.mrf.mxu0
        %v2204 = vpop.f32.mrf.mxu0
        %v2205 = vadd.f32 %v1916, %v2204
        %v2206 = vpop.f32.mrf.mxu0
        %2207 = vmatprep.mubr.bf16.mxu0 %v1325
        %2208 = vmatmul.mubr.bf16.gmra.mxu0 %v1324
        %v2209 = vpop.f32.mrf.mxu0
        %v2210 = vadd.f32 %v1921, %v2209
        %v2211 = vpop.f32.mrf.mxu0
        %v2212 = vpop.f32.mrf.mxu0
        %v2213 = vadd.f32 %v1924, %v2212
        %v2214 = vpop.f32.mrf.mxu0
        %2215 = vmatprep.mubr.bf16.mxu0 %v1329
        %2216 = vmatmul.mubr.bf16.gmra.mxu0 %v1328
        %v2217 = vpop.f32.mrf.mxu0
        %v2218 = vadd.f32 %v1929, %v2217
        %v2219 = vpop.f32.mrf.mxu0
        %v2220 = vpop.f32.mrf.mxu0
        %v2221 = vadd.f32 %v1932, %v2220
        %v2222 = vpop.f32.mrf.mxu0
        %2223 = vmatprep.mubr.bf16.mxu0 %v1333
        %2224 = vmatmul.mubr.bf16.gmra.mxu0 %v1332
        %v2225 = vpop.f32.mrf.mxu0
        %v2226 = vadd.f32 %v1937, %v2225
        %v2227 = vpop.f32.mrf.mxu0
        %v2228 = vpop.f32.mrf.mxu0
        %v2229 = vadd.f32 %v1940, %v2228
        %v2230 = vpop.f32.mrf.mxu0
        %2231 = vdwg.mxu0
        %v2232 = vadd.f32 %v630, %v1978
        %v2233 = vadd.f32 %v631, %v1981
        %v2234 = vadd.f32 %v632, %v1986
        %v2235 = vadd.f32 %v633, %v1989
        %v2236 = vadd.f32 %v634, %v1994
        %v2237 = vadd.f32 %v635, %v1997
        %v2238 = vadd.f32 %v636, %v2002
        %v2239 = vadd.f32 %v637, %v2005
        %v2240 = vadd.f32 %v638, %v2010
        %v2241 = vadd.f32 %v639, %v2013
        %v2242 = vadd.f32 %v640, %v2018
        %v2243 = vadd.f32 %v641, %v2021
        %v2244 = vadd.f32 %v642, %v2026
        %v2245 = vadd.f32 %v643, %v2029
        %v2246 = vadd.f32 %v644, %v2034
        %v2247 = vadd.f32 %v645, %v2037
        %v2248 = vadd.f32 %v646, %v2042
        %v2249 = vadd.f32 %v647, %v2045
        %v2250 = vadd.f32 %v648, %v2050
        %v2251 = vadd.f32 %v649, %v2053
        %v2252 = vadd.f32 %v650, %v2058
        %v2253 = vadd.f32 %v651, %v2061
        %v2254 = vadd.f32 %v652, %v2066
        %v2255 = vadd.f32 %v653, %v2069
        %v2256 = vadd.f32 %v654, %v2074
        %v2257 = vadd.f32 %v655, %v2077
        %v2258 = vadd.f32 %v656, %v2082
        %v2259 = vadd.f32 %v657, %v2085
        %v2260 = vadd.f32 %v658, %v2090
        %v2261 = vadd.f32 %v659, %v2093
        %v2262 = vadd.f32 %v660, %v2098
        %v2263 = vadd.f32 %v661, %v2101
        %v2264 = vadd.f32 %v662, %v2106
        %v2265 = vadd.f32 %v663, %v2109
        %v2266 = vadd.f32 %v664, %v2114
        %v2267 = vadd.f32 %v665, %v2117
        %v2268 = vadd.f32 %v666, %v2122
        %v2269 = vadd.f32 %v667, %v2125
        %v2270 = vadd.f32 %v668, %v2130
        %v2271 = vadd.f32 %v669, %v2133
        %v2272 = vadd.f32 %v670, %v2138
        %v2273 = vadd.f32 %v671, %v2141
        %v2274 = vadd.f32 %v672, %v2146
        %v2275 = vadd.f32 %v673, %v2149
        %v2276 = vadd.f32 %v674, %v2154
        %v2277 = vadd.f32 %v675, %v2157
        %v2278 = vadd.f32 %v676, %v2162
        %v2279 = vadd.f32 %v677, %v2165
        %v2280 = vadd.f32 %v678, %v2170
        %v2281 = vadd.f32 %v679, %v2173
        %v2282 = vadd.f32 %v680, %v2178
        %v2283 = vadd.f32 %v681, %v2181
        %v2284 = vadd.f32 %v682, %v2186
        %v2285 = vadd.f32 %v683, %v2189
        %v2286 = vadd.f32 %v684, %v2194
        %v2287 = vadd.f32 %v685, %v2197
        %v2288 = vadd.f32 %v686, %v2202
        %v2289 = vadd.f32 %v687, %v2205
        %v2290 = vadd.f32 %v688, %v2210
        %v2291 = vadd.f32 %v689, %v2213
        %v2292 = vadd.f32 %v690, %v2218
        %v2293 = vadd.f32 %v691, %v2221
        %v2294 = vadd.f32 %v692, %v2226
        %v2295 = vadd.f32 %v693, %v2229
        %2296 = vst [vmem:[#allocation2] sm:$0xff] %v2232
        %2297 = vst [vmem:[#allocation2 + $0x8] sm:$0xff] %v2233
        %2298 = vst [vmem:[#allocation2 + $0x10] sm:$0xff] %v2234
        %2299 = vst [vmem:[#allocation2 + $0x18] sm:$0xff] %v2235
        %2300 = vst [vmem:[#allocation2 + $0x20] sm:$0xff] %v2236
        %2301 = vst [vmem:[#allocation2 + $0x28] sm:$0xff] %v2237
        %2302 = vst [vmem:[#allocation2 + $0x30] sm:$0xff] %v2238
        %2303 = vst [vmem:[#allocation2 + $0x38] sm:$0xff] %v2239
        %2304 = vst [vmem:[#allocation2 + $0x40] sm:$0xff] %v2240
        %2305 = vst [vmem:[#allocation2 + $0x48] sm:$0xff] %v2241
        %2306 = vst [vmem:[#allocation2 + $0x50] sm:$0xff] %v2242
        %2307 = vst [vmem:[#allocation2 + $0x58] sm:$0xff] %v2243
        %2308 = vst [vmem:[#allocation2 + $0x60] sm:$0xff] %v2244
        %2309 = vst [vmem:[#allocation2 + $0x68] sm:$0xff] %v2245
        %2310 = vst [vmem:[#allocation2 + $0x70] sm:$0xff] %v2246
        %2311 = vst [vmem:[#allocation2 + $0x78] sm:$0xff] %v2247
        %2312 = vst [vmem:[#allocation2 + $0x80] sm:$0xff] %v2248
        %2313 = vst [vmem:[#allocation2 + $0x88] sm:$0xff] %v2249
        %2314 = vst [vmem:[#allocation2 + $0x90] sm:$0xff] %v2250
        %2315 = vst [vmem:[#allocation2 + $0x98] sm:$0xff] %v2251
        %2316 = vst [vmem:[#allocation2 + $0xa0] sm:$0xff] %v2252
        %2317 = vst [vmem:[#allocation2 + $0xa8] sm:$0xff] %v2253
        %2318 = vst [vmem:[#allocation2 + $0xb0] sm:$0xff] %v2254
        %2319 = vst [vmem:[#allocation2 + $0xb8] sm:$0xff] %v2255
        %2320 = vst [vmem:[#allocation2 + $0xc0] sm:$0xff] %v2256
        %2321 = vst [vmem:[#allocation2 + $0xc8] sm:$0xff] %v2257
        %2322 = vst [vmem:[#allocation2 + $0xd0] sm:$0xff] %v2258
        %2323 = vst [vmem:[#allocation2 + $0xd8] sm:$0xff] %v2259
        %2324 = vst [vmem:[#allocation2 + $0xe0] sm:$0xff] %v2260
        %2325 = vst [vmem:[#allocation2 + $0xe8] sm:$0xff] %v2261
        %2326 = vst [vmem:[#allocation2 + $0xf0] sm:$0xff] %v2262
        %2327 = vst [vmem:[#allocation2 + $0xf8] sm:$0xff] %v2263
        %2328 = vst [vmem:[#allocation2 + $0x100] sm:$0xff] %v2264
        %2329 = vst [vmem:[#allocation2 + $0x108] sm:$0xff] %v2265
        %2330 = vst [vmem:[#allocation2 + $0x110] sm:$0xff] %v2266
        %2331 = vst [vmem:[#allocation2 + $0x118] sm:$0xff] %v2267
        %2332 = vst [vmem:[#allocation2 + $0x120] sm:$0xff] %v2268
        %2333 = vst [vmem:[#allocation2 + $0x128] sm:$0xff] %v2269
        %2334 = vst [vmem:[#allocation2 + $0x130] sm:$0xff] %v2270
        %2335 = vst [vmem:[#allocation2 + $0x138] sm:$0xff] %v2271
        %2336 = vst [vmem:[#allocation2 + $0x140] sm:$0xff] %v2272
        %2337 = vst [vmem:[#allocation2 + $0x148] sm:$0xff] %v2273
        %2338 = vst [vmem:[#allocation2 + $0x150] sm:$0xff] %v2274
        %2339 = vst [vmem:[#allocation2 + $0x158] sm:$0xff] %v2275
        %2340 = vst [vmem:[#allocation2 + $0x160] sm:$0xff] %v2276
        %2341 = vst [vmem:[#allocation2 + $0x168] sm:$0xff] %v2277
        %2342 = vst [vmem:[#allocation2 + $0x170] sm:$0xff] %v2278
        %2343 = vst [vmem:[#allocation2 + $0x178] sm:$0xff] %v2279
        %2344 = vst [vmem:[#allocation2 + $0x180] sm:$0xff] %v2280
        %2345 = vst [vmem:[#allocation2 + $0x188] sm:$0xff] %v2281
        %2346 = vst [vmem:[#allocation2 + $0x190] sm:$0xff] %v2282
        %2347 = vst [vmem:[#allocation2 + $0x198] sm:$0xff] %v2283
        %2348 = vst [vmem:[#allocation2 + $0x1a0] sm:$0xff] %v2284
        %2349 = vst [vmem:[#allocation2 + $0x1a8] sm:$0xff] %v2285
        %2350 = vst [vmem:[#allocation2 + $0x1b0] sm:$0xff] %v2286
        %2351 = vst [vmem:[#allocation2 + $0x1b8] sm:$0xff] %v2287
        %2352 = vst [vmem:[#allocation2 + $0x1c0] sm:$0xff] %v2288
        %2353 = vst [vmem:[#allocation2 + $0x1c8] sm:$0xff] %v2289
        %2354 = vst [vmem:[#allocation2 + $0x1d0] sm:$0xff] %v2290
        %2355 = vst [vmem:[#allocation2 + $0x1d8] sm:$0xff] %v2291
        %2356 = vst [vmem:[#allocation2 + $0x1e0] sm:$0xff] %v2292
        %2357 = vst [vmem:[#allocation2 + $0x1e8] sm:$0xff] %v2293
        %2358 = vst [vmem:[#allocation2 + $0x1f0] sm:$0xff] %v2294
        %2359 = vst [vmem:[#allocation2 + $0x1f8] sm:$0xff] %v2295
        %p2360 = scmp.eq.s32.totalorder %s20, 1
        // Predicated region
        $region64: #{gcn_g_forward.3} parent=54 // pred_check
          %p2361 = pneg %p2360
        $region65: #{gcn_g_forward.3} parent=54 // pred_check_branch
          %2363 = sbr.rel (%p2361) target = $region67
        $region66: #{gcn_g_forward.3} parent=54 // pred_region
          %v2364 = vld [vmem:[#allocation2] sm:$0xff]
          %v2365 = vld [vmem:[#allocation2 + $0x8] sm:$0xff]
          %v2366 = vld [vmem:[#allocation2 + $0x10] sm:$0xff]
          %v2367 = vld [vmem:[#allocation2 + $0x18] sm:$0xff]
          %v2368 = vld [vmem:[#allocation2 + $0x20] sm:$0xff]
          %v2369 = vld [vmem:[#allocation2 + $0x28] sm:$0xff]
          %v2370 = vld [vmem:[#allocation2 + $0x30] sm:$0xff]
          %v2371 = vld [vmem:[#allocation2 + $0x38] sm:$0xff]
          %v2372 = vld [vmem:[#allocation2 + $0x40] sm:$0xff]
          %v2373 = vld [vmem:[#allocation2 + $0x48] sm:$0xff]
          %v2374 = vld [vmem:[#allocation2 + $0x50] sm:$0xff]
          %v2375 = vld [vmem:[#allocation2 + $0x58] sm:$0xff]
          %v2376 = vld [vmem:[#allocation2 + $0x60] sm:$0xff]
          %v2377 = vld [vmem:[#allocation2 + $0x68] sm:$0xff]
          %v2378 = vld [vmem:[#allocation2 + $0x70] sm:$0xff]
          %v2379 = vld [vmem:[#allocation2 + $0x78] sm:$0xff]
          %v2380 = vld [vmem:[#allocation2 + $0x80] sm:$0xff]
          %v2381 = vld [vmem:[#allocation2 + $0x88] sm:$0xff]
          %v2382 = vld [vmem:[#allocation2 + $0x90] sm:$0xff]
          %v2383 = vld [vmem:[#allocation2 + $0x98] sm:$0xff]
          %v2384 = vld [vmem:[#allocation2 + $0xa0] sm:$0xff]
          %v2385 = vld [vmem:[#allocation2 + $0xa8] sm:$0xff]
          %v2386 = vld [vmem:[#allocation2 + $0xb0] sm:$0xff]
          %v2387 = vld [vmem:[#allocation2 + $0xb8] sm:$0xff]
          %v2388 = vld [vmem:[#allocation2 + $0xc0] sm:$0xff]
          %v2389 = vld [vmem:[#allocation2 + $0xc8] sm:$0xff]
          %v2390 = vld [vmem:[#allocation2 + $0xd0] sm:$0xff]
          %v2391 = vld [vmem:[#allocation2 + $0xd8] sm:$0xff]
          %v2392 = vld [vmem:[#allocation2 + $0xe0] sm:$0xff]
          %v2393 = vld [vmem:[#allocation2 + $0xe8] sm:$0xff]
          %v2394 = vld [vmem:[#allocation2 + $0xf0] sm:$0xff]
          %v2395 = vld [vmem:[#allocation2 + $0xf8] sm:$0xff]
          %v2396 = vld [vmem:[#allocation2 + $0x100] sm:$0xff]
          %v2397 = vld [vmem:[#allocation2 + $0x108] sm:$0xff]
          %v2398 = vld [vmem:[#allocation2 + $0x110] sm:$0xff]
          %v2399 = vld [vmem:[#allocation2 + $0x118] sm:$0xff]
          %v2400 = vld [vmem:[#allocation2 + $0x120] sm:$0xff]
          %v2401 = vld [vmem:[#allocation2 + $0x128] sm:$0xff]
          %v2402 = vld [vmem:[#allocation2 + $0x130] sm:$0xff]
          %v2403 = vld [vmem:[#allocation2 + $0x138] sm:$0xff]
          %v2404 = vld [vmem:[#allocation2 + $0x140] sm:$0xff]
          %v2405 = vld [vmem:[#allocation2 + $0x148] sm:$0xff]
          %v2406 = vld [vmem:[#allocation2 + $0x150] sm:$0xff]
          %v2407 = vld [vmem:[#allocation2 + $0x158] sm:$0xff]
          %v2408 = vld [vmem:[#allocation2 + $0x160] sm:$0xff]
          %v2409 = vld [vmem:[#allocation2 + $0x168] sm:$0xff]
          %v2410 = vld [vmem:[#allocation2 + $0x170] sm:$0xff]
          %v2411 = vld [vmem:[#allocation2 + $0x178] sm:$0xff]
          %v2412 = vld [vmem:[#allocation2 + $0x180] sm:$0xff]
          %v2413 = vld [vmem:[#allocation2 + $0x188] sm:$0xff]
          %v2414 = vld [vmem:[#allocation2 + $0x190] sm:$0xff]
          %v2415 = vld [vmem:[#allocation2 + $0x198] sm:$0xff]
          %v2416 = vld [vmem:[#allocation2 + $0x1a0] sm:$0xff]
          %v2417 = vld [vmem:[#allocation2 + $0x1a8] sm:$0xff]
          %v2418 = vld [vmem:[#allocation2 + $0x1b0] sm:$0xff]
          %v2419 = vld [vmem:[#allocation2 + $0x1b8] sm:$0xff]
          %v2420 = vld [vmem:[#allocation2 + $0x1c0] sm:$0xff]
          %v2421 = vld [vmem:[#allocation2 + $0x1c8] sm:$0xff]
          %v2422 = vld [vmem:[#allocation2 + $0x1d0] sm:$0xff]
          %v2423 = vld [vmem:[#allocation2 + $0x1d8] sm:$0xff]
          %v2424 = vld [vmem:[#allocation2 + $0x1e0] sm:$0xff]
          %v2425 = vld [vmem:[#allocation2 + $0x1e8] sm:$0xff]
          %v2426 = vld [vmem:[#allocation2 + $0x1f0] sm:$0xff]
          %v2427 = vld [vmem:[#allocation2 + $0x1f8] sm:$0xff]
          %v2428 = vpack.c.bf16 %v2365, %v2364
          %v2429 = vpack.c.bf16 %v2367, %v2366
          %v2430 = vpack.c.bf16 %v2369, %v2368
          %v2431 = vpack.c.bf16 %v2371, %v2370
          %v2432 = vpack.c.bf16 %v2373, %v2372
          %v2433 = vpack.c.bf16 %v2375, %v2374
          %v2434 = vpack.c.bf16 %v2377, %v2376
          %v2435 = vpack.c.bf16 %v2379, %v2378
          %v2436 = vpack.c.bf16 %v2381, %v2380
          %v2437 = vpack.c.bf16 %v2383, %v2382
          %v2438 = vpack.c.bf16 %v2385, %v2384
          %v2439 = vpack.c.bf16 %v2387, %v2386
          %v2440 = vpack.c.bf16 %v2389, %v2388
          %v2441 = vpack.c.bf16 %v2391, %v2390
          %v2442 = vpack.c.bf16 %v2393, %v2392
          %v2443 = vpack.c.bf16 %v2395, %v2394
          %v2444 = vpack.c.bf16 %v2397, %v2396
          %v2445 = vpack.c.bf16 %v2399, %v2398
          %v2446 = vpack.c.bf16 %v2401, %v2400
          %v2447 = vpack.c.bf16 %v2403, %v2402
          %v2448 = vpack.c.bf16 %v2405, %v2404
          %v2449 = vpack.c.bf16 %v2407, %v2406
          %v2450 = vpack.c.bf16 %v2409, %v2408
          %v2451 = vpack.c.bf16 %v2411, %v2410
          %v2452 = vpack.c.bf16 %v2413, %v2412
          %v2453 = vpack.c.bf16 %v2415, %v2414
          %v2454 = vpack.c.bf16 %v2417, %v2416
          %v2455 = vpack.c.bf16 %v2419, %v2418
          %v2456 = vpack.c.bf16 %v2421, %v2420
          %v2457 = vpack.c.bf16 %v2423, %v2422
          %v2458 = vpack.c.bf16 %v2425, %v2424
          %v2459 = vpack.c.bf16 %v2427, %v2426
          %v2460 = vld [vmem:[%s2] sm:$0xf]
          %v2461 = vld [vmem:[%s2 + $0x4] sm:$0xf]
          %v2462 = vld [vmem:[%s2 + $0x8] sm:$0xf]
          %v2463 = vld [vmem:[%s2 + $0xc] sm:$0xf]
          %v2464 = vld [vmem:[%s2 + $0x10] sm:$0xf]
          %v2465 = vld [vmem:[%s2 + $0x14] sm:$0xf]
          %v2466 = vld [vmem:[%s2 + $0x18] sm:$0xf]
          %v2467 = vld [vmem:[%s2 + $0x1c] sm:$0xf]
          %v2468 = vld [vmem:[%s2 + $0x20] sm:$0xf]
          %v2469 = vld [vmem:[%s2 + $0x24] sm:$0xf]
          %v2470 = vld [vmem:[%s2 + $0x28] sm:$0xf]
          %v2471 = vld [vmem:[%s2 + $0x2c] sm:$0xf]
          %v2472 = vld [vmem:[%s2 + $0x30] sm:$0xf]
          %v2473 = vld [vmem:[%s2 + $0x34] sm:$0xf]
          %v2474 = vld [vmem:[%s2 + $0x38] sm:$0xf]
          %v2475 = vld [vmem:[%s2 + $0x3c] sm:$0xf]
          %v2476 = vld [vmem:[%s3] sm:$0x1]
          %v2478 = vlaneseq
          %v2479 = vshrl.u32 %v2478, 7
          %v2480 = vsub.s32 0, %v2479
          %v2481 = vrot.slane %v2476, %v2480
          %v2499 = vunpack.c.l.b16 %v2460
          %v2500 = vunpack.c.l.b16 %v2461
          %v2501 = vunpack.c.l.b16 %v2462
          %v2502 = vunpack.c.l.b16 %v2463
          %v2503 = vunpack.c.l.b16 %v2464
          %v2504 = vunpack.c.l.b16 %v2465
          %v2505 = vunpack.c.l.b16 %v2466
          %v2506 = vunpack.c.l.b16 %v2467
          %v2507 = vunpack.c.l.b16 %v2468
          %v2508 = vunpack.c.l.b16 %v2469
          %v2509 = vunpack.c.l.b16 %v2470
          %v2510 = vunpack.c.l.b16 %v2471
          %v2511 = vunpack.c.l.b16 %v2472
          %v2512 = vunpack.c.l.b16 %v2473
          %v2513 = vunpack.c.l.b16 %v2474
          %v2514 = vunpack.c.l.b16 %v2475
          %v2515 = vpack.c.b16 %v2500, %v2499
          %v2516 = vpack.c.b16 %v2502, %v2501
          %v2517 = vpack.c.b16 %v2504, %v2503
          %v2518 = vpack.c.b16 %v2506, %v2505
          %v2519 = vpack.c.b16 %v2508, %v2507
          %v2520 = vpack.c.b16 %v2510, %v2509
          %v2521 = vpack.c.b16 %v2512, %v2511
          %v2522 = vpack.c.b16 %v2514, %v2513
          %2531 = vmatprep.subr.bf16.mxu0 0
          %2532 = vmatpush1.bf16.msra.mxu0 %v2522
          %2533 = vmatprep.subr.bf16.mxu0 0
          %2534 = vmatpush1.bf16.msra.mxu0 %v2521
          %2535 = vmatprep.subr.bf16.mxu0 0
          %2536 = vmatpush1.bf16.msra.mxu0 %v2520
          %2537 = vmatprep.subr.bf16.mxu0 0
          %2538 = vmatpush1.bf16.msra.mxu0 %v2519
          %2539 = vmatprep.subr.bf16.mxu0 0
          %2540 = vmatpush1.bf16.msra.mxu0 %v2518
          %2541 = vmatprep.subr.bf16.mxu0 0
          %2542 = vmatpush1.bf16.msra.mxu0 %v2517
          %2543 = vmatprep.subr.bf16.mxu0 0
          %2544 = vmatpush1.bf16.msra.mxu0 %v2516
          %2545 = vmatprep.subr.bf16.mxu0 0
          %2546 = vmatpush1.bf16.msra.mxu0 %v2515
          %2547 = vmatprep.subr.bf16.mxu0 0
          %2548 = vmatpush2.bf16.msra.mxu0 0
          %2549 = vmatprep.subr.bf16.mxu0 0
          %2550 = vmatpush2.bf16.msra.mxu0 0
          %2551 = vmatprep.subr.bf16.mxu0 0
          %2552 = vmatpush2.bf16.msra.mxu0 0
          %2553 = vmatprep.subr.bf16.mxu0 0
          %2554 = vmatpush2.bf16.msra.mxu0 0
          %2555 = vmatprep.subr.bf16.mxu0 0
          %2556 = vmatpush2.bf16.msra.mxu0 0
          %2557 = vmatprep.subr.bf16.mxu0 0
          %2558 = vmatpush2.bf16.msra.mxu0 0
          %2559 = vmatprep.subr.bf16.mxu0 0
          %2560 = vmatpush2.bf16.msra.mxu0 0
          %2561 = vmatprep.subr.bf16.mxu0 0
          %2562 = vmatpush2.bf16.msra.mxu0 0
          %2563 = vmatprep.mubr.bf16.mxu0 0
          %2564 = vmatmul.mubr.bf16.gmra.mxu0 %v2428
          %v2565 = vpop.f32.mrf.mxu0
          %v2566 = vadd.f32 %v2481, %v2565
          %v2567 = vpop.f32.mrf.mxu0
          %v2568 = vpop.f32.mrf.mxu0
          %v2569 = vadd.f32 %v2481, %v2568
          %v2570 = vpop.f32.mrf.mxu0
          %2571 = vmatprep.mubr.bf16.mxu0 0
          %2572 = vmatmul.mubr.bf16.gmra.mxu0 %v2429
          %v2573 = vpop.f32.mrf.mxu0
          %v2574 = vadd.f32 %v2481, %v2573
          %v2575 = vpop.f32.mrf.mxu0
          %v2576 = vpop.f32.mrf.mxu0
          %v2577 = vadd.f32 %v2481, %v2576
          %v2578 = vpop.f32.mrf.mxu0
          %2579 = vmatprep.mubr.bf16.mxu0 0
          %2580 = vmatmul.mubr.bf16.gmra.mxu0 %v2430
          %v2581 = vpop.f32.mrf.mxu0
          %v2582 = vadd.f32 %v2481, %v2581
          %v2583 = vpop.f32.mrf.mxu0
          %v2584 = vpop.f32.mrf.mxu0
          %v2585 = vadd.f32 %v2481, %v2584
          %v2586 = vpop.f32.mrf.mxu0
          %2587 = vmatprep.mubr.bf16.mxu0 0
          %2588 = vmatmul.mubr.bf16.gmra.mxu0 %v2431
          %v2589 = vpop.f32.mrf.mxu0
          %v2590 = vadd.f32 %v2481, %v2589
          %v2591 = vpop.f32.mrf.mxu0
          %v2592 = vpop.f32.mrf.mxu0
          %v2593 = vadd.f32 %v2481, %v2592
          %v2594 = vpop.f32.mrf.mxu0
          %2595 = vmatprep.mubr.bf16.mxu0 0
          %2596 = vmatmul.mubr.bf16.gmra.mxu0 %v2432
          %v2597 = vpop.f32.mrf.mxu0
          %v2598 = vadd.f32 %v2481, %v2597
          %v2599 = vpop.f32.mrf.mxu0
          %v2600 = vpop.f32.mrf.mxu0
          %v2601 = vadd.f32 %v2481, %v2600
          %v2602 = vpop.f32.mrf.mxu0
          %2603 = vmatprep.mubr.bf16.mxu0 0
          %2604 = vmatmul.mubr.bf16.gmra.mxu0 %v2433
          %v2605 = vpop.f32.mrf.mxu0
          %v2606 = vadd.f32 %v2481, %v2605
          %v2607 = vpop.f32.mrf.mxu0
          %v2608 = vpop.f32.mrf.mxu0
          %v2609 = vadd.f32 %v2481, %v2608
          %v2610 = vpop.f32.mrf.mxu0
          %2611 = vmatprep.mubr.bf16.mxu0 0
          %2612 = vmatmul.mubr.bf16.gmra.mxu0 %v2434
          %v2613 = vpop.f32.mrf.mxu0
          %v2614 = vadd.f32 %v2481, %v2613
          %v2615 = vpop.f32.mrf.mxu0
          %v2616 = vpop.f32.mrf.mxu0
          %v2617 = vadd.f32 %v2481, %v2616
          %v2618 = vpop.f32.mrf.mxu0
          %2619 = vmatprep.mubr.bf16.mxu0 0
          %2620 = vmatmul.mubr.bf16.gmra.mxu0 %v2435
          %v2621 = vpop.f32.mrf.mxu0
          %v2622 = vadd.f32 %v2481, %v2621
          %v2623 = vpop.f32.mrf.mxu0
          %v2624 = vpop.f32.mrf.mxu0
          %v2625 = vadd.f32 %v2481, %v2624
          %v2626 = vpop.f32.mrf.mxu0
          %2627 = vmatprep.mubr.bf16.mxu0 0
          %2628 = vmatmul.mubr.bf16.gmra.mxu0 %v2436
          %v2629 = vpop.f32.mrf.mxu0
          %v2630 = vadd.f32 %v2481, %v2629
          %v2631 = vpop.f32.mrf.mxu0
          %v2632 = vpop.f32.mrf.mxu0
          %v2633 = vadd.f32 %v2481, %v2632
          %v2634 = vpop.f32.mrf.mxu0
          %2635 = vmatprep.mubr.bf16.mxu0 0
          %2636 = vmatmul.mubr.bf16.gmra.mxu0 %v2437
          %v2637 = vpop.f32.mrf.mxu0
          %v2638 = vadd.f32 %v2481, %v2637
          %v2639 = vpop.f32.mrf.mxu0
          %v2640 = vpop.f32.mrf.mxu0
          %v2641 = vadd.f32 %v2481, %v2640
          %v2642 = vpop.f32.mrf.mxu0
          %2643 = vmatprep.mubr.bf16.mxu0 0
          %2644 = vmatmul.mubr.bf16.gmra.mxu0 %v2438
          %v2645 = vpop.f32.mrf.mxu0
          %v2646 = vadd.f32 %v2481, %v2645
          %v2647 = vpop.f32.mrf.mxu0
          %v2648 = vpop.f32.mrf.mxu0
          %v2649 = vadd.f32 %v2481, %v2648
          %v2650 = vpop.f32.mrf.mxu0
          %2651 = vmatprep.mubr.bf16.mxu0 0
          %2652 = vmatmul.mubr.bf16.gmra.mxu0 %v2439
          %v2653 = vpop.f32.mrf.mxu0
          %v2654 = vadd.f32 %v2481, %v2653
          %v2655 = vpop.f32.mrf.mxu0
          %v2656 = vpop.f32.mrf.mxu0
          %v2657 = vadd.f32 %v2481, %v2656
          %v2658 = vpop.f32.mrf.mxu0
          %2659 = vmatprep.mubr.bf16.mxu0 0
          %2660 = vmatmul.mubr.bf16.gmra.mxu0 %v2440
          %v2661 = vpop.f32.mrf.mxu0
          %v2662 = vadd.f32 %v2481, %v2661
          %v2663 = vpop.f32.mrf.mxu0
          %v2664 = vpop.f32.mrf.mxu0
          %v2665 = vadd.f32 %v2481, %v2664
          %v2666 = vpop.f32.mrf.mxu0
          %2667 = vmatprep.mubr.bf16.mxu0 0
          %2668 = vmatmul.mubr.bf16.gmra.mxu0 %v2441
          %v2669 = vpop.f32.mrf.mxu0
          %v2670 = vadd.f32 %v2481, %v2669
          %v2671 = vpop.f32.mrf.mxu0
          %v2672 = vpop.f32.mrf.mxu0
          %v2673 = vadd.f32 %v2481, %v2672
          %v2674 = vpop.f32.mrf.mxu0
          %2675 = vmatprep.mubr.bf16.mxu0 0
          %2676 = vmatmul.mubr.bf16.gmra.mxu0 %v2442
          %v2677 = vpop.f32.mrf.mxu0
          %v2678 = vadd.f32 %v2481, %v2677
          %v2679 = vpop.f32.mrf.mxu0
          %v2680 = vpop.f32.mrf.mxu0
          %v2681 = vadd.f32 %v2481, %v2680
          %v2682 = vpop.f32.mrf.mxu0
          %2683 = vmatprep.mubr.bf16.mxu0 0
          %2684 = vmatmul.mubr.bf16.gmra.mxu0 %v2443
          %v2685 = vpop.f32.mrf.mxu0
          %v2686 = vadd.f32 %v2481, %v2685
          %v2687 = vpop.f32.mrf.mxu0
          %v2688 = vpop.f32.mrf.mxu0
          %v2689 = vadd.f32 %v2481, %v2688
          %v2690 = vpop.f32.mrf.mxu0
          %2691 = vmatprep.mubr.bf16.mxu0 0
          %2692 = vmatmul.mubr.bf16.gmra.mxu0 %v2444
          %v2693 = vpop.f32.mrf.mxu0
          %v2694 = vadd.f32 %v2481, %v2693
          %v2695 = vpop.f32.mrf.mxu0
          %v2696 = vpop.f32.mrf.mxu0
          %v2697 = vadd.f32 %v2481, %v2696
          %v2698 = vpop.f32.mrf.mxu0
          %2699 = vmatprep.mubr.bf16.mxu0 0
          %2700 = vmatmul.mubr.bf16.gmra.mxu0 %v2445
          %v2701 = vpop.f32.mrf.mxu0
          %v2702 = vadd.f32 %v2481, %v2701
          %v2703 = vpop.f32.mrf.mxu0
          %v2704 = vpop.f32.mrf.mxu0
          %v2705 = vadd.f32 %v2481, %v2704
          %v2706 = vpop.f32.mrf.mxu0
          %2707 = vmatprep.mubr.bf16.mxu0 0
          %2708 = vmatmul.mubr.bf16.gmra.mxu0 %v2446
          %v2709 = vpop.f32.mrf.mxu0
          %v2710 = vadd.f32 %v2481, %v2709
          %v2711 = vpop.f32.mrf.mxu0
          %v2712 = vpop.f32.mrf.mxu0
          %v2713 = vadd.f32 %v2481, %v2712
          %v2714 = vpop.f32.mrf.mxu0
          %2715 = vmatprep.mubr.bf16.mxu0 0
          %2716 = vmatmul.mubr.bf16.gmra.mxu0 %v2447
          %v2717 = vpop.f32.mrf.mxu0
          %v2718 = vadd.f32 %v2481, %v2717
          %v2719 = vpop.f32.mrf.mxu0
          %v2720 = vpop.f32.mrf.mxu0
          %v2721 = vadd.f32 %v2481, %v2720
          %v2722 = vpop.f32.mrf.mxu0
          %2723 = vmatprep.mubr.bf16.mxu0 0
          %2724 = vmatmul.mubr.bf16.gmra.mxu0 %v2448
          %v2725 = vpop.f32.mrf.mxu0
          %v2726 = vadd.f32 %v2481, %v2725
          %v2727 = vpop.f32.mrf.mxu0
          %v2728 = vpop.f32.mrf.mxu0
          %v2729 = vadd.f32 %v2481, %v2728
          %v2730 = vpop.f32.mrf.mxu0
          %2731 = vmatprep.mubr.bf16.mxu0 0
          %2732 = vmatmul.mubr.bf16.gmra.mxu0 %v2449
          %v2733 = vpop.f32.mrf.mxu0
          %v2734 = vadd.f32 %v2481, %v2733
          %v2735 = vpop.f32.mrf.mxu0
          %v2736 = vpop.f32.mrf.mxu0
          %v2737 = vadd.f32 %v2481, %v2736
          %v2738 = vpop.f32.mrf.mxu0
          %2739 = vmatprep.mubr.bf16.mxu0 0
          %2740 = vmatmul.mubr.bf16.gmra.mxu0 %v2450
          %v2741 = vpop.f32.mrf.mxu0
          %v2742 = vadd.f32 %v2481, %v2741
          %v2743 = vpop.f32.mrf.mxu0
          %v2744 = vpop.f32.mrf.mxu0
          %v2745 = vadd.f32 %v2481, %v2744
          %v2746 = vpop.f32.mrf.mxu0
          %2747 = vmatprep.mubr.bf16.mxu0 0
          %2748 = vmatmul.mubr.bf16.gmra.mxu0 %v2451
          %v2749 = vpop.f32.mrf.mxu0
          %v2750 = vadd.f32 %v2481, %v2749
          %v2751 = vpop.f32.mrf.mxu0
          %v2752 = vpop.f32.mrf.mxu0
          %v2753 = vadd.f32 %v2481, %v2752
          %v2754 = vpop.f32.mrf.mxu0
          %2755 = vmatprep.mubr.bf16.mxu0 0
          %2756 = vmatmul.mubr.bf16.gmra.mxu0 %v2452
          %v2757 = vpop.f32.mrf.mxu0
          %v2758 = vadd.f32 %v2481, %v2757
          %v2759 = vpop.f32.mrf.mxu0
          %v2760 = vpop.f32.mrf.mxu0
          %v2761 = vadd.f32 %v2481, %v2760
          %v2762 = vpop.f32.mrf.mxu0
          %2763 = vmatprep.mubr.bf16.mxu0 0
          %2764 = vmatmul.mubr.bf16.gmra.mxu0 %v2453
          %v2765 = vpop.f32.mrf.mxu0
          %v2766 = vadd.f32 %v2481, %v2765
          %v2767 = vpop.f32.mrf.mxu0
          %v2768 = vpop.f32.mrf.mxu0
          %v2769 = vadd.f32 %v2481, %v2768
          %v2770 = vpop.f32.mrf.mxu0
          %2771 = vmatprep.mubr.bf16.mxu0 0
          %2772 = vmatmul.mubr.bf16.gmra.mxu0 %v2454
          %v2773 = vpop.f32.mrf.mxu0
          %v2774 = vadd.f32 %v2481, %v2773
          %v2775 = vpop.f32.mrf.mxu0
          %v2776 = vpop.f32.mrf.mxu0
          %v2777 = vadd.f32 %v2481, %v2776
          %v2778 = vpop.f32.mrf.mxu0
          %2779 = vmatprep.mubr.bf16.mxu0 0
          %2780 = vmatmul.mubr.bf16.gmra.mxu0 %v2455
          %v2781 = vpop.f32.mrf.mxu0
          %v2782 = vadd.f32 %v2481, %v2781
          %v2783 = vpop.f32.mrf.mxu0
          %v2784 = vpop.f32.mrf.mxu0
          %v2785 = vadd.f32 %v2481, %v2784
          %v2786 = vpop.f32.mrf.mxu0
          %2787 = vmatprep.mubr.bf16.mxu0 0
          %2788 = vmatmul.mubr.bf16.gmra.mxu0 %v2456
          %v2789 = vpop.f32.mrf.mxu0
          %v2790 = vadd.f32 %v2481, %v2789
          %v2791 = vpop.f32.mrf.mxu0
          %v2792 = vpop.f32.mrf.mxu0
          %v2793 = vadd.f32 %v2481, %v2792
          %v2794 = vpop.f32.mrf.mxu0
          %2795 = vmatprep.mubr.bf16.mxu0 0
          %2796 = vmatmul.mubr.bf16.gmra.mxu0 %v2457
          %v2797 = vpop.f32.mrf.mxu0
          %v2798 = vadd.f32 %v2481, %v2797
          %v2799 = vpop.f32.mrf.mxu0
          %v2800 = vpop.f32.mrf.mxu0
          %v2801 = vadd.f32 %v2481, %v2800
          %v2802 = vpop.f32.mrf.mxu0
          %2803 = vmatprep.mubr.bf16.mxu0 0
          %2804 = vmatmul.mubr.bf16.gmra.mxu0 %v2458
          %v2805 = vpop.f32.mrf.mxu0
          %v2806 = vadd.f32 %v2481, %v2805
          %v2807 = vpop.f32.mrf.mxu0
          %v2808 = vpop.f32.mrf.mxu0
          %v2809 = vadd.f32 %v2481, %v2808
          %v2810 = vpop.f32.mrf.mxu0
          %2811 = vmatprep.mubr.bf16.mxu0 0
          %2812 = vmatmul.mubr.bf16.gmra.mxu0 %v2459
          %v2813 = vpop.f32.mrf.mxu0
          %v2814 = vadd.f32 %v2481, %v2813
          %v2815 = vpop.f32.mrf.mxu0
          %v2816 = vpop.f32.mrf.mxu0
          %v2817 = vadd.f32 %v2481, %v2816
          %v2818 = vpop.f32.mrf.mxu0
          %2819 = vdwg.mxu0
          %v2820 = vmax.f32 %v2566, 0.0
          %v2821 = vmax.f32 %v2569, 0.0
          %v2822 = vmax.f32 %v2574, 0.0
          %v2823 = vmax.f32 %v2577, 0.0
          %v2824 = vmax.f32 %v2582, 0.0
          %v2825 = vmax.f32 %v2585, 0.0
          %v2826 = vmax.f32 %v2590, 0.0
          %v2827 = vmax.f32 %v2593, 0.0
          %v2828 = vmax.f32 %v2598, 0.0
          %v2829 = vmax.f32 %v2601, 0.0
          %v2830 = vmax.f32 %v2606, 0.0
          %v2831 = vmax.f32 %v2609, 0.0
          %v2832 = vmax.f32 %v2614, 0.0
          %v2833 = vmax.f32 %v2617, 0.0
          %v2834 = vmax.f32 %v2622, 0.0
          %v2835 = vmax.f32 %v2625, 0.0
          %v2836 = vmax.f32 %v2630, 0.0
          %v2837 = vmax.f32 %v2633, 0.0
          %v2838 = vmax.f32 %v2638, 0.0
          %v2839 = vmax.f32 %v2641, 0.0
          %v2840 = vmax.f32 %v2646, 0.0
          %v2841 = vmax.f32 %v2649, 0.0
          %v2842 = vmax.f32 %v2654, 0.0
          %v2843 = vmax.f32 %v2657, 0.0
          %v2844 = vmax.f32 %v2662, 0.0
          %v2845 = vmax.f32 %v2665, 0.0
          %v2846 = vmax.f32 %v2670, 0.0
          %v2847 = vmax.f32 %v2673, 0.0
          %v2848 = vmax.f32 %v2678, 0.0
          %v2849 = vmax.f32 %v2681, 0.0
          %v2850 = vmax.f32 %v2686, 0.0
          %v2851 = vmax.f32 %v2689, 0.0
          %v2852 = vmax.f32 %v2694, 0.0
          %v2853 = vmax.f32 %v2697, 0.0
          %v2854 = vmax.f32 %v2702, 0.0
          %v2855 = vmax.f32 %v2705, 0.0
          %v2856 = vmax.f32 %v2710, 0.0
          %v2857 = vmax.f32 %v2713, 0.0
          %v2858 = vmax.f32 %v2718, 0.0
          %v2859 = vmax.f32 %v2721, 0.0
          %v2860 = vmax.f32 %v2726, 0.0
          %v2861 = vmax.f32 %v2729, 0.0
          %v2862 = vmax.f32 %v2734, 0.0
          %v2863 = vmax.f32 %v2737, 0.0
          %v2864 = vmax.f32 %v2742, 0.0
          %v2865 = vmax.f32 %v2745, 0.0
          %v2866 = vmax.f32 %v2750, 0.0
          %v2867 = vmax.f32 %v2753, 0.0
          %v2868 = vmax.f32 %v2758, 0.0
          %v2869 = vmax.f32 %v2761, 0.0
          %v2870 = vmax.f32 %v2766, 0.0
          %v2871 = vmax.f32 %v2769, 0.0
          %v2872 = vmax.f32 %v2774, 0.0
          %v2873 = vmax.f32 %v2777, 0.0
          %v2874 = vmax.f32 %v2782, 0.0
          %v2875 = vmax.f32 %v2785, 0.0
          %v2876 = vmax.f32 %v2790, 0.0
          %v2877 = vmax.f32 %v2793, 0.0
          %v2878 = vmax.f32 %v2798, 0.0
          %v2879 = vmax.f32 %v2801, 0.0
          %v2880 = vmax.f32 %v2806, 0.0
          %v2881 = vmax.f32 %v2809, 0.0
          %v2882 = vmax.f32 %v2814, 0.0
          %v2883 = vmax.f32 %v2817, 0.0
          %v2884 = vpack.c.bf16 %v2821, %v2820
          %v2885 = vpack.c.bf16 %v2823, %v2822
          %v2886 = vpack.c.bf16 %v2825, %v2824
          %v2887 = vpack.c.bf16 %v2827, %v2826
          %v2888 = vpack.c.bf16 %v2829, %v2828
          %v2889 = vpack.c.bf16 %v2831, %v2830
          %v2890 = vpack.c.bf16 %v2833, %v2832
          %v2891 = vpack.c.bf16 %v2835, %v2834
          %v2892 = vpack.c.bf16 %v2837, %v2836
          %v2893 = vpack.c.bf16 %v2839, %v2838
          %v2894 = vpack.c.bf16 %v2841, %v2840
          %v2895 = vpack.c.bf16 %v2843, %v2842
          %v2896 = vpack.c.bf16 %v2845, %v2844
          %v2897 = vpack.c.bf16 %v2847, %v2846
          %v2898 = vpack.c.bf16 %v2849, %v2848
          %v2899 = vpack.c.bf16 %v2851, %v2850
          %v2900 = vpack.c.bf16 %v2853, %v2852
          %v2901 = vpack.c.bf16 %v2855, %v2854
          %v2902 = vpack.c.bf16 %v2857, %v2856
          %v2903 = vpack.c.bf16 %v2859, %v2858
          %v2904 = vpack.c.bf16 %v2861, %v2860
          %v2905 = vpack.c.bf16 %v2863, %v2862
          %v2906 = vpack.c.bf16 %v2865, %v2864
          %v2907 = vpack.c.bf16 %v2867, %v2866
          %v2908 = vpack.c.bf16 %v2869, %v2868
          %v2909 = vpack.c.bf16 %v2871, %v2870
          %v2910 = vpack.c.bf16 %v2873, %v2872
          %v2911 = vpack.c.bf16 %v2875, %v2874
          %v2912 = vpack.c.bf16 %v2877, %v2876
          %v2913 = vpack.c.bf16 %v2879, %v2878
          %v2914 = vpack.c.bf16 %v2881, %v2880
          %v2915 = vpack.c.bf16 %v2883, %v2882
          %v2948 = vunpack.c.l.b16 %v2884
          %v2949 = vunpack.c.h.b16 %v2884
          %v2950 = vunpack.c.l.b16 %v2885
          %v2951 = vunpack.c.h.b16 %v2885
          %v2952 = vunpack.c.l.b16 %v2886
          %v2953 = vunpack.c.h.b16 %v2886
          %v2954 = vunpack.c.l.b16 %v2887
          %v2955 = vunpack.c.h.b16 %v2887
          %v2956 = vunpack.c.l.b16 %v2888
          %v2957 = vunpack.c.h.b16 %v2888
          %v2958 = vunpack.c.l.b16 %v2889
          %v2959 = vunpack.c.h.b16 %v2889
          %v2960 = vunpack.c.l.b16 %v2890
          %v2961 = vunpack.c.h.b16 %v2890
          %v2962 = vunpack.c.l.b16 %v2891
          %v2963 = vunpack.c.h.b16 %v2891
          %v2964 = vunpack.c.l.b16 %v2892
          %v2965 = vunpack.c.h.b16 %v2892
          %v2966 = vunpack.c.l.b16 %v2893
          %v2967 = vunpack.c.h.b16 %v2893
          %v2968 = vunpack.c.l.b16 %v2894
          %v2969 = vunpack.c.h.b16 %v2894
          %v2970 = vunpack.c.l.b16 %v2895
          %v2971 = vunpack.c.h.b16 %v2895
          %v2972 = vunpack.c.l.b16 %v2896
          %v2973 = vunpack.c.h.b16 %v2896
          %v2974 = vunpack.c.l.b16 %v2897
          %v2975 = vunpack.c.h.b16 %v2897
          %v2976 = vunpack.c.l.b16 %v2898
          %v2977 = vunpack.c.h.b16 %v2898
          %v2978 = vunpack.c.l.b16 %v2899
          %v2979 = vunpack.c.h.b16 %v2899
          %v2980 = vunpack.c.l.b16 %v2900
          %v2981 = vunpack.c.h.b16 %v2900
          %v2982 = vunpack.c.l.b16 %v2901
          %v2983 = vunpack.c.h.b16 %v2901
          %v2984 = vunpack.c.l.b16 %v2902
          %v2985 = vunpack.c.h.b16 %v2902
          %v2986 = vunpack.c.l.b16 %v2903
          %v2987 = vunpack.c.h.b16 %v2903
          %v2988 = vunpack.c.l.b16 %v2904
          %v2989 = vunpack.c.h.b16 %v2904
          %v2990 = vunpack.c.l.b16 %v2905
          %v2991 = vunpack.c.h.b16 %v2905
          %v2992 = vunpack.c.l.b16 %v2906
          %v2993 = vunpack.c.h.b16 %v2906
          %v2994 = vunpack.c.l.b16 %v2907
          %v2995 = vunpack.c.h.b16 %v2907
          %v2996 = vunpack.c.l.b16 %v2908
          %v2997 = vunpack.c.h.b16 %v2908
          %v2998 = vunpack.c.l.b16 %v2909
          %v2999 = vunpack.c.h.b16 %v2909
          %v3000 = vunpack.c.l.b16 %v2910
          %v3001 = vunpack.c.h.b16 %v2910
          %v3002 = vunpack.c.l.b16 %v2911
          %v3003 = vunpack.c.h.b16 %v2911
          %v3004 = vunpack.c.l.b16 %v2912
          %v3005 = vunpack.c.h.b16 %v2912
          %v3006 = vunpack.c.l.b16 %v2913
          %v3007 = vunpack.c.h.b16 %v2913
          %v3008 = vunpack.c.l.b16 %v2914
          %v3009 = vunpack.c.h.b16 %v2914
          %v3010 = vunpack.c.l.b16 %v2915
          %v3011 = vunpack.c.h.b16 %v2915
          %v3012 = vpack.c.b16 %v2948, %v2948
          %v3013 = vpack.c.b16 %v2949, %v2949
          %v3014 = vpack.c.b16 %v2950, %v2950
          %v3015 = vpack.c.b16 %v2951, %v2951
          %v3016 = vpack.c.b16 %v2952, %v2952
          %v3017 = vpack.c.b16 %v2953, %v2953
          %v3018 = vpack.c.b16 %v2954, %v2954
          %v3019 = vpack.c.b16 %v2955, %v2955
          %v3020 = vpack.c.b16 %v2956, %v2956
          %v3021 = vpack.c.b16 %v2957, %v2957
          %v3022 = vpack.c.b16 %v2958, %v2958
          %v3023 = vpack.c.b16 %v2959, %v2959
          %v3024 = vpack.c.b16 %v2960, %v2960
          %v3025 = vpack.c.b16 %v2961, %v2961
          %v3026 = vpack.c.b16 %v2962, %v2962
          %v3027 = vpack.c.b16 %v2963, %v2963
          %v3028 = vpack.c.b16 %v2964, %v2964
          %v3029 = vpack.c.b16 %v2965, %v2965
          %v3030 = vpack.c.b16 %v2966, %v2966
          %v3031 = vpack.c.b16 %v2967, %v2967
          %v3032 = vpack.c.b16 %v2968, %v2968
          %v3033 = vpack.c.b16 %v2969, %v2969
          %v3034 = vpack.c.b16 %v2970, %v2970
          %v3035 = vpack.c.b16 %v2971, %v2971
          %v3036 = vpack.c.b16 %v2972, %v2972
          %v3037 = vpack.c.b16 %v2973, %v2973
          %v3038 = vpack.c.b16 %v2974, %v2974
          %v3039 = vpack.c.b16 %v2975, %v2975
          %v3040 = vpack.c.b16 %v2976, %v2976
          %v3041 = vpack.c.b16 %v2977, %v2977
          %v3042 = vpack.c.b16 %v2978, %v2978
          %v3043 = vpack.c.b16 %v2979, %v2979
          %v3044 = vpack.c.b16 %v2980, %v2980
          %v3045 = vpack.c.b16 %v2981, %v2981
          %v3046 = vpack.c.b16 %v2982, %v2982
          %v3047 = vpack.c.b16 %v2983, %v2983
          %v3048 = vpack.c.b16 %v2984, %v2984
          %v3049 = vpack.c.b16 %v2985, %v2985
          %v3050 = vpack.c.b16 %v2986, %v2986
          %v3051 = vpack.c.b16 %v2987, %v2987
          %v3052 = vpack.c.b16 %v2988, %v2988
          %v3053 = vpack.c.b16 %v2989, %v2989
          %v3054 = vpack.c.b16 %v2990, %v2990
          %v3055 = vpack.c.b16 %v2991, %v2991
          %v3056 = vpack.c.b16 %v2992, %v2992
          %v3057 = vpack.c.b16 %v2993, %v2993
          %v3058 = vpack.c.b16 %v2994, %v2994
          %v3059 = vpack.c.b16 %v2995, %v2995
          %v3060 = vpack.c.b16 %v2996, %v2996
          %v3061 = vpack.c.b16 %v2997, %v2997
          %v3062 = vpack.c.b16 %v2998, %v2998
          %v3063 = vpack.c.b16 %v2999, %v2999
          %v3064 = vpack.c.b16 %v3000, %v3000
          %v3065 = vpack.c.b16 %v3001, %v3001
          %v3066 = vpack.c.b16 %v3002, %v3002
          %v3067 = vpack.c.b16 %v3003, %v3003
          %v3068 = vpack.c.b16 %v3004, %v3004
          %v3069 = vpack.c.b16 %v3005, %v3005
          %v3070 = vpack.c.b16 %v3006, %v3006
          %v3071 = vpack.c.b16 %v3007, %v3007
          %v3072 = vpack.c.b16 %v3008, %v3008
          %v3073 = vpack.c.b16 %v3009, %v3009
          %v3074 = vpack.c.b16 %v3010, %v3010
          %v3075 = vpack.c.b16 %v3011, %v3011
          %3140 = vst [vmem:[%s490] sm:$0xf] %v3012
          %3141 = vst [vmem:[%s490 + $0x4] sm:$0xf] %v3013
          %3142 = vst [vmem:[%s490 + $0x8] sm:$0xf] %v3014
          %3143 = vst [vmem:[%s490 + $0xc] sm:$0xf] %v3015
          %3144 = vst [vmem:[%s490 + $0x10] sm:$0xf] %v3016
          %3145 = vst [vmem:[%s490 + $0x14] sm:$0xf] %v3017
          %3146 = vst [vmem:[%s490 + $0x18] sm:$0xf] %v3018
          %3147 = vst [vmem:[%s490 + $0x1c] sm:$0xf] %v3019
          %3148 = vst [vmem:[%s490 + $0x20] sm:$0xf] %v3020
          %3149 = vst [vmem:[%s490 + $0x24] sm:$0xf] %v3021
          %3150 = vst [vmem:[%s490 + $0x28] sm:$0xf] %v3022
          %3151 = vst [vmem:[%s490 + $0x2c] sm:$0xf] %v3023
          %3152 = vst [vmem:[%s490 + $0x30] sm:$0xf] %v3024
          %3153 = vst [vmem:[%s490 + $0x34] sm:$0xf] %v3025
          %3154 = vst [vmem:[%s490 + $0x38] sm:$0xf] %v3026
          %3155 = vst [vmem:[%s490 + $0x3c] sm:$0xf] %v3027
          %3156 = vst [vmem:[%s490 + $0x40] sm:$0xf] %v3028
          %3157 = vst [vmem:[%s490 + $0x44] sm:$0xf] %v3029
          %3158 = vst [vmem:[%s490 + $0x48] sm:$0xf] %v3030
          %3159 = vst [vmem:[%s490 + $0x4c] sm:$0xf] %v3031
          %3160 = vst [vmem:[%s490 + $0x50] sm:$0xf] %v3032
          %3161 = vst [vmem:[%s490 + $0x54] sm:$0xf] %v3033
          %3162 = vst [vmem:[%s490 + $0x58] sm:$0xf] %v3034
          %3163 = vst [vmem:[%s490 + $0x5c] sm:$0xf] %v3035
          %3164 = vst [vmem:[%s490 + $0x60] sm:$0xf] %v3036
          %3165 = vst [vmem:[%s490 + $0x64] sm:$0xf] %v3037
          %3166 = vst [vmem:[%s490 + $0x68] sm:$0xf] %v3038
          %3167 = vst [vmem:[%s490 + $0x6c] sm:$0xf] %v3039
          %3168 = vst [vmem:[%s490 + $0x70] sm:$0xf] %v3040
          %3169 = vst [vmem:[%s490 + $0x74] sm:$0xf] %v3041
          %3170 = vst [vmem:[%s490 + $0x78] sm:$0xf] %v3042
          %3171 = vst [vmem:[%s490 + $0x7c] sm:$0xf] %v3043
          %3172 = vst [vmem:[%s490 + $0x80] sm:$0xf] %v3044
          %3173 = vst [vmem:[%s490 + $0x84] sm:$0xf] %v3045
          %3174 = vst [vmem:[%s490 + $0x88] sm:$0xf] %v3046
          %3175 = vst [vmem:[%s490 + $0x8c] sm:$0xf] %v3047
          %3176 = vst [vmem:[%s490 + $0x90] sm:$0xf] %v3048
          %3177 = vst [vmem:[%s490 + $0x94] sm:$0xf] %v3049
          %3178 = vst [vmem:[%s490 + $0x98] sm:$0xf] %v3050
          %3179 = vst [vmem:[%s490 + $0x9c] sm:$0xf] %v3051
          %3180 = vst [vmem:[%s490 + $0xa0] sm:$0xf] %v3052
          %3181 = vst [vmem:[%s490 + $0xa4] sm:$0xf] %v3053
          %3182 = vst [vmem:[%s490 + $0xa8] sm:$0xf] %v3054
          %3183 = vst [vmem:[%s490 + $0xac] sm:$0xf] %v3055
          %3184 = vst [vmem:[%s490 + $0xb0] sm:$0xf] %v3056
          %3185 = vst [vmem:[%s490 + $0xb4] sm:$0xf] %v3057
          %3186 = vst [vmem:[%s490 + $0xb8] sm:$0xf] %v3058
          %3187 = vst [vmem:[%s490 + $0xbc] sm:$0xf] %v3059
          %3188 = vst [vmem:[%s490 + $0xc0] sm:$0xf] %v3060
          %3189 = vst [vmem:[%s490 + $0xc4] sm:$0xf] %v3061
          %3190 = vst [vmem:[%s490 + $0xc8] sm:$0xf] %v3062
          %3191 = vst [vmem:[%s490 + $0xcc] sm:$0xf] %v3063
          %3192 = vst [vmem:[%s490 + $0xd0] sm:$0xf] %v3064
          %3193 = vst [vmem:[%s490 + $0xd4] sm:$0xf] %v3065
          %3194 = vst [vmem:[%s490 + $0xd8] sm:$0xf] %v3066
          %3195 = vst [vmem:[%s490 + $0xdc] sm:$0xf] %v3067
          %3196 = vst [vmem:[%s490 + $0xe0] sm:$0xf] %v3068
          %3197 = vst [vmem:[%s490 + $0xe4] sm:$0xf] %v3069
          %3198 = vst [vmem:[%s490 + $0xe8] sm:$0xf] %v3070
          %3199 = vst [vmem:[%s490 + $0xec] sm:$0xf] %v3071
          %3200 = vst [vmem:[%s490 + $0xf0] sm:$0xf] %v3072
          %3201 = vst [vmem:[%s490 + $0xf4] sm:$0xf] %v3073
          %3202 = vst [vmem:[%s490 + $0xf8] sm:$0xf] %v3074
          %3203 = vst [vmem:[%s490 + $0xfc] sm:$0xf] %v3075
        $region67: #{gcn_g_forward.3} parent=54 // pred_fallthru
          _
        %s3204 = smul.u32 64, %s19
        %p3205 = scmp.lt.s32.totalorder %s3204, 127
        %s3206 = scalar_select %p3205, %s3204, 127
        %s3207 = smul.addr %s3206, 4
        %s3208 = scalar_lea.vmem %s4, %s3207
        // Predicated region
        $region68: #{gcn_g_forward.3} parent=54 // pred_check
          %p3209 = pneg %p136
        $region69: #{gcn_g_forward.3} parent=54 // pred_check_branch
          %3211 = sbr.rel (%p3209) target = $region71
        $region70: #{gcn_g_forward.3} parent=54 // pred_region
          %s3212 = smul.u32 64, %s19
        $region71: #{gcn_g_forward.3} parent=54 // pred_fallthru
          _
      $region55: #{gcn_g_forward.3} parent=5 // pred_fallthru
        _
      %p3213 = scmp.le.s32.totalorder 2, %s10
      // Predicated region
      $region72: #{gcn_g_forward.3} parent=5 // pred_check
        %p3214 = pneg %p3213
      $region73: #{gcn_g_forward.3} parent=5 // pred_check_branch
        %3216 = sbr.rel (%p3214) target = $region75
      $region74: #{gcn_g_forward.3} parent=5 // pred_region
        %s3217 = ssub.s32 %s10, 2
        // Predicated region
        $region76: #{gcn_g_forward.3} parent=74 // pred_check
          %p3218 = pneg %p142
        $region77: #{gcn_g_forward.3} parent=74 // pred_check_branch
          %3220 = sbr.rel (%p3218) target = $region79
        $region78: #{gcn_g_forward.3} parent=74 // pred_region
          %s3221 = smul.u32 64, %s21
          %p3222 = scmp.lt.s32.totalorder %s3221, 127
          %s3223 = scalar_select %p3222, %s3221, 127
          %s3224 = smul.addr %s3223, 4
          %s3225 = scalar_lea.vmem %s4, %s3224
        $region79: #{gcn_g_forward.3} parent=74 // pred_fallthru
          _
      $region75: #{gcn_g_forward.3} parent=5 // pred_fallthru
        _
    $region6: #{gcn_g_forward.3} parent=1 // loop_footer
      %s14 = sadd.s32 1, %s10
    $region7: #{gcn_g_forward.3} parent=1 // loop_footer_branch
      %9 = sbr.rel target = $region3
    $region8: #{gcn_g_forward.3} parent=1 // loop_exit
      _

</llo_original>
